<compile_context>
chip_gen: v7x
topology: tpu7x:2x2x1
jax: 0.10.0
libtpu: 0.0.40
codegen_flags: <defaults>
</compile_context>

<pallas_src>
from functools import partial

import numpy as np
import jax
import jax.numpy as jnp
from jax import lax
from jax.experimental import pallas as pl
from jax.experimental.pallas import tpu as pltpu

N_FFT = 400
HOP = 160
N_FREQS = N_FFT // 2 + 1      # 201 (onesided)
N_MELS = 80
SAMPLE_RATE = 16000
F_MIN = 0.0
F_MAX = 8000.0

FREQ_PAD = 208                # 201 padded to a multiple of 8 -> 832-row stacked hi/lo DFT matrix
ROW = HOP // 2                # 80-sample rows: frame t covers rows [2t, 2t+5)
HALO = 8                      # lane halo on the even/odd row windows (2 needed, 8 for slack)


# ----------------------------------------------------------------------------
# Deterministic parameter construction (matches torchaudio's defaults), pure numpy.
# ----------------------------------------------------------------------------
def _hz_to_mel_slaney(f):
    f = np.asarray(f, dtype=np.float64)
    f_sp = 200.0 / 3.0
    mels = f / f_sp
    min_log_hz = 1000.0
    min_log_mel = min_log_hz / f_sp
    logstep = np.log(6.4) / 27.0
    return np.where(
        f >= min_log_hz,
        min_log_mel + np.log(np.maximum(f, 1e-12) / min_log_hz) / logstep,
        mels,
    )


def _mel_to_hz_slaney(m):
    m = np.asarray(m, dtype=np.float64)
    f_sp = 200.0 / 3.0
    freqs = m * f_sp
    min_log_hz = 1000.0
    min_log_mel = min_log_hz / f_sp
    logstep = np.log(6.4) / 27.0
    return np.where(
        m >= min_log_mel,
        min_log_hz * np.exp(logstep * (m - min_log_mel)),
        freqs,
    )


def melscale_fbanks_np():
    """torchaudio.functional.melscale_fbanks(201, 0, 8000, 80, 16000, 'slaney', 'slaney')."""
    all_freqs = np.linspace(0.0, SAMPLE_RATE / 2.0, N_FREQS)
    m_pts = np.linspace(_hz_to_mel_slaney(F_MIN), _hz_to_mel_slaney(F_MAX), N_MELS + 2)
    f_pts = _mel_to_hz_slaney(m_pts)
    f_diff = f_pts[1:] - f_pts[:-1]
    slopes = f_pts[None, :] - all_freqs[:, None]
    down_slopes = (-slopes[:, :-2]) / f_diff[:-1]
    up_slopes = slopes[:, 2:] / f_diff[1:]
    fb = np.maximum(0.0, np.minimum(down_slopes, up_slopes))
    enorm = 2.0 / (f_pts[2:N_MELS + 2] - f_pts[:N_MELS])
    return (fb * enorm[None, :]).astype(np.float32)            # (201, 80)


def _stft_weights_np():
    """Hann(periodic)-windowed real-DFT weights, cos|sin stacked, freq-padded to 208 rows each.

    Returns a (2*FREQ_PAD, 400) = (416, 400) float32 matrix: rows [0, 201) are windowed cos,
    rows [208, 208+201) are -windowed sin, remaining rows zero.
    """
    n = np.arange(N_FFT, dtype=np.float64)
    k = np.arange(N_FREQS, dtype=np.float64)
    win = 0.5 - 0.5 * np.cos(2.0 * np.pi * n / N_FFT)          # torch.hann_window(400), periodic
    ang = 2.0 * np.pi * np.outer(k, n) / N_FFT                 # (201, 400)
    w = np.zeros((2 * FREQ_PAD, N_FFT), np.float32)
    w[:N_FREQS, :] = (np.cos(ang) * win[None, :]).astype(np.float32)
    w[FREQ_PAD:FREQ_PAD + N_FREQS, :] = (-np.sin(ang) * win[None, :]).astype(np.float32)
    return w                                                   # (416, 400) f32


def _mel_weights_np():
    fb = melscale_fbanks_np()                                  # (201, 80)
    w = np.zeros((N_MELS, FREQ_PAD), np.float32)
    w[:, :N_FREQS] = fb.T
    return w                                                   # (80, 208) f32


# ----------------------------------------------------------------------------
# Pallas kernel: even/odd row windows -> lane-dense log-mel tile (+ masked per-tile max).
# ----------------------------------------------------------------------------
def _logmel_kernel(ev_ref, od_ref, w_ref, fb_ref, logmel_ref, bmax_ref, *, tt, n_frames):
    # ev_ref / od_ref: (1, 1, 80, W) f32   w_ref: (832, 400) bf16 ([W_hi ; W_lo] stacked)
    # fb_ref: (80, 208) bf16               logmel_ref: (1, 80, tt) f32   bmax_ref: (1,1,8,128) f32
    ev = ev_ref[0, 0]                                          # (80, W)
    od = od_ref[0, 0]

    # Frame sample n = 80*j + i maps to: j=0 -> even[t], j=1 -> odd[t], j=2 -> even[t+1],
    # j=3 -> odd[t+1], j=4 -> even[t+2]  (static lane shifts 0/0/1/1/2 within the halo window).
    fr = jnp.concatenate(
        [ev[:, 0:tt], od[:, 0:tt], ev[:, 1:tt + 1], od[:, 1:tt + 1], ev[:, 2:tt + 2]],
        axis=0)                                                # (400, tt) f32, sample-major rows

    # Manual hi/lo bf16 split of the frames -> 3-pass bf16 DFT (~ Precision.HIGH accuracy,
    # half the MXU passes of the f32 HIGHEST decomposition).
    x_hi = fr.astype(jnp.bfloat16)
    x_lo = (fr - x_hi.astype(jnp.float32)).astype(jnp.bfloat16)

    w = w_ref[...]                                             # (832, 400) bf16
    hi = jnp.dot(w, x_hi, preferred_element_type=jnp.float32)  # (832, tt): [Whi@Xhi ; Wlo@Xhi]
    corr = jnp.dot(w[:2 * FREQ_PAD, :], x_lo,
                   preferred_element_type=jnp.float32)         # (416, tt): Whi@Xlo
    stft = hi[:2 * FREQ_PAD, :] + hi[2 * FREQ_PAD:, :] + corr  # (416, tt)  ~f32-accurate

    re = stft[:FREQ_PAD, :]
    im = stft[FREQ_PAD:, :]
    power = re * re + im * im                                  # (208, tt)

    # Explicit single bf16 MXU pass for the (non-negative) triangular filters.
    mel = jnp.dot(fb_ref[...], power.astype(jnp.bfloat16),
                  preferred_element_type=jnp.float32)          # (80, tt), >= 0
    lm = jnp.log10(jnp.maximum(mel, 1e-10))                    # always >= -10

    logmel_ref[0] = lm                                         # lane-dense (mel, time) tile

    # Per-tile max over REAL frames only: tail columns past n_frames contain reflect-pad
    # leftovers / zeros, so mask them with -10 (== global floor of lm, hence never raises max).
    col = lax.broadcasted_iota(jnp.int32, lm.shape, 1) + pl.program_id(1) * tt
    masked = jnp.where(col < n_frames, lm, -10.0)
    bmax_ref[0, 0] = jnp.broadcast_to(jnp.max(masked), (8, 128))


# ----------------------------------------------------------------------------
# Wrapper.
# ----------------------------------------------------------------------------
@partial(jax.jit, static_argnames=("frame_tile",))
def whisper_mel(x, *, frame_tile=512):
    """x: (B, L) float32 waveform -> (B, 80, L // 160) float32 normalized log-mel."""
    x = x.astype(jnp.float32)
    B, L = x.shape
    T = L // HOP            # Spectrogram makes 1 + L//HOP frames; [..., :-1] drops the last

    # Time-tile size: 512 frames for long audio, else T rounded up to a multiple of 8.
    if T >= frame_tile:
        TT = frame_tile
    else:
        TT = max(8, ((T + 7) // 8) * 8)
    nT = (T + TT - 1) // TT
    T_pad = nT * TT
    W = TT + HALO            # per-tile even/odd window width (frame tt-1 of a tile needs +2)

    # --- framing glue: even/odd 80-sample-row windows (~1x waveform bytes in HBM) --------------
    pad = N_FFT // 2
    xp = jnp.pad(x, ((0, 0), (pad, pad)), mode="reflect")      # center padding (torch 'reflect')
    rem = (-xp.shape[1]) % ROW
    if rem:
        xp = jnp.pad(xp, ((0, 0), (0, rem)))
    S = xp.shape[1] // ROW
    vt = jnp.swapaxes(xp.reshape(B, S, ROW), 1, 2)             # (B, 80, S): col r = samples [80r, 80r+80)
    even = vt[:, :, 0::2]                                      # rows 0,2,4,...
    odd = vt[:, :, 1::2]                                       # rows 1,3,5,...
    P = max(T_pad + HALO, even.shape[2], odd.shape[2])
    even = jnp.pad(even, ((0, 0), (0, 0), (0, P - even.shape[2])))
    odd = jnp.pad(odd, ((0, 0), (0, 0), (0, P - odd.shape[2])))
    # Overlapping per-tile windows with a small static lane halo (static slices, no gather).
    ev_blk = jnp.stack([even[:, :, t * TT:t * TT + W] for t in range(nT)], axis=1)  # (B,nT,80,W)
    od_blk = jnp.stack([odd[:, :, t * TT:t * TT + W] for t in range(nT)], axis=1)   # (B,nT,80,W)

    # --- constant weights: bf16 hi/lo split with jnp ops (safe under jit, const-folded) --------
    w_f32 = jnp.asarray(_stft_weights_np())                    # (416, 400) f32
    w_hi = w_f32.astype(jnp.bfloat16)
    w_lo = (w_f32 - w_hi.astype(jnp.float32)).astype(jnp.bfloat16)
    w_stack = jnp.concatenate([w_hi, w_lo], axis=0)            # (832, 400) bf16
    fb = jnp.asarray(_mel_weights_np()).astype(jnp.bfloat16)   # (80, 208) bf16

    # --- fused framing -> STFT -> power -> mel -> log10 kernel ---------------------------------
    kernel = partial(_logmel_kernel, tt=TT, n_frames=T)
    logmel, bmax = pl.pallas_call(
        kernel,
        out_shape=(
            jax.ShapeDtypeStruct((B, N_MELS, T_pad), jnp.float32),   # lane-dense (mel, time)
            jax.ShapeDtypeStruct((B, nT, 8, 128), jnp.float32),      # per-tile max
        ),
        grid=(B, nT),
        in_specs=[
            pl.BlockSpec((1, 1, ROW, W), lambda b, t: (b, t, 0, 0)),
            pl.BlockSpec((1, 1, ROW, W), lambda b, t: (b, t, 0, 0)),
            pl.BlockSpec((2 * 2 * FREQ_PAD, N_FFT), lambda b, t: (0, 0)),  # grid-invariant weights
            pl.BlockSpec((N_MELS, FREQ_PAD), lambda b, t: (0, 0)),         # grid-invariant weights
        ],
        out_specs=(
            pl.BlockSpec((1, N_MELS, TT), lambda b, t: (b, 0, t)),
            pl.BlockSpec((1, 1, 8, 128), lambda b, t: (b, t, 0, 0)),
        ),
        compiler_params=pltpu.CompilerParams(
            dimension_semantics=("parallel", "parallel"),
            vmem_limit_bytes=32 * 1024 * 1024,
        ),
    )(ev_blk, od_blk, w_stack, fb)

    # --- global max floor + normalization, fused by XLA with the time slice --------------------
    gmax = jnp.max(bmax)    # per-tile maxes already exclude padded frames; real values >= -10
    out = (jnp.maximum(logmel[:, :, :T], gmax - 8.0) + 4.0) * 0.25
    return out


# ----------------------------------------------------------------------------
# Reference (numpy, float64) for a sanity check.
# ----------------------------------------------------------------------------
def _reference_np(x_np):
    B, L = x_np.shape
    n_frames = L // HOP
    xp = np.pad(x_np.astype(np.float64), ((0, 0), (N_FFT // 2, N_FFT // 2)), mode="reflect")
    win = 0.5 - 0.5 * np.cos(2.0 * np.pi * np.arange(N_FFT) / N_FFT)
    frames = np.stack([xp[:, t * HOP: t * HOP + N_FFT] for t in range(n_frames)], axis=1)
    spec = np.abs(np.fft.rfft(frames * win[None, None, :], n=N_FFT, axis=-1)) ** 2   # (B,T,201)
    mel = spec @ melscale_fbanks_np().astype(np.float64)                             # (B,T,80)
    log = np.log10(np.maximum(mel, 1e-10))
    log = np.maximum(log, log.max() - 8.0)
    log = (log + 4.0) / 4.0
    return log.transpose(0, 2, 1)                                                    # (B,80,T)


if __name__ == "__main__":
    # Small case: single tile, T = 8 frames.
    B, L = 2, HOP * 8
    x = jax.random.normal(jax.random.PRNGKey(0), (B, L), dtype=jnp.float32)
    y = whisper_mel(x)
    jax.block_until_ready(y)
    assert y.shape == (B, N_MELS, L // HOP), y.shape
    np.testing.assert_allclose(np.asarray(y), _reference_np(np.asarray(x)), rtol=1e-2, atol=1e-2)

    # Multi-tile case: T = 1100 frames -> nT = 3 tiles of 512, exercises the lane halo across
    # tile boundaries, resident weights and the masked (garbage) tail columns of the last tile.
    B2, L2 = 2, HOP * 1100
    x2 = jax.random.normal(jax.random.PRNGKey(1), (B2, L2), dtype=jnp.float32)
    y2 = whisper_mel(x2)
    jax.block_until_ready(y2)
    assert y2.shape == (B2, N_MELS, L2 // HOP), y2.shape
    np.testing.assert_allclose(np.asarray(y2), _reference_np(np.asarray(x2)), rtol=1e-2, atol=1e-2)

    print("KERNEL_OK")
</pallas_src>

<mosaic_0001>
module attributes {stable_mosaic.version = 11 : i64} {
  func.func @_logmel_kernel(%arg0: i32, %arg1: i32, %arg2: memref<1x1x80x16xf32, #tpu.memory_space<vmem>>, %arg3: memref<1x1x80x16xf32, #tpu.memory_space<vmem>>, %arg4: memref<832x400xbf16, #tpu.memory_space<vmem>>, %arg5: memref<80x208xbf16, #tpu.memory_space<vmem>>, %arg6: memref<1x80x8xf32, #tpu.memory_space<vmem>>, %arg7: memref<1x1x8x128xf32, #tpu.memory_space<vmem>>) attributes {dimension_semantics = [#tpu.dimension_semantics<parallel>, #tpu.dimension_semantics<parallel>], iteration_bounds = array<i64: 2, 1>, scalar_prefetch = 0 : i64, scratch_operands = 0 : i64, tpu.core_type = #tpu.core_type<tc>, window_params = [{transform_indices = @transform_0, window_bounds = array<i64: 1, 1, 80, 16>}, {transform_indices = @transform_1, window_bounds = array<i64: 1, 1, 80, 16>}, {pipeline_mode = #tpu.pipeline_mode<synchronous>, transform_indices = @transform_2, window_bounds = array<i64: 832, 400>}, {pipeline_mode = #tpu.pipeline_mode<synchronous>, transform_indices = @transform_3, window_bounds = array<i64: 80, 208>}, {transform_indices = @transform_4, window_bounds = array<i64: 1, 80, 8>}, {transform_indices = @transform_5, window_bounds = array<i64: 1, 1, 8, 128>}]} {
    %c0 = arith.constant 0 : index
    %c0_0 = arith.constant 0 : index
    %c0_1 = arith.constant 0 : index
    %c0_2 = arith.constant 0 : index
    %0 = vector.load %arg2[%c0, %c0_0, %c0_1, %c0_2] : memref<1x1x80x16xf32, #tpu.memory_space<vmem>>, vector<1x1x80x16xf32>
    %1 = vector.shape_cast %0 : vector<1x1x80x16xf32> to vector<80x16xf32>
    %c0_3 = arith.constant 0 : index
    %c0_4 = arith.constant 0 : index
    %c0_5 = arith.constant 0 : index
    %c0_6 = arith.constant 0 : index
    %2 = vector.load %arg3[%c0_3, %c0_4, %c0_5, %c0_6] : memref<1x1x80x16xf32, #tpu.memory_space<vmem>>, vector<1x1x80x16xf32>
    %3 = vector.shape_cast %2 : vector<1x1x80x16xf32> to vector<80x16xf32>
    %4 = vector.extract_strided_slice %1 {offsets = [0, 0], sizes = [80, 8], strides = [1, 1]} : vector<80x16xf32> to vector<80x8xf32>
    %5 = vector.extract_strided_slice %3 {offsets = [0, 0], sizes = [80, 8], strides = [1, 1]} : vector<80x16xf32> to vector<80x8xf32>
    %6 = vector.extract_strided_slice %1 {offsets = [0, 1], sizes = [80, 8], strides = [1, 1]} : vector<80x16xf32> to vector<80x8xf32>
    %7 = vector.extract_strided_slice %3 {offsets = [0, 1], sizes = [80, 8], strides = [1, 1]} : vector<80x16xf32> to vector<80x8xf32>
    %8 = vector.extract_strided_slice %1 {offsets = [0, 2], sizes = [80, 8], strides = [1, 1]} : vector<80x16xf32> to vector<80x8xf32>
    %9 = tpu.concatenate %4, %5, %6, %7, %8 in 0 : vector<80x8xf32>, vector<80x8xf32>, vector<80x8xf32>, vector<80x8xf32>, vector<80x8xf32> -> vector<400x8xf32>
    %10 = arith.truncf %9 : vector<400x8xf32> to vector<400x8xbf16>
    %11 = arith.extf %10 : vector<400x8xbf16> to vector<400x8xf32>
    %12 = arith.subf %9, %11 : vector<400x8xf32>
    %13 = arith.truncf %12 : vector<400x8xf32> to vector<400x8xbf16>
    %c0_7 = arith.constant 0 : index
    %c0_8 = arith.constant 0 : index
    %14 = vector.load %arg4[%c0_7, %c0_8] : memref<832x400xbf16, #tpu.memory_space<vmem>>, vector<832x400xbf16>
    %cst = arith.constant dense<0.000000e+00> : vector<832x8xf32>
    %15 = tpu.matmul %14, %10, %cst {dimension_numbers = #tpu.dot_dimension_numbers<[1], [0], [0], [1], [0, 0, 1, 1], [], []>} : vector<832x400xbf16>, vector<400x8xbf16>, vector<832x8xf32> -> vector<832x8xf32>
    %16 = vector.extract_strided_slice %14 {offsets = [0, 0], sizes = [416, 400], strides = [1, 1]} : vector<832x400xbf16> to vector<416x400xbf16>
    %cst_9 = arith.constant dense<0.000000e+00> : vector<416x8xf32>
    %17 = tpu.matmul %16, %13, %cst_9 {dimension_numbers = #tpu.dot_dimension_numbers<[1], [0], [0], [1], [0, 0, 1, 1], [], []>} : vector<416x400xbf16>, vector<400x8xbf16>, vector<416x8xf32> -> vector<416x8xf32>
    %18 = vector.extract_strided_slice %15 {offsets = [0, 0], sizes = [416, 8], strides = [1, 1]} : vector<832x8xf32> to vector<416x8xf32>
    %19 = vector.extract_strided_slice %15 {offsets = [416, 0], sizes = [416, 8], strides = [1, 1]} : vector<832x8xf32> to vector<416x8xf32>
    %20 = arith.addf %18, %19 : vector<416x8xf32>
    %21 = arith.addf %20, %17 : vector<416x8xf32>
    %22 = vector.extract_strided_slice %21 {offsets = [0, 0], sizes = [208, 8], strides = [1, 1]} : vector<416x8xf32> to vector<208x8xf32>
    %23 = vector.extract_strided_slice %21 {offsets = [208, 0], sizes = [208, 8], strides = [1, 1]} : vector<416x8xf32> to vector<208x8xf32>
    %24 = arith.mulf %22, %22 : vector<208x8xf32>
    %25 = arith.mulf %23, %23 : vector<208x8xf32>
    %26 = arith.addf %24, %25 : vector<208x8xf32>
    %c0_10 = arith.constant 0 : index
    %c0_11 = arith.constant 0 : index
    %27 = vector.load %arg5[%c0_10, %c0_11] : memref<80x208xbf16, #tpu.memory_space<vmem>>, vector<80x208xbf16>
    %28 = arith.truncf %26 : vector<208x8xf32> to vector<208x8xbf16>
    %cst_12 = arith.constant dense<0.000000e+00> : vector<80x8xf32>
    %29 = tpu.matmul %27, %28, %cst_12 {dimension_numbers = #tpu.dot_dimension_numbers<[1], [0], [0], [1], [0, 0, 1, 1], [], []>} : vector<80x208xbf16>, vector<208x8xbf16>, vector<80x8xf32> -> vector<80x8xf32>
    %cst_13 = arith.constant 1.000000e-10 : f32
    %30 = vector.broadcast %cst_13 : f32 to vector<80x8xf32>
    %31 = arith.maximumf %29, %30 : vector<80x8xf32>
    %32 = math.log %31 : vector<80x8xf32>
    %cst_14 = arith.constant 0.434294492 : f32
    %33 = vector.broadcast %cst_14 : f32 to vector<80x8xf32>
    %34 = arith.mulf %32, %33 : vector<80x8xf32>
    %c0_15 = arith.constant 0 : index
    %c0_16 = arith.constant 0 : index
    %c0_17 = arith.constant 0 : index
    %35 = vector.load %arg6[%c0_15, %c0_16, %c0_17] : memref<1x80x8xf32, #tpu.memory_space<vmem>>, vector<1x80x8xf32>
    %36 = vector.shape_cast %35 : vector<1x80x8xf32> to vector<80x8xf32>
    %37 = vector.shape_cast %34 : vector<80x8xf32> to vector<1x80x8xf32>
    tpu.vector_store %arg6[%c0_15, %c0_16, %c0_17], %37 {strides = array<i32>} : memref<1x80x8xf32, #tpu.memory_space<vmem>>, vector<1x80x8xf32>,
    %38 = tpu.iota {dimensions = array<i32: 1>} : vector<80x8xi32>
    %c8_i32 = arith.constant 8 : i32
    %39 = arith.muli %arg1, %c8_i32 : i32
    %40 = vector.broadcast %39 : i32 to vector<80x8xi32>
    %41 = arith.addi %38, %40 : vector<80x8xi32>
    %c8_i32_18 = arith.constant 8 : i32
    %42 = vector.broadcast %c8_i32_18 : i32 to vector<80x8xi32>
    %43 = arith.cmpi slt, %41, %42 : vector<80x8xi32>
    %cst_19 = arith.constant -1.000000e+01 : f32
    %44 = vector.broadcast %cst_19 : f32 to vector<80x8xf32>
    %45 = arith.select %43, %34, %44 : vector<80x8xi1>, vector<80x8xf32>
    %46 = vector.shape_cast %45 : vector<80x8xf32> to vector<1x80x8xf32>
    %cst_20 = arith.constant dense<0xFF800000> : vector<1xf32>
    %47 = vector.multi_reduction <maximumf>, %46, %cst_20 [1, 2] : vector<1x80x8xf32> to vector<1xf32>
    %48 = vector.shape_cast %47 : vector<1xf32> to vector<1x1x1xf32>
    %49 = vector.extract %48[0, 0, 0] : f32 from vector<1x1x1xf32>
    %50 = vector.broadcast %49 : f32 to vector<8x128xf32>
    %c0_21 = arith.constant 0 : index
    %c0_22 = arith.constant 0 : index
    %c0_23 = arith.constant 0 : index
    %c0_24 = arith.constant 0 : index
    %51 = vector.load %arg7[%c0_21, %c0_22, %c0_23, %c0_24] : memref<1x1x8x128xf32, #tpu.memory_space<vmem>>, vector<1x1x8x128xf32>
    %52 = vector.shape_cast %51 : vector<1x1x8x128xf32> to vector<8x128xf32>
    %53 = vector.shape_cast %50 : vector<8x128xf32> to vector<1x1x8x128xf32>
    tpu.vector_store %arg7[%c0_21, %c0_22, %c0_23, %c0_24], %53 {strides = array<i32>} : memref<1x1x8x128xf32, #tpu.memory_space<vmem>>, vector<1x1x8x128xf32>,
    return
  }
  func.func @transform_0(%arg0: i32, %arg1: i32) -> (i32, i32, i32, i32) {
    %c0_i32 = arith.constant 0 : i32
    %c0_i32_0 = arith.constant 0 : i32
    %c0_i32_1 = arith.constant 0 : i32
    return %arg0, %arg1, %c0_i32, %c0_i32_0 : i32, i32, i32, i32
  }
  func.func @transform_1(%arg0: i32, %arg1: i32) -> (i32, i32, i32, i32) {
    %c0_i32 = arith.constant 0 : i32
    %c0_i32_0 = arith.constant 0 : i32
    %c0_i32_1 = arith.constant 0 : i32
    return %arg0, %arg1, %c0_i32, %c0_i32_0 : i32, i32, i32, i32
  }
  func.func @transform_2(%arg0: i32, %arg1: i32) -> (i32, i32) {
    %c0_i32 = arith.constant 0 : i32
    %c0_i32_0 = arith.constant 0 : i32
    %c0_i32_1 = arith.constant 0 : i32
    return %c0_i32, %c0_i32_0 : i32, i32
  }
  func.func @transform_3(%arg0: i32, %arg1: i32) -> (i32, i32) {
    %c0_i32 = arith.constant 0 : i32
    %c0_i32_0 = arith.constant 0 : i32
    %c0_i32_1 = arith.constant 0 : i32
    return %c0_i32, %c0_i32_0 : i32, i32
  }
  func.func @transform_4(%arg0: i32, %arg1: i32) -> (i32, i32, i32) {
    %c0_i32 = arith.constant 0 : i32
    %c0_i32_0 = arith.constant 0 : i32
    return %arg0, %c0_i32, %arg1 : i32, i32, i32
  }
  func.func @transform_5(%arg0: i32, %arg1: i32) -> (i32, i32, i32, i32) {
    %c0_i32 = arith.constant 0 : i32
    %c0_i32_0 = arith.constant 0 : i32
    %c0_i32_1 = arith.constant 0 : i32
    return %arg0, %arg1, %c0_i32, %c0_i32_0 : i32, i32, i32, i32
  }
}

</mosaic_0001>

<llo_original>
// kernel: reverse.1
$region0: #{reverse.1}
  %s0 = inlined_call_operand.vmem [shape: f32[2,256], index: 0, kind: input, shape index: {}]
  %s1 = inlined_call_operand.vmem [shape: f32[2,256], index: 1, kind: output, shape index: {}]
  %v2 = vlaneseq
  %v3 = vsub.s32 127, %v2
  %4 = vset.pattern.permute.xlu0 %v3
  $region1: #{reverse.1} parent=0
    #allocation0 [shape = 'u8[4096]{0}', space=vmem, size = 0x1000, scoped, tag = 'operand span for operand 0']
    #allocation1 [shape = 'u8[2048]{0}', space=vmem, size = 0x800, scoped, tag = 'packed  for operand 0']
    #allocation2 [shape = 'u8[4096]{0}', space=vmem, size = 0x1000, scoped, tag = 'operand span for operand 1']
    #allocation3 [shape = 'u8[2048]{0}', space=vmem, size = 0x800, scoped, tag = 'packed  for operand 1']
    loop: start=0, step=1, limit=4
    $region2: #{reverse.1} parent=1 // loop_pre_header
      _
    $region3: #{reverse.1} parent=1 // loop_header
      %s6 = sphi 0, %s10
      %p7 = scmp.ge.s32.totalorder %s6, 4
      %s13 = sphi 0, %s25
      %s14 = sphi 0, %s21
      %s15 = sphi 0, %s13
      %s16 = sphi 0, %s14
      %s17 = sphi 0, %s15
      %s18 = sphi 0, %s16
    $region4: #{reverse.1} parent=1 // loop_header_branch
      %9 = sbr.rel (%p7) target = $region8
    $region5: #{reverse.1} parent=1 // loop_body
      %s11 = ssub.s32 %s6, 1
      %s12 = ssub.s32 %s6, 2
      %s19 = sadd.s32 1, %s14
      %p20 = scmp.ge.s32.totalorder %s19, 2
      %s21 = scalar_select %p20, 0, %s19
      %s22 = sadd.s32 1, %s13
      %s23 = scalar_select %p20, %s22, %s13
      %p24 = scmp.ge.s32.totalorder %s23, 1
      %s25 = scalar_select %p24, 0, %s23
      %p26 = scmp.le.s32.totalorder 1, %s6
      %p27 = scmp.lt.s32.totalorder %s6, 3
      %p28 = pnand %p26, %p27
      %p29 = pneg %p28
      // Predicated region
      $region9: #{reverse.1} parent=5 // pred_check
        _
      $region10: #{reverse.1} parent=5 // pred_check_branch
        %31 = sbr.rel (%p28) target = $region12
      $region11: #{reverse.1} parent=5 // pred_region
        %s32 = ssub.s32 %s6, 1
      $region12: #{reverse.1} parent=5 // pred_fallthru
        _
      %p33 = scmp.lt.s32.totalorder %s6, 2
      // Predicated region
      $region13: #{reverse.1} parent=5 // pred_check
        %p34 = pneg %p33
      $region14: #{reverse.1} parent=5 // pred_check_branch
        %36 = sbr.rel (%p34) target = $region16
      $region15: #{reverse.1} parent=5 // pred_region
        %s37 = sand.u32 %s6, 1
        %s38 = sand.u32 %s6, 1
        %s39 = smul.addr %s38, 2
        %s40 = scalar_lea.vmem [#allocation1], %s39
        %s41 = ssub.s32 1, %s14
        %s42 = smul.addr %s13, 2
        %s43 = sadd.s32 %s41, %s42
        %s44 = smul.addr %s43, 2
        %s45 = scalar_lea.vmem %s0, %s44
        // Predicated region
        $region17: #{reverse.1} parent=15 // pred_check
          _
        $region18: #{reverse.1} parent=15 // pred_check_branch
          %47 = sbr.rel (0) target = $region20
        $region19: #{reverse.1} parent=15 // pred_region
          // Predicated region
          $region21: #{reverse.1} parent=19 // pred_check
            _
          $region22: #{reverse.1} parent=19 // pred_check_branch
            %49 = sbr.rel target = $region24
          $region23: #{reverse.1} parent=19 // pred_region
            // Predicated region
            $region36: #{reverse.1} parent=23 // pred_check
              _
            $region37: #{reverse.1} parent=23 // pred_check_branch
              %64 = sbr.rel (0) target = $region39
            $region38: #{reverse.1} parent=23 // pred_region
              loop: start=0, step=1, limit=1
              $region40: #{reverse.1} parent=38 // loop_pre_header
                _
              $region41: #{reverse.1} parent=38 // loop_header
                %s67 = sphi 0, %s71
                %p68 = scmp.ge.s32.totalorder %s67, 1
                %s72 = sphi %s45, %s45
                %s73 = sphi %s40, %s40
              $region42: #{reverse.1} parent=38 // loop_header_branch
                %70 = sbr.rel (%p68) target = $region46
              $region43: #{reverse.1} parent=38 // loop_body
                %v74 = vld [vmem:[%s72] sm:$0x3]
                %75 = vst [vmem:[%s73] sm:$0x3] %v74
              $region44: #{reverse.1} parent=38 // loop_footer
                %s71 = sadd.s32 1, %s67
              $region45: #{reverse.1} parent=38 // loop_footer_branch
                %66 = sbr.rel target = $region41
              $region46: #{reverse.1} parent=38 // loop_exit
                _
            $region39: #{reverse.1} parent=23 // pred_fallthru
              _
          $region24: #{reverse.1} parent=19 // pred_fallthru
            _
          // Predicated region
          $region25: #{reverse.1} parent=19 // pred_check
            _
          $region26: #{reverse.1} parent=19 // pred_check_branch
            %51 = sbr.rel (0) target = $region28
          $region27: #{reverse.1} parent=19 // pred_region
            loop: start=0, step=1, limit=1
            $region29: #{reverse.1} parent=27 // loop_pre_header
              _
            $region30: #{reverse.1} parent=27 // loop_header
              %s54 = sphi 0, %s58
              %p55 = scmp.ge.s32.totalorder %s54, 1
              %s59 = sphi %s45, %s45
              %s60 = sphi %s40, %s40
            $region31: #{reverse.1} parent=27 // loop_header_branch
              %57 = sbr.rel (%p55) target = $region35
            $region32: #{reverse.1} parent=27 // loop_body
              %v61 = vld [vmem:[%s59] sm:$0x3]
              %62 = vst [vmem:[%s60] sm:$0x3] %v61
            $region33: #{reverse.1} parent=27 // loop_footer
              %s58 = sadd.s32 1, %s54
            $region34: #{reverse.1} parent=27 // loop_footer_branch
              %53 = sbr.rel target = $region30
            $region35: #{reverse.1} parent=27 // loop_exit
              _
          $region28: #{reverse.1} parent=19 // pred_fallthru
            _
        $region20: #{reverse.1} parent=15 // pred_fallthru
          _
        %76 = vnop
      $region16: #{reverse.1} parent=5 // pred_fallthru
        _
      %p77 = scmp.le.s32.totalorder 1, %s6
      %p78 = scmp.lt.s32.totalorder %s6, 3
      %p79 = pnand %p77, %p78
      %p80 = pneg %p79
      // Predicated region
      $region47: #{reverse.1} parent=5 // pred_check
        _
      $region48: #{reverse.1} parent=5 // pred_check_branch
        %82 = sbr.rel (%p79) target = $region50
      $region49: #{reverse.1} parent=5 // pred_region
        %s83 = ssub.s32 %s6, 1
        %s84 = sand.u32 %s11, 1
        %s85 = sand.u32 %s11, 1
        %s86 = smul.addr %s85, 2
        %s87 = scalar_lea.vmem [#allocation1], %s86
        %s88 = sand.u32 %s11, 1
        %s89 = sand.u32 %s11, 1
        %s90 = smul.addr %s89, 2
        %s91 = scalar_lea.vmem [#allocation1], %s90
        %s92 = sand.u32 %s11, 1
        %s93 = sand.u32 %s11, 1
        %s94 = smul.addr %s93, 2
        %s95 = scalar_lea.vmem [#allocation3], %s94
        %s97 = sshllo.u32 0, 2
        %v98 = vld [vmem:[%s91] sm:%s97]
        %99 = vst [vmem:[#allocation0] sm:%s97] %v98
        %s100 = ssub.s32 1, %s16
        %v101 = vld [vmem:[#allocation0] sm:$0xff]
        %102 = vperm.xlu0 %4, %v101
        %v103 = vpop.permute.xlu0 %102
        %104 = vst [vmem:[#allocation2] sm:$0xff] %v103
        %s106 = sshllo.u32 0, 2
        %v108 = vld [vmem:[#allocation2] sm:%s106]
        %s109 = sshllo.u32 0, 2
        %110 = vst [vmem:[%s95] sm:%s109] %v108
        %s111 = sand.u32 %s11, 1
        %s112 = sand.u32 %s11, 1
        %s113 = smul.addr %s112, 2
        %s114 = scalar_lea.vmem [#allocation3], %s113
        %s115 = smul.addr %s15, 2
        %s116 = sadd.s32 %s16, %s115
        %s117 = smul.addr %s116, 2
        %s118 = scalar_lea.vmem %s1, %s117
        // Predicated region
        $region51: #{reverse.1} parent=49 // pred_check
          _
        $region52: #{reverse.1} parent=49 // pred_check_branch
          %120 = sbr.rel (0) target = $region54
        $region53: #{reverse.1} parent=49 // pred_region
          // Predicated region
          $region55: #{reverse.1} parent=53 // pred_check
            _
          $region56: #{reverse.1} parent=53 // pred_check_branch
            %122 = sbr.rel target = $region58
          $region57: #{reverse.1} parent=53 // pred_region
            // Predicated region
            $region70: #{reverse.1} parent=57 // pred_check
              _
            $region71: #{reverse.1} parent=57 // pred_check_branch
              %137 = sbr.rel (0) target = $region73
            $region72: #{reverse.1} parent=57 // pred_region
              loop: start=0, step=1, limit=1
              $region74: #{reverse.1} parent=72 // loop_pre_header
                _
              $region75: #{reverse.1} parent=72 // loop_header
                %s140 = sphi 0, %s144
                %p141 = scmp.ge.s32.totalorder %s140, 1
                %s145 = sphi %s114, %s114
                %s146 = sphi %s118, %s118
              $region76: #{reverse.1} parent=72 // loop_header_branch
                %143 = sbr.rel (%p141) target = $region80
              $region77: #{reverse.1} parent=72 // loop_body
                %v147 = vld [vmem:[%s145] sm:$0x3]
                %148 = vst [vmem:[%s146] sm:$0x3] %v147
              $region78: #{reverse.1} parent=72 // loop_footer
                %s144 = sadd.s32 1, %s140
              $region79: #{reverse.1} parent=72 // loop_footer_branch
                %139 = sbr.rel target = $region75
              $region80: #{reverse.1} parent=72 // loop_exit
                _
            $region73: #{reverse.1} parent=57 // pred_fallthru
              _
          $region58: #{reverse.1} parent=53 // pred_fallthru
            _
          // Predicated region
          $region59: #{reverse.1} parent=53 // pred_check
            _
          $region60: #{reverse.1} parent=53 // pred_check_branch
            %124 = sbr.rel (0) target = $region62
          $region61: #{reverse.1} parent=53 // pred_region
            loop: start=0, step=1, limit=1
            $region63: #{reverse.1} parent=61 // loop_pre_header
              _
            $region64: #{reverse.1} parent=61 // loop_header
              %s127 = sphi 0, %s131
              %p128 = scmp.ge.s32.totalorder %s127, 1
              %s132 = sphi %s114, %s114
              %s133 = sphi %s118, %s118
            $region65: #{reverse.1} parent=61 // loop_header_branch
              %130 = sbr.rel (%p128) target = $region69
            $region66: #{reverse.1} parent=61 // loop_body
              %v134 = vld [vmem:[%s132] sm:$0x3]
              %135 = vst [vmem:[%s133] sm:$0x3] %v134
            $region67: #{reverse.1} parent=61 // loop_footer
              %s131 = sadd.s32 1, %s127
            $region68: #{reverse.1} parent=61 // loop_footer_branch
              %126 = sbr.rel target = $region64
            $region69: #{reverse.1} parent=61 // loop_exit
              _
          $region62: #{reverse.1} parent=53 // pred_fallthru
            _
        $region54: #{reverse.1} parent=49 // pred_fallthru
          _
        %149 = vnop
      $region50: #{reverse.1} parent=5 // pred_fallthru
        _
      %p150 = scmp.le.s32.totalorder 2, %s6
      // Predicated region
      $region81: #{reverse.1} parent=5 // pred_check
        %p151 = pneg %p150
      $region82: #{reverse.1} parent=5 // pred_check_branch
        %153 = sbr.rel (%p151) target = $region84
      $region83: #{reverse.1} parent=5 // pred_region
        %s154 = ssub.s32 %s6, 2
        %s155 = sand.u32 %s12, 1
        %s156 = sand.u32 %s12, 1
        %s157 = smul.addr %s156, 2
        %s158 = scalar_lea.vmem [#allocation3], %s157
      $region84: #{reverse.1} parent=5 // pred_fallthru
        _
    $region6: #{reverse.1} parent=1 // loop_footer
      %s10 = sadd.s32 1, %s6
    $region7: #{reverse.1} parent=1 // loop_footer_branch
      %5 = sbr.rel target = $region3
    $region8: #{reverse.1} parent=1 // loop_exit
      _

// kernel: whisper_mel.1
$region0: #{whisper_mel.1}
  #allocation0 [shape = 'u32[]', space=smem, size = 0x4, offset = 0x4, fixed_abs, tag = 'smem constant byte address 0x4 - core index']
  #allocation1 [shape = 'u32[144,128]{1,0:T(1,128)}', space=vmem, size = 0x12000, scoped, tag = 'internal scratch']
  %s0 = inlined_call_operand.vmem [shape: f32[2,1,80,16], index: 0, kind: input, shape index: {}]
  %s1 = inlined_call_operand.vmem [shape: f32[2,1,80,16], index: 1, kind: input, shape index: {}]
  %s2 = inlined_call_operand.vmem [shape: bf16[832,400], index: 2, kind: input, shape index: {}]
  %s3 = inlined_call_operand.vmem [shape: bf16[80,208], index: 3, kind: input, shape index: {}]
  %s4 = inlined_call_operand.vmem [shape: f32[2,80,8], index: 4, kind: output, shape index: {0}]
  %s5 = inlined_call_operand.vmem [shape: f32[2,1,8,128], index: 5, kind: output, shape index: {1}]
  %6 = xla_tuple %s4, %s5
  %s7 = sld [smem:[#allocation0]]
  $region57: #{whisper_mel.1} parent=0
    _
  %s9 = ssub.s32 1, %s7
  %s10 = scalar_select 0, %s9, %s7
  loop: start=0, step=1, limit=4
  $region2: #{whisper_mel.1} parent=0 // loop_pre_header
    _
  $region3: #{whisper_mel.1} parent=0 // loop_header
    %s12 = sphi 0, %s16
    %p13 = scmp.ge.s32.totalorder %s12, 4
    %s19 = sphi 0, %s31
    %s20 = sphi 0, %s27
    %s21 = sphi 0, %s19
    %s22 = sphi 0, %s20
    %s23 = sphi 0, %s21
    %s24 = sphi 0, %s22
    %s36 = sphi 0, %s38
    %s39 = sphi 0, %s36
    %s40 = sphi 0, %s39
    %s56 = sphi 0, %s40
    %s64 = sphi 0, %s66
    %s67 = sphi 0, %s64
    %s68 = sphi 0, %s67
    %s84 = sphi 0, %s68
    %s88 = sphi 0, %s88
    %s90 = sphi 0, %s88
    %s91 = sphi 0, %s90
    %s105 = sphi 0, %s91
    %s109 = sphi 0, %s109
    %s111 = sphi 0, %s109
    %s112 = sphi 0, %s111
    %s126 = sphi 0, %s112
    %s134 = sphi 0, %s136
    %s137 = sphi 0, %s134
    %s138 = sphi 0, %s137
    %s154 = sphi 0, %s138
    %s162 = sphi 0, %s164
    %s165 = sphi 0, %s162
    %s166 = sphi 0, %s165
    %s182 = sphi 0, %s166
  $region4: #{whisper_mel.1} parent=0 // loop_header_branch
    %15 = sbr.rel (%p13) target = $region8
  $region5: #{whisper_mel.1} parent=0 // loop_body
    %s17 = ssub.s32 %s12, 1
    %s18 = ssub.s32 %s12, 2
    %s25 = sadd.s32 1, %s20
    %p26 = scmp.ge.s32.totalorder %s25, 1
    %s27 = scalar_select %p26, 0, %s25
    %s28 = sadd.s32 1, %s19
    %s29 = scalar_select %p26, %s28, %s19
    %p30 = scmp.ge.s32.totalorder %s29, 2
    %s31 = scalar_select %p30, 0, %s29
    %s32 = ssub.s32 %s19, %s31
    %s33 = ssub.s32 %s20, %s27
    %s34 = sor.u32 %s32, %s33
    %p35 = scmp.eq.s32.totalorder %s34, 0
    %s37 = sadd.s32 %s36, 1
    %s38 = scalar_select %p35, %s36, %s37
    %p41 = pneg %p35
    %p42 = scmp.eq.s32.totalorder %s12, 1
    %p43 = por %p41, %p42
    %p44 = scmp.ne.s32.totalorder %s36, %s39
    %p45 = scmp.eq.s32.totalorder %s12, 0
    %p46 = por %p44, %p45
    %p47 = scmp.ne.s32.totalorder %s36, %s39
    %p48 = scmp.eq.s32.totalorder %s17, 1
    %p49 = por %p47, %p48
    %p50 = scmp.ne.s32.totalorder %s39, %s40
    %p51 = scmp.eq.s32.totalorder %s17, 0
    %p52 = por %p50, %p51
    %p53 = scmp.ne.s32.totalorder %s39, %s40
    %p54 = scmp.eq.s32.totalorder %s18, 1
    %p55 = por %p53, %p54
    %p57 = scmp.ne.s32.totalorder %s40, %s56
    %p58 = scmp.eq.s32.totalorder %s18, 0
    %p59 = por %p57, %p58
    %s60 = ssub.s32 %s19, %s31
    %s61 = ssub.s32 %s20, %s27
    %s62 = sor.u32 %s60, %s61
    %p63 = scmp.eq.s32.totalorder %s62, 0
    %s65 = sadd.s32 %s64, 1
    %s66 = scalar_select %p63, %s64, %s65
    %p69 = pneg %p63
    %p70 = scmp.eq.s32.totalorder %s12, 1
    %p71 = por %p69, %p70
    %p72 = scmp.ne.s32.totalorder %s64, %s67
    %p73 = scmp.eq.s32.totalorder %s12, 0
    %p74 = por %p72, %p73
    %p75 = scmp.ne.s32.totalorder %s64, %s67
    %p76 = scmp.eq.s32.totalorder %s17, 1
    %p77 = por %p75, %p76
    %p78 = scmp.ne.s32.totalorder %s67, %s68
    %p79 = scmp.eq.s32.totalorder %s17, 0
    %p80 = por %p78, %p79
    %p81 = scmp.ne.s32.totalorder %s67, %s68
    %p82 = scmp.eq.s32.totalorder %s18, 1
    %p83 = por %p81, %p82
    %p85 = scmp.ne.s32.totalorder %s68, %s84
    %p86 = scmp.eq.s32.totalorder %s18, 0
    %p87 = por %p85, %p86
    %s89 = sadd.s32 %s88, 1
    %p92 = scmp.eq.s32.totalorder %s12, 1
    %p93 = scmp.ne.s32.totalorder %s88, %s90
    %p94 = scmp.eq.s32.totalorder %s12, 0
    %p95 = por %p93, %p94
    %p96 = scmp.ne.s32.totalorder %s88, %s90
    %p97 = scmp.eq.s32.totalorder %s17, 1
    %p98 = por %p96, %p97
    %p99 = scmp.ne.s32.totalorder %s90, %s91
    %p100 = scmp.eq.s32.totalorder %s17, 0
    %p101 = por %p99, %p100
    %p102 = scmp.ne.s32.totalorder %s90, %s91
    %p103 = scmp.eq.s32.totalorder %s18, 1
    %p104 = por %p102, %p103
    %p106 = scmp.ne.s32.totalorder %s91, %s105
    %p107 = scmp.eq.s32.totalorder %s18, 0
    %p108 = por %p106, %p107
    %s110 = sadd.s32 %s109, 1
    %p113 = scmp.eq.s32.totalorder %s12, 1
    %p114 = scmp.ne.s32.totalorder %s109, %s111
    %p115 = scmp.eq.s32.totalorder %s12, 0
    %p116 = por %p114, %p115
    %p117 = scmp.ne.s32.totalorder %s109, %s111
    %p118 = scmp.eq.s32.totalorder %s17, 1
    %p119 = por %p117, %p118
    %p120 = scmp.ne.s32.totalorder %s111, %s112
    %p121 = scmp.eq.s32.totalorder %s17, 0
    %p122 = por %p120, %p121
    %p123 = scmp.ne.s32.totalorder %s111, %s112
    %p124 = scmp.eq.s32.totalorder %s18, 1
    %p125 = por %p123, %p124
    %p127 = scmp.ne.s32.totalorder %s112, %s126
    %p128 = scmp.eq.s32.totalorder %s18, 0
    %p129 = por %p127, %p128
    %s130 = ssub.s32 %s19, %s31
    %s131 = ssub.s32 %s20, %s27
    %s132 = sor.u32 %s130, %s131
    %p133 = scmp.eq.s32.totalorder %s132, 0
    %s135 = sadd.s32 %s134, 1
    %s136 = scalar_select %p133, %s134, %s135
    %p139 = pneg %p133
    %p140 = scmp.eq.s32.totalorder %s12, 1
    %p141 = por %p139, %p140
    %p142 = scmp.ne.s32.totalorder %s134, %s137
    %p143 = scmp.eq.s32.totalorder %s12, 0
    %p144 = por %p142, %p143
    %p145 = scmp.ne.s32.totalorder %s134, %s137
    %p146 = scmp.eq.s32.totalorder %s17, 1
    %p147 = por %p145, %p146
    %p148 = scmp.ne.s32.totalorder %s137, %s138
    %p149 = scmp.eq.s32.totalorder %s17, 0
    %p150 = por %p148, %p149
    %p151 = scmp.ne.s32.totalorder %s137, %s138
    %p152 = scmp.eq.s32.totalorder %s18, 1
    %p153 = por %p151, %p152
    %p155 = scmp.ne.s32.totalorder %s138, %s154
    %p156 = scmp.eq.s32.totalorder %s18, 0
    %p157 = por %p155, %p156
    %s158 = ssub.s32 %s19, %s31
    %s159 = ssub.s32 %s20, %s27
    %s160 = sor.u32 %s158, %s159
    %p161 = scmp.eq.s32.totalorder %s160, 0
    %s163 = sadd.s32 %s162, 1
    %s164 = scalar_select %p161, %s162, %s163
    %p167 = pneg %p161
    %p168 = scmp.eq.s32.totalorder %s12, 1
    %p169 = por %p167, %p168
    %p170 = scmp.ne.s32.totalorder %s162, %s165
    %p171 = scmp.eq.s32.totalorder %s12, 0
    %p172 = por %p170, %p171
    %p173 = scmp.ne.s32.totalorder %s162, %s165
    %p174 = scmp.eq.s32.totalorder %s17, 1
    %p175 = por %p173, %p174
    %p176 = scmp.ne.s32.totalorder %s165, %s166
    %p177 = scmp.eq.s32.totalorder %s17, 0
    %p178 = por %p176, %p177
    %p179 = scmp.ne.s32.totalorder %s165, %s166
    %p180 = scmp.eq.s32.totalorder %s18, 1
    %p181 = por %p179, %p180
    %p183 = scmp.ne.s32.totalorder %s166, %s182
    %p184 = scmp.eq.s32.totalorder %s18, 0
    %p185 = por %p183, %p184
    %p186 = scmp.le.s32.totalorder 1, %s12
    %p187 = scmp.lt.s32.totalorder %s12, 3
    %p188 = pnand %p186, %p187
    %p189 = pneg %p188
    // Predicated region
    $region9: #{whisper_mel.1} parent=5 // pred_check
      _
    $region10: #{whisper_mel.1} parent=5 // pred_check_branch
      %191 = sbr.rel (%p188) target = $region12
    $region11: #{whisper_mel.1} parent=5 // pred_region
      %s192 = ssub.s32 %s12, 1
      // Predicated region
      $region13: #{whisper_mel.1} parent=11 // pred_check
        %p193 = pneg %p101
      $region14: #{whisper_mel.1} parent=11 // pred_check_branch
        %195 = sbr.rel (%p193) target = $region16
      $region15: #{whisper_mel.1} parent=11 // pred_region
        _
      $region16: #{whisper_mel.1} parent=11 // pred_fallthru
        _
      // Predicated region
      $region17: #{whisper_mel.1} parent=11 // pred_check
        %p196 = pneg %p122
      $region18: #{whisper_mel.1} parent=11 // pred_check_branch
        %198 = sbr.rel (%p196) target = $region20
      $region19: #{whisper_mel.1} parent=11 // pred_region
        _
      $region20: #{whisper_mel.1} parent=11 // pred_fallthru
        _
    $region12: #{whisper_mel.1} parent=5 // pred_fallthru
      _
    %p199 = scmp.lt.s32.totalorder %s12, 2
    // Predicated region
    $region21: #{whisper_mel.1} parent=5 // pred_check
      %p200 = pneg %p199
    $region22: #{whisper_mel.1} parent=5 // pred_check_branch
      %202 = sbr.rel (%p200) target = $region24
    $region23: #{whisper_mel.1} parent=5 // pred_region
      // Predicated region
      $region25: #{whisper_mel.1} parent=23 // pred_check
        %p203 = pneg %p46
      $region26: #{whisper_mel.1} parent=23 // pred_check_branch
        %205 = sbr.rel (%p203) target = $region28
      $region27: #{whisper_mel.1} parent=23 // pred_region
        %p206 = scmp.lt.s32.totalorder %s19, 1
        %s207 = scalar_select %p206, %s19, 1
        %p208 = scmp.lt.s32.totalorder %s20, 0
        %s209 = scalar_select %p208, %s20, 0
        %s210 = smul.addr %s209, 10
        %s211 = smul.addr %s207, 10
        %s212 = sadd.s32 %s210, %s211
        %s213 = smul.addr %s212, 8
        %s214 = scalar_lea.vmem %s0, %s213
      $region28: #{whisper_mel.1} parent=23 // pred_fallthru
        _
      // Predicated region
      $region29: #{whisper_mel.1} parent=23 // pred_check
        %p215 = pneg %p74
      $region30: #{whisper_mel.1} parent=23 // pred_check_branch
        %217 = sbr.rel (%p215) target = $region32
      $region31: #{whisper_mel.1} parent=23 // pred_region
        %p218 = scmp.lt.s32.totalorder %s19, 1
        %s219 = scalar_select %p218, %s19, 1
        %p220 = scmp.lt.s32.totalorder %s20, 0
        %s221 = scalar_select %p220, %s20, 0
        %s222 = smul.addr %s221, 10
        %s223 = smul.addr %s219, 10
        %s224 = sadd.s32 %s222, %s223
        %s225 = smul.addr %s224, 8
        %s226 = scalar_lea.vmem %s1, %s225
      $region32: #{whisper_mel.1} parent=23 // pred_fallthru
        _
    $region24: #{whisper_mel.1} parent=5 // pred_fallthru
      _
    %p227 = scmp.le.s32.totalorder 1, %s12
    %p228 = scmp.lt.s32.totalorder %s12, 3
    %p229 = pnand %p227, %p228
    %p230 = pneg %p229
    // Predicated region
    $region33: #{whisper_mel.1} parent=5 // pred_check
      _
    $region34: #{whisper_mel.1} parent=5 // pred_check_branch
      %232 = sbr.rel (%p229) target = $region36
    $region35: #{whisper_mel.1} parent=5 // pred_region
      %s233 = ssub.s32 %s12, 1
      %p234 = scmp.lt.s32.totalorder %s21, 1
      %s235 = scalar_select %p234, %s21, 1
      %p236 = scmp.lt.s32.totalorder %s22, 0
      %s237 = scalar_select %p236, %s22, 0
      %s238 = smul.addr %s237, 10
      %s239 = smul.addr %s235, 10
      %s240 = sadd.s32 %s238, %s239
      %s241 = smul.addr %s240, 8
      %s242 = scalar_lea.vmem %s0, %s241
      %p243 = pneg %p52
      %p244 = pneg %p49
      %p245 = scmp.lt.s32.totalorder %s21, 1
      %s246 = scalar_select %p245, %s21, 1
      %p247 = scmp.lt.s32.totalorder %s22, 0
      %s248 = scalar_select %p247, %s22, 0
      %s249 = smul.addr %s248, 10
      %s250 = smul.addr %s246, 10
      %s251 = sadd.s32 %s249, %s250
      %s252 = smul.addr %s251, 8
      %s253 = scalar_lea.vmem %s1, %s252
      %p254 = pneg %p80
      %p255 = pneg %p77
      %p256 = pneg %p101
      %p257 = pneg %p98
      %p258 = pneg %p122
      %p259 = pneg %p119
      %p260 = pneg %p150
      %p261 = pneg %p147
      %p262 = scmp.lt.s32.totalorder %s21, 1
      %s263 = scalar_select %p262, %s21, 1
      %p264 = scmp.lt.s32.totalorder %s22, 0
      %s265 = scalar_select %p264, %s22, 0
      %s266 = smul.addr %s263, 10
      %s267 = sadd.s32 %s265, %s266
      %s268 = smul.addr %s267, 8
      %s269 = scalar_lea.vmem %s4, %s268
      %p270 = pneg %p178
      %p271 = pneg %p175
      %p272 = scmp.lt.s32.totalorder %s21, 1
      %s273 = scalar_select %p272, %s21, 1
      %p274 = scmp.lt.s32.totalorder %s22, 0
      %s275 = scalar_select %p274, %s22, 0
      %s276 = sadd.s32 %s275, %s273
      %s277 = smul.addr %s276, 8
      %s278 = scalar_lea.vmem %s5, %s277
      %p279 = scmp.lt.s32.totalorder %s21, 1
      %s280 = scalar_select %p279, %s21, 1
      %p281 = scmp.lt.s32.totalorder %s22, 0
      %s282 = scalar_select %p281, %s22, 0
      %s283 = smul.addr %s282, 10
      %s284 = smul.addr %s280, 10
      %s285 = sadd.s32 %s283, %s284
      %s286 = smul.addr %s285, 8
      %s287 = scalar_lea.vmem %s0, %s286
      %p288 = scmp.lt.s32.totalorder %s21, 1
      %s289 = scalar_select %p288, %s21, 1
      %p290 = scmp.lt.s32.totalorder %s22, 0
      %s291 = scalar_select %p290, %s22, 0
      %s292 = smul.addr %s291, 10
      %s293 = smul.addr %s289, 10
      %s294 = sadd.s32 %s292, %s293
      %s295 = smul.addr %s294, 8
      %s296 = scalar_lea.vmem %s1, %s295
      %p297 = scmp.lt.s32.totalorder %s21, 1
      %s298 = scalar_select %p297, %s21, 1
      %p299 = scmp.lt.s32.totalorder %s22, 0
      %s300 = scalar_select %p299, %s22, 0
      %s301 = smul.addr %s298, 10
      %s302 = sadd.s32 %s300, %s301
      %s303 = smul.addr %s302, 8
      %s304 = scalar_lea.vmem %s4, %s303
      %p305 = scmp.lt.s32.totalorder %s21, 1
      %s306 = scalar_select %p305, %s21, 1
      %p307 = scmp.lt.s32.totalorder %s22, 0
      %s308 = scalar_select %p307, %s22, 0
      %s309 = sadd.s32 %s308, %s306
      %s310 = smul.addr %s309, 8
      %s311 = scalar_lea.vmem %s5, %s310
      %v313 = vld [vmem:[%s287] sm:$0xff]
      %v314 = vld [vmem:[%s287 + $0x8] sm:$0xff]
      %v315 = vld [vmem:[%s287 + $0x10] sm:$0xff]
      %v316 = vld [vmem:[%s287 + $0x18] sm:$0xff]
      %v317 = vld [vmem:[%s287 + $0x20] sm:$0xff]
      %v318 = vld [vmem:[%s287 + $0x28] sm:$0xff]
      %v319 = vld [vmem:[%s287 + $0x30] sm:$0xff]
      %v320 = vld [vmem:[%s287 + $0x38] sm:$0xff]
      %v321 = vld [vmem:[%s287 + $0x40] sm:$0xff]
      %v322 = vld [vmem:[%s287 + $0x48] sm:$0xff]
      %v323 = vld [vmem:[%s296] sm:$0xff]
      %v324 = vld [vmem:[%s296 + $0x8] sm:$0xff]
      %v325 = vld [vmem:[%s296 + $0x10] sm:$0xff]
      %v326 = vld [vmem:[%s296 + $0x18] sm:$0xff]
      %v327 = vld [vmem:[%s296 + $0x20] sm:$0xff]
      %v328 = vld [vmem:[%s296 + $0x28] sm:$0xff]
      %v329 = vld [vmem:[%s296 + $0x30] sm:$0xff]
      %v330 = vld [vmem:[%s296 + $0x38] sm:$0xff]
      %v331 = vld [vmem:[%s296 + $0x40] sm:$0xff]
      %v332 = vld [vmem:[%s296 + $0x48] sm:$0xff]
      %343 = vrot.lane.b32.xlu0 %v313, 127
      %v344 = vpop.permute.xlu0 %343
      %345 = vrot.lane.b32.xlu0 %v314, 127
      %v346 = vpop.permute.xlu0 %345
      %347 = vrot.lane.b32.xlu0 %v315, 127
      %v348 = vpop.permute.xlu0 %347
      %349 = vrot.lane.b32.xlu0 %v316, 127
      %v350 = vpop.permute.xlu0 %349
      %351 = vrot.lane.b32.xlu0 %v317, 127
      %v352 = vpop.permute.xlu0 %351
      %353 = vrot.lane.b32.xlu0 %v318, 127
      %v354 = vpop.permute.xlu0 %353
      %355 = vrot.lane.b32.xlu0 %v319, 127
      %v356 = vpop.permute.xlu0 %355
      %357 = vrot.lane.b32.xlu0 %v320, 127
      %v358 = vpop.permute.xlu0 %357
      %359 = vrot.lane.b32.xlu0 %v321, 127
      %v360 = vpop.permute.xlu0 %359
      %361 = vrot.lane.b32.xlu0 %v322, 127
      %v362 = vpop.permute.xlu0 %361
      %383 = vrot.lane.b32.xlu0 %v323, 127
      %v384 = vpop.permute.xlu0 %383
      %385 = vrot.lane.b32.xlu0 %v324, 127
      %v386 = vpop.permute.xlu0 %385
      %387 = vrot.lane.b32.xlu0 %v325, 127
      %v388 = vpop.permute.xlu0 %387
      %389 = vrot.lane.b32.xlu0 %v326, 127
      %v390 = vpop.permute.xlu0 %389
      %391 = vrot.lane.b32.xlu0 %v327, 127
      %v392 = vpop.permute.xlu0 %391
      %393 = vrot.lane.b32.xlu0 %v328, 127
      %v394 = vpop.permute.xlu0 %393
      %395 = vrot.lane.b32.xlu0 %v329, 127
      %v396 = vpop.permute.xlu0 %395
      %397 = vrot.lane.b32.xlu0 %v330, 127
      %v398 = vpop.permute.xlu0 %397
      %399 = vrot.lane.b32.xlu0 %v331, 127
      %v400 = vpop.permute.xlu0 %399
      %401 = vrot.lane.b32.xlu0 %v332, 127
      %v402 = vpop.permute.xlu0 %401
      %413 = vrot.lane.b32.xlu0 %v313, 126
      %v414 = vpop.permute.xlu0 %413
      %415 = vrot.lane.b32.xlu0 %v314, 126
      %v416 = vpop.permute.xlu0 %415
      %417 = vrot.lane.b32.xlu0 %v315, 126
      %v418 = vpop.permute.xlu0 %417
      %419 = vrot.lane.b32.xlu0 %v316, 126
      %v420 = vpop.permute.xlu0 %419
      %421 = vrot.lane.b32.xlu0 %v317, 126
      %v422 = vpop.permute.xlu0 %421
      %423 = vrot.lane.b32.xlu0 %v318, 126
      %v424 = vpop.permute.xlu0 %423
      %425 = vrot.lane.b32.xlu0 %v319, 126
      %v426 = vpop.permute.xlu0 %425
      %427 = vrot.lane.b32.xlu0 %v320, 126
      %v428 = vpop.permute.xlu0 %427
      %429 = vrot.lane.b32.xlu0 %v321, 126
      %v430 = vpop.permute.xlu0 %429
      %431 = vrot.lane.b32.xlu0 %v322, 126
      %v432 = vpop.permute.xlu0 %431
      %v443 = vpack.c.bf16 %v314, %v313
      %v444 = vpack.c.bf16 %v316, %v315
      %v445 = vpack.c.bf16 %v318, %v317
      %v446 = vpack.c.bf16 %v320, %v319
      %v447 = vpack.c.bf16 %v322, %v321
      %v448 = vpack.c.bf16 %v324, %v323
      %v449 = vpack.c.bf16 %v326, %v325
      %v450 = vpack.c.bf16 %v328, %v327
      %v451 = vpack.c.bf16 %v330, %v329
      %v452 = vpack.c.bf16 %v332, %v331
      %v453 = vpack.c.bf16 %v346, %v344
      %v454 = vpack.c.bf16 %v350, %v348
      %v455 = vpack.c.bf16 %v354, %v352
      %v456 = vpack.c.bf16 %v358, %v356
      %v457 = vpack.c.bf16 %v362, %v360
      %v458 = vpack.c.bf16 %v386, %v384
      %v459 = vpack.c.bf16 %v390, %v388
      %v460 = vpack.c.bf16 %v394, %v392
      %v461 = vpack.c.bf16 %v398, %v396
      %v462 = vpack.c.bf16 %v402, %v400
      %v463 = vpack.c.bf16 %v416, %v414
      %v464 = vpack.c.bf16 %v420, %v418
      %v465 = vpack.c.bf16 %v424, %v422
      %v466 = vpack.c.bf16 %v428, %v426
      %v467 = vpack.c.bf16 %v432, %v430
      %v468 = vunpack.c.l.bf16 %v443
      %v469 = vunpack.c.h.bf16 %v443
      %v470 = vunpack.c.l.bf16 %v444
      %v471 = vunpack.c.h.bf16 %v444
      %v472 = vunpack.c.l.bf16 %v445
      %v473 = vunpack.c.h.bf16 %v445
      %v474 = vunpack.c.l.bf16 %v446
      %v475 = vunpack.c.h.bf16 %v446
      %v476 = vunpack.c.l.bf16 %v447
      %v477 = vunpack.c.h.bf16 %v447
      %v478 = vunpack.c.l.bf16 %v448
      %v479 = vunpack.c.h.bf16 %v448
      %v480 = vunpack.c.l.bf16 %v449
      %v481 = vunpack.c.h.bf16 %v449
      %v482 = vunpack.c.l.bf16 %v450
      %v483 = vunpack.c.h.bf16 %v450
      %v484 = vunpack.c.l.bf16 %v451
      %v485 = vunpack.c.h.bf16 %v451
      %v486 = vunpack.c.l.bf16 %v452
      %v487 = vunpack.c.h.bf16 %v452
      %v488 = vunpack.c.l.bf16 %v453
      %v489 = vunpack.c.h.bf16 %v453
      %v490 = vunpack.c.l.bf16 %v454
      %v491 = vunpack.c.h.bf16 %v454
      %v492 = vunpack.c.l.bf16 %v455
      %v493 = vunpack.c.h.bf16 %v455
      %v494 = vunpack.c.l.bf16 %v456
      %v495 = vunpack.c.h.bf16 %v456
      %v496 = vunpack.c.l.bf16 %v457
      %v497 = vunpack.c.h.bf16 %v457
      %v498 = vunpack.c.l.bf16 %v458
      %v499 = vunpack.c.h.bf16 %v458
      %v500 = vunpack.c.l.bf16 %v459
      %v501 = vunpack.c.h.bf16 %v459
      %v502 = vunpack.c.l.bf16 %v460
      %v503 = vunpack.c.h.bf16 %v460
      %v504 = vunpack.c.l.bf16 %v461
      %v505 = vunpack.c.h.bf16 %v461
      %v506 = vunpack.c.l.bf16 %v462
      %v507 = vunpack.c.h.bf16 %v462
      %v508 = vunpack.c.l.bf16 %v463
      %v509 = vunpack.c.h.bf16 %v463
      %v510 = vunpack.c.l.bf16 %v464
      %v511 = vunpack.c.h.bf16 %v464
      %v512 = vunpack.c.l.bf16 %v465
      %v513 = vunpack.c.h.bf16 %v465
      %v514 = vunpack.c.l.bf16 %v466
      %v515 = vunpack.c.h.bf16 %v466
      %v516 = vunpack.c.l.bf16 %v467
      %v517 = vunpack.c.h.bf16 %v467
      %v518 = vsub.f32 %v313, %v468
      %v519 = vsub.f32 %v314, %v469
      %v520 = vsub.f32 %v315, %v470
      %v521 = vsub.f32 %v316, %v471
      %v522 = vsub.f32 %v317, %v472
      %v523 = vsub.f32 %v318, %v473
      %v524 = vsub.f32 %v319, %v474
      %v525 = vsub.f32 %v320, %v475
      %v526 = vsub.f32 %v321, %v476
      %v527 = vsub.f32 %v322, %v477
      %v528 = vsub.f32 %v323, %v478
      %v529 = vsub.f32 %v324, %v479
      %v530 = vsub.f32 %v325, %v480
      %v531 = vsub.f32 %v326, %v481
      %v532 = vsub.f32 %v327, %v482
      %v533 = vsub.f32 %v328, %v483
      %v534 = vsub.f32 %v329, %v484
      %v535 = vsub.f32 %v330, %v485
      %v536 = vsub.f32 %v331, %v486
      %v537 = vsub.f32 %v332, %v487
      %v538 = vsub.f32 %v344, %v488
      %v539 = vsub.f32 %v346, %v489
      %v540 = vsub.f32 %v348, %v490
      %v541 = vsub.f32 %v350, %v491
      %v542 = vsub.f32 %v352, %v492
      %v543 = vsub.f32 %v354, %v493
      %v544 = vsub.f32 %v356, %v494
      %v545 = vsub.f32 %v358, %v495
      %v546 = vsub.f32 %v360, %v496
      %v547 = vsub.f32 %v362, %v497
      %v548 = vsub.f32 %v384, %v498
      %v549 = vsub.f32 %v386, %v499
      %v550 = vsub.f32 %v388, %v500
      %v551 = vsub.f32 %v390, %v501
      %v552 = vsub.f32 %v392, %v502
      %v553 = vsub.f32 %v394, %v503
      %v554 = vsub.f32 %v396, %v504
      %v555 = vsub.f32 %v398, %v505
      %v556 = vsub.f32 %v400, %v506
      %v557 = vsub.f32 %v402, %v507
      %v558 = vsub.f32 %v414, %v508
      %v559 = vsub.f32 %v416, %v509
      %v560 = vsub.f32 %v418, %v510
      %v561 = vsub.f32 %v420, %v511
      %v562 = vsub.f32 %v422, %v512
      %v563 = vsub.f32 %v424, %v513
      %v564 = vsub.f32 %v426, %v514
      %v565 = vsub.f32 %v428, %v515
      %v566 = vsub.f32 %v430, %v516
      %v567 = vsub.f32 %v432, %v517
      %v568 = vpack.c.bf16 %v519, %v518
      %v569 = vpack.c.bf16 %v521, %v520
      %v570 = vpack.c.bf16 %v523, %v522
      %v571 = vpack.c.bf16 %v525, %v524
      %v572 = vpack.c.bf16 %v527, %v526
      %v573 = vpack.c.bf16 %v529, %v528
      %v574 = vpack.c.bf16 %v531, %v530
      %v575 = vpack.c.bf16 %v533, %v532
      %v576 = vpack.c.bf16 %v535, %v534
      %v577 = vpack.c.bf16 %v537, %v536
      %v578 = vpack.c.bf16 %v539, %v538
      %v579 = vpack.c.bf16 %v541, %v540
      %v580 = vpack.c.bf16 %v543, %v542
      %v581 = vpack.c.bf16 %v545, %v544
      %v582 = vpack.c.bf16 %v547, %v546
      %v583 = vpack.c.bf16 %v549, %v548
      %v584 = vpack.c.bf16 %v551, %v550
      %v585 = vpack.c.bf16 %v553, %v552
      %v586 = vpack.c.bf16 %v555, %v554
      %v587 = vpack.c.bf16 %v557, %v556
      %v588 = vpack.c.bf16 %v559, %v558
      %v589 = vpack.c.bf16 %v561, %v560
      %v590 = vpack.c.bf16 %v563, %v562
      %v591 = vpack.c.bf16 %v565, %v564
      %v592 = vpack.c.bf16 %v567, %v566
      %v593 = vld [vmem:[%s2] sm:$0xff]
      %v594 = vld [vmem:[%s2 + $0x8] sm:$0xff]
      %v595 = vld [vmem:[%s2 + $0x10] sm:$0xff]
      %v596 = vld [vmem:[%s2 + $0x18] sm:$0xff]
      %v597 = vld [vmem:[%s2 + $0x20] sm:$0xff]
      %v598 = vld [vmem:[%s2 + $0x28] sm:$0xff]
      %v599 = vld [vmem:[%s2 + $0x30] sm:$0xff]
      %v600 = vld [vmem:[%s2 + $0x38] sm:$0xff]
      %v601 = vld [vmem:[%s2 + $0x40] sm:$0xff]
      %v602 = vld [vmem:[%s2 + $0x48] sm:$0xff]
      %v603 = vld [vmem:[%s2 + $0x50] sm:$0xff]
      %v604 = vld [vmem:[%s2 + $0x58] sm:$0xff]
      %v605 = vld [vmem:[%s2 + $0x60] sm:$0xff]
      %v606 = vld [vmem:[%s2 + $0x68] sm:$0xff]
      %v607 = vld [vmem:[%s2 + $0x70] sm:$0xff]
      %v608 = vld [vmem:[%s2 + $0x78] sm:$0xff]
      %v609 = vld [vmem:[%s2 + $0x80] sm:$0xff]
      %v610 = vld [vmem:[%s2 + $0x88] sm:$0xff]
      %v611 = vld [vmem:[%s2 + $0x90] sm:$0xff]
      %v612 = vld [vmem:[%s2 + $0x98] sm:$0xff]
      %v613 = vld [vmem:[%s2 + $0xa0] sm:$0xff]
      %v614 = vld [vmem:[%s2 + $0xa8] sm:$0xff]
      %v615 = vld [vmem:[%s2 + $0xb0] sm:$0xff]
      %v616 = vld [vmem:[%s2 + $0xb8] sm:$0xff]
      %v617 = vld [vmem:[%s2 + $0xc0] sm:$0xff]
      %v618 = vld [vmem:[%s2 + $0xc8] sm:$0xff]
      %v619 = vld [vmem:[%s2 + $0xd0] sm:$0xff]
      %v620 = vld [vmem:[%s2 + $0xd8] sm:$0xff]
      %v621 = vld [vmem:[%s2 + $0xe0] sm:$0xff]
      %v622 = vld [vmem:[%s2 + $0xe8] sm:$0xff]
      %v623 = vld [vmem:[%s2 + $0xf0] sm:$0xff]
      %v624 = vld [vmem:[%s2 + $0xf8] sm:$0xff]
      %v625 = vld [vmem:[%s2 + $0x100] sm:$0xff]
      %v626 = vld [vmem:[%s2 + $0x108] sm:$0xff]
      %v627 = vld [vmem:[%s2 + $0x110] sm:$0xff]
      %v628 = vld [vmem:[%s2 + $0x118] sm:$0xff]
      %v629 = vld [vmem:[%s2 + $0x120] sm:$0xff]
      %v630 = vld [vmem:[%s2 + $0x128] sm:$0xff]
      %v631 = vld [vmem:[%s2 + $0x130] sm:$0xff]
      %v632 = vld [vmem:[%s2 + $0x138] sm:$0xff]
      %v633 = vld [vmem:[%s2 + $0x140] sm:$0xff]
      %v634 = vld [vmem:[%s2 + $0x148] sm:$0xff]
      %v635 = vld [vmem:[%s2 + $0x150] sm:$0xff]
      %v636 = vld [vmem:[%s2 + $0x158] sm:$0xff]
      %v637 = vld [vmem:[%s2 + $0x160] sm:$0xff]
      %v638 = vld [vmem:[%s2 + $0x168] sm:$0xff]
      %v639 = vld [vmem:[%s2 + $0x170] sm:$0xff]
      %v640 = vld [vmem:[%s2 + $0x178] sm:$0xff]
      %v641 = vld [vmem:[%s2 + $0x180] sm:$0xff]
      %v642 = vld [vmem:[%s2 + $0x188] sm:$0xff]
      %v643 = vld [vmem:[%s2 + $0x190] sm:$0xff]
      %v644 = vld [vmem:[%s2 + $0x198] sm:$0xff]
      %v645 = vld [vmem:[%s2 + $0x1a0] sm:$0xff]
      %v646 = vld [vmem:[%s2 + $0x1a8] sm:$0xff]
      %v647 = vld [vmem:[%s2 + $0x1b0] sm:$0xff]
      %v648 = vld [vmem:[%s2 + $0x1b8] sm:$0xff]
      %v649 = vld [vmem:[%s2 + $0x1c0] sm:$0xff]
      %v650 = vld [vmem:[%s2 + $0x1c8] sm:$0xff]
      %v651 = vld [vmem:[%s2 + $0x1d0] sm:$0xff]
      %v652 = vld [vmem:[%s2 + $0x1d8] sm:$0xff]
      %v653 = vld [vmem:[%s2 + $0x1e0] sm:$0xff]
      %v654 = vld [vmem:[%s2 + $0x1e8] sm:$0xff]
      %v655 = vld [vmem:[%s2 + $0x1f0] sm:$0xff]
      %v656 = vld [vmem:[%s2 + $0x1f8] sm:$0xff]
      %v657 = vld [vmem:[%s2 + $0x200] sm:$0xff]
      %v658 = vld [vmem:[%s2 + $0x208] sm:$0xff]
      %v659 = vld [vmem:[%s2 + $0x210] sm:$0xff]
      %v660 = vld [vmem:[%s2 + $0x218] sm:$0xff]
      %v661 = vld [vmem:[%s2 + $0x220] sm:$0xff]
      %v662 = vld [vmem:[%s2 + $0x228] sm:$0xff]
      %v663 = vld [vmem:[%s2 + $0x230] sm:$0xff]
      %v664 = vld [vmem:[%s2 + $0x238] sm:$0xff]
      %v665 = vld [vmem:[%s2 + $0x240] sm:$0xff]
      %v666 = vld [vmem:[%s2 + $0x248] sm:$0xff]
      %v667 = vld [vmem:[%s2 + $0x250] sm:$0xff]
      %v668 = vld [vmem:[%s2 + $0x258] sm:$0xff]
      %v669 = vld [vmem:[%s2 + $0x260] sm:$0xff]
      %v670 = vld [vmem:[%s2 + $0x268] sm:$0xff]
      %v671 = vld [vmem:[%s2 + $0x270] sm:$0xff]
      %v672 = vld [vmem:[%s2 + $0x278] sm:$0xff]
      %v673 = vld [vmem:[%s2 + $0x280] sm:$0xff]
      %v674 = vld [vmem:[%s2 + $0x288] sm:$0xff]
      %v675 = vld [vmem:[%s2 + $0x290] sm:$0xff]
      %v676 = vld [vmem:[%s2 + $0x298] sm:$0xff]
      %v677 = vld [vmem:[%s2 + $0x2a0] sm:$0xff]
      %v678 = vld [vmem:[%s2 + $0x2a8] sm:$0xff]
      %v679 = vld [vmem:[%s2 + $0x2b0] sm:$0xff]
      %v680 = vld [vmem:[%s2 + $0x2b8] sm:$0xff]
      %v681 = vld [vmem:[%s2 + $0x2c0] sm:$0xff]
      %v682 = vld [vmem:[%s2 + $0x2c8] sm:$0xff]
      %v683 = vld [vmem:[%s2 + $0x2d0] sm:$0xff]
      %v684 = vld [vmem:[%s2 + $0x2d8] sm:$0xff]
      %v685 = vld [vmem:[%s2 + $0x2e0] sm:$0xff]
      %v686 = vld [vmem:[%s2 + $0x2e8] sm:$0xff]
      %v687 = vld [vmem:[%s2 + $0x2f0] sm:$0xff]
      %v688 = vld [vmem:[%s2 + $0x2f8] sm:$0xff]
      %v689 = vld [vmem:[%s2 + $0x300] sm:$0xff]
      %v690 = vld [vmem:[%s2 + $0x308] sm:$0xff]
      %v691 = vld [vmem:[%s2 + $0x310] sm:$0xff]
      %v692 = vld [vmem:[%s2 + $0x318] sm:$0xff]
      %v693 = vld [vmem:[%s2 + $0x320] sm:$0xff]
      %v694 = vld [vmem:[%s2 + $0x328] sm:$0xff]
      %v695 = vld [vmem:[%s2 + $0x330] sm:$0xff]
      %v696 = vld [vmem:[%s2 + $0x338] sm:$0xff]
      %v697 = vld [vmem:[%s2 + $0x340] sm:$0xff]
      %v698 = vld [vmem:[%s2 + $0x348] sm:$0xff]
      %v699 = vld [vmem:[%s2 + $0x350] sm:$0xff]
      %v700 = vld [vmem:[%s2 + $0x358] sm:$0xff]
      %v701 = vld [vmem:[%s2 + $0x360] sm:$0xff]
      %v702 = vld [vmem:[%s2 + $0x368] sm:$0xff]
      %v703 = vld [vmem:[%s2 + $0x370] sm:$0xff]
      %v704 = vld [vmem:[%s2 + $0x378] sm:$0xff]
      %v705 = vld [vmem:[%s2 + $0x380] sm:$0xff]
      %v706 = vld [vmem:[%s2 + $0x388] sm:$0xff]
      %v707 = vld [vmem:[%s2 + $0x390] sm:$0xff]
      %v708 = vld [vmem:[%s2 + $0x398] sm:$0xff]
      %v709 = vld [vmem:[%s2 + $0x3a0] sm:$0xff]
      %v710 = vld [vmem:[%s2 + $0x3a8] sm:$0xff]
      %v711 = vld [vmem:[%s2 + $0x3b0] sm:$0xff]
      %v712 = vld [vmem:[%s2 + $0x3b8] sm:$0xff]
      %v713 = vld [vmem:[%s2 + $0x3c0] sm:$0xff]
      %v714 = vld [vmem:[%s2 + $0x3c8] sm:$0xff]
      %v715 = vld [vmem:[%s2 + $0x3d0] sm:$0xff]
      %v716 = vld [vmem:[%s2 + $0x3d8] sm:$0xff]
      %v717 = vld [vmem:[%s2 + $0x3e0] sm:$0xff]
      %v718 = vld [vmem:[%s2 + $0x3e8] sm:$0xff]
      %v719 = vld [vmem:[%s2 + $0x3f0] sm:$0xff]
      %v720 = vld [vmem:[%s2 + $0x3f8] sm:$0xff]
      %v721 = vld [vmem:[%s2 + $0x400] sm:$0xff]
      %v722 = vld [vmem:[%s2 + $0x408] sm:$0xff]
      %v723 = vld [vmem:[%s2 + $0x410] sm:$0xff]
      %v724 = vld [vmem:[%s2 + $0x418] sm:$0xff]
      %v725 = vld [vmem:[%s2 + $0x420] sm:$0xff]
      %v726 = vld [vmem:[%s2 + $0x428] sm:$0xff]
      %v727 = vld [vmem:[%s2 + $0x430] sm:$0xff]
      %v728 = vld [vmem:[%s2 + $0x438] sm:$0xff]
      %v729 = vld [vmem:[%s2 + $0x440] sm:$0xff]
      %v730 = vld [vmem:[%s2 + $0x448] sm:$0xff]
      %v731 = vld [vmem:[%s2 + $0x450] sm:$0xff]
      %v732 = vld [vmem:[%s2 + $0x458] sm:$0xff]
      %v733 = vld [vmem:[%s2 + $0x460] sm:$0xff]
      %v734 = vld [vmem:[%s2 + $0x468] sm:$0xff]
      %v735 = vld [vmem:[%s2 + $0x470] sm:$0xff]
      %v736 = vld [vmem:[%s2 + $0x478] sm:$0xff]
      %v737 = vld [vmem:[%s2 + $0x480] sm:$0xff]
      %v738 = vld [vmem:[%s2 + $0x488] sm:$0xff]
      %v739 = vld [vmem:[%s2 + $0x490] sm:$0xff]
      %v740 = vld [vmem:[%s2 + $0x498] sm:$0xff]
      %v741 = vld [vmem:[%s2 + $0x4a0] sm:$0xff]
      %v742 = vld [vmem:[%s2 + $0x4a8] sm:$0xff]
      %v743 = vld [vmem:[%s2 + $0x4b0] sm:$0xff]
      %v744 = vld [vmem:[%s2 + $0x4b8] sm:$0xff]
      %v745 = vld [vmem:[%s2 + $0x4c0] sm:$0xff]
      %v746 = vld [vmem:[%s2 + $0x4c8] sm:$0xff]
      %v747 = vld [vmem:[%s2 + $0x4d0] sm:$0xff]
      %v748 = vld [vmem:[%s2 + $0x4d8] sm:$0xff]
      %v749 = vld [vmem:[%s2 + $0x4e0] sm:$0xff]
      %v750 = vld [vmem:[%s2 + $0x4e8] sm:$0xff]
      %v751 = vld [vmem:[%s2 + $0x4f0] sm:$0xff]
      %v752 = vld [vmem:[%s2 + $0x4f8] sm:$0xff]
      %v753 = vld [vmem:[%s2 + $0x500] sm:$0xff]
      %v754 = vld [vmem:[%s2 + $0x508] sm:$0xff]
      %v755 = vld [vmem:[%s2 + $0x510] sm:$0xff]
      %v756 = vld [vmem:[%s2 + $0x518] sm:$0xff]
      %v757 = vld [vmem:[%s2 + $0x520] sm:$0xff]
      %v758 = vld [vmem:[%s2 + $0x528] sm:$0xff]
      %v759 = vld [vmem:[%s2 + $0x530] sm:$0xff]
      %v760 = vld [vmem:[%s2 + $0x538] sm:$0xff]
      %v761 = vld [vmem:[%s2 + $0x540] sm:$0xff]
      %v762 = vld [vmem:[%s2 + $0x548] sm:$0xff]
      %v763 = vld [vmem:[%s2 + $0x550] sm:$0xff]
      %v764 = vld [vmem:[%s2 + $0x558] sm:$0xff]
      %v765 = vld [vmem:[%s2 + $0x560] sm:$0xff]
      %v766 = vld [vmem:[%s2 + $0x568] sm:$0xff]
      %v767 = vld [vmem:[%s2 + $0x570] sm:$0xff]
      %v768 = vld [vmem:[%s2 + $0x578] sm:$0xff]
      %v769 = vld [vmem:[%s2 + $0x580] sm:$0xff]
      %v770 = vld [vmem:[%s2 + $0x588] sm:$0xff]
      %v771 = vld [vmem:[%s2 + $0x590] sm:$0xff]
      %v772 = vld [vmem:[%s2 + $0x598] sm:$0xff]
      %v773 = vld [vmem:[%s2 + $0x5a0] sm:$0xff]
      %v774 = vld [vmem:[%s2 + $0x5a8] sm:$0xff]
      %v775 = vld [vmem:[%s2 + $0x5b0] sm:$0xff]
      %v776 = vld [vmem:[%s2 + $0x5b8] sm:$0xff]
      %v777 = vld [vmem:[%s2 + $0x5c0] sm:$0xff]
      %v778 = vld [vmem:[%s2 + $0x5c8] sm:$0xff]
      %v779 = vld [vmem:[%s2 + $0x5d0] sm:$0xff]
      %v780 = vld [vmem:[%s2 + $0x5d8] sm:$0xff]
      %v781 = vld [vmem:[%s2 + $0x5e0] sm:$0xff]
      %v782 = vld [vmem:[%s2 + $0x5e8] sm:$0xff]
      %v783 = vld [vmem:[%s2 + $0x5f0] sm:$0xff]
      %v784 = vld [vmem:[%s2 + $0x5f8] sm:$0xff]
      %v785 = vld [vmem:[%s2 + $0x600] sm:$0xff]
      %v786 = vld [vmem:[%s2 + $0x608] sm:$0xff]
      %v787 = vld [vmem:[%s2 + $0x610] sm:$0xff]
      %v788 = vld [vmem:[%s2 + $0x618] sm:$0xff]
      %v789 = vld [vmem:[%s2 + $0x620] sm:$0xff]
      %v790 = vld [vmem:[%s2 + $0x628] sm:$0xff]
      %v791 = vld [vmem:[%s2 + $0x630] sm:$0xff]
      %v792 = vld [vmem:[%s2 + $0x638] sm:$0xff]
      %v793 = vld [vmem:[%s2 + $0x640] sm:$0xff]
      %v794 = vld [vmem:[%s2 + $0x648] sm:$0xff]
      %v795 = vld [vmem:[%s2 + $0x650] sm:$0xff]
      %v796 = vld [vmem:[%s2 + $0x658] sm:$0xff]
      %v797 = vld [vmem:[%s2 + $0x660] sm:$0xff]
      %v798 = vld [vmem:[%s2 + $0x668] sm:$0xff]
      %v799 = vld [vmem:[%s2 + $0x670] sm:$0xff]
      %v800 = vld [vmem:[%s2 + $0x678] sm:$0xff]
      %v1009 = vunpack.c.l.b16 %v593
      %v1010 = vunpack.c.h.b16 %v593
      %v1011 = vunpack.c.l.b16 %v594
      %v1012 = vunpack.c.h.b16 %v594
      %v1013 = vunpack.c.l.b16 %v595
      %v1014 = vunpack.c.h.b16 %v595
      %v1015 = vunpack.c.l.b16 %v596
      %v1016 = vunpack.c.h.b16 %v596
      %v1017 = vunpack.c.l.b16 %v597
      %v1018 = vunpack.c.h.b16 %v597
      %v1019 = vunpack.c.l.b16 %v598
      %v1020 = vunpack.c.h.b16 %v598
      %v1021 = vunpack.c.l.b16 %v599
      %v1022 = vunpack.c.h.b16 %v599
      %v1023 = vunpack.c.l.b16 %v600
      %v1024 = vunpack.c.h.b16 %v600
      %v1025 = vunpack.c.l.b16 %v601
      %v1026 = vunpack.c.h.b16 %v601
      %v1027 = vunpack.c.l.b16 %v602
      %v1028 = vunpack.c.h.b16 %v602
      %v1029 = vunpack.c.l.b16 %v603
      %v1030 = vunpack.c.h.b16 %v603
      %v1031 = vunpack.c.l.b16 %v604
      %v1032 = vunpack.c.h.b16 %v604
      %v1033 = vunpack.c.l.b16 %v605
      %v1034 = vunpack.c.h.b16 %v605
      %v1035 = vunpack.c.l.b16 %v606
      %v1036 = vunpack.c.h.b16 %v606
      %v1037 = vunpack.c.l.b16 %v607
      %v1038 = vunpack.c.h.b16 %v607
      %v1039 = vunpack.c.l.b16 %v608
      %v1040 = vunpack.c.h.b16 %v608
      %v1041 = vunpack.c.l.b16 %v609
      %v1042 = vunpack.c.h.b16 %v609
      %v1043 = vunpack.c.l.b16 %v610
      %v1044 = vunpack.c.h.b16 %v610
      %v1045 = vunpack.c.l.b16 %v611
      %v1046 = vunpack.c.h.b16 %v611
      %v1047 = vunpack.c.l.b16 %v612
      %v1048 = vunpack.c.h.b16 %v612
      %v1049 = vunpack.c.l.b16 %v613
      %v1050 = vunpack.c.h.b16 %v613
      %v1051 = vunpack.c.l.b16 %v614
      %v1052 = vunpack.c.h.b16 %v614
      %v1053 = vunpack.c.l.b16 %v615
      %v1054 = vunpack.c.h.b16 %v615
      %v1055 = vunpack.c.l.b16 %v616
      %v1056 = vunpack.c.h.b16 %v616
      %v1057 = vunpack.c.l.b16 %v617
      %v1058 = vunpack.c.h.b16 %v617
      %v1059 = vunpack.c.l.b16 %v618
      %v1060 = vunpack.c.h.b16 %v618
      %v1061 = vunpack.c.l.b16 %v619
      %v1062 = vunpack.c.h.b16 %v619
      %v1063 = vunpack.c.l.b16 %v620
      %v1064 = vunpack.c.h.b16 %v620
      %v1065 = vunpack.c.l.b16 %v621
      %v1066 = vunpack.c.h.b16 %v621
      %v1067 = vunpack.c.l.b16 %v622
      %v1068 = vunpack.c.h.b16 %v622
      %v1069 = vunpack.c.l.b16 %v623
      %v1070 = vunpack.c.h.b16 %v623
      %v1071 = vunpack.c.l.b16 %v624
      %v1072 = vunpack.c.h.b16 %v624
      %v1073 = vunpack.c.l.b16 %v625
      %v1074 = vunpack.c.h.b16 %v625
      %v1075 = vunpack.c.l.b16 %v626
      %v1076 = vunpack.c.h.b16 %v626
      %v1077 = vunpack.c.l.b16 %v627
      %v1078 = vunpack.c.h.b16 %v627
      %v1079 = vunpack.c.l.b16 %v628
      %v1080 = vunpack.c.h.b16 %v628
      %v1081 = vunpack.c.l.b16 %v629
      %v1082 = vunpack.c.h.b16 %v629
      %v1083 = vunpack.c.l.b16 %v630
      %v1084 = vunpack.c.h.b16 %v630
      %v1085 = vunpack.c.l.b16 %v631
      %v1086 = vunpack.c.h.b16 %v631
      %v1087 = vunpack.c.l.b16 %v632
      %v1088 = vunpack.c.h.b16 %v632
      %v1089 = vunpack.c.l.b16 %v633
      %v1090 = vunpack.c.h.b16 %v633
      %v1091 = vunpack.c.l.b16 %v634
      %v1092 = vunpack.c.h.b16 %v634
      %v1093 = vunpack.c.l.b16 %v635
      %v1094 = vunpack.c.h.b16 %v635
      %v1095 = vunpack.c.l.b16 %v636
      %v1096 = vunpack.c.h.b16 %v636
      %v1097 = vunpack.c.l.b16 %v637
      %v1098 = vunpack.c.h.b16 %v637
      %v1099 = vunpack.c.l.b16 %v638
      %v1100 = vunpack.c.h.b16 %v638
      %v1101 = vunpack.c.l.b16 %v639
      %v1102 = vunpack.c.h.b16 %v639
      %v1103 = vunpack.c.l.b16 %v640
      %v1104 = vunpack.c.h.b16 %v640
      %v1105 = vunpack.c.l.b16 %v641
      %v1106 = vunpack.c.h.b16 %v641
      %v1107 = vunpack.c.l.b16 %v642
      %v1108 = vunpack.c.h.b16 %v642
      %v1109 = vunpack.c.l.b16 %v643
      %v1110 = vunpack.c.h.b16 %v643
      %v1111 = vunpack.c.l.b16 %v644
      %v1112 = vunpack.c.h.b16 %v644
      %v1113 = vunpack.c.l.b16 %v645
      %v1114 = vunpack.c.h.b16 %v645
      %v1115 = vunpack.c.l.b16 %v646
      %v1116 = vunpack.c.h.b16 %v646
      %v1117 = vunpack.c.l.b16 %v647
      %v1118 = vunpack.c.h.b16 %v647
      %v1119 = vunpack.c.l.b16 %v648
      %v1120 = vunpack.c.h.b16 %v648
      %v1121 = vunpack.c.l.b16 %v649
      %v1122 = vunpack.c.h.b16 %v649
      %v1123 = vunpack.c.l.b16 %v650
      %v1124 = vunpack.c.h.b16 %v650
      %v1125 = vunpack.c.l.b16 %v651
      %v1126 = vunpack.c.h.b16 %v651
      %v1127 = vunpack.c.l.b16 %v652
      %v1128 = vunpack.c.h.b16 %v652
      %v1129 = vunpack.c.l.b16 %v653
      %v1130 = vunpack.c.h.b16 %v653
      %v1131 = vunpack.c.l.b16 %v654
      %v1132 = vunpack.c.h.b16 %v654
      %v1133 = vunpack.c.l.b16 %v655
      %v1134 = vunpack.c.h.b16 %v655
      %v1135 = vunpack.c.l.b16 %v656
      %v1136 = vunpack.c.h.b16 %v656
      %v1137 = vunpack.c.l.b16 %v657
      %v1138 = vunpack.c.h.b16 %v657
      %v1139 = vunpack.c.l.b16 %v658
      %v1140 = vunpack.c.h.b16 %v658
      %v1141 = vunpack.c.l.b16 %v659
      %v1142 = vunpack.c.h.b16 %v659
      %v1143 = vunpack.c.l.b16 %v660
      %v1144 = vunpack.c.h.b16 %v660
      %v1145 = vunpack.c.l.b16 %v661
      %v1146 = vunpack.c.h.b16 %v661
      %v1147 = vunpack.c.l.b16 %v662
      %v1148 = vunpack.c.h.b16 %v662
      %v1149 = vunpack.c.l.b16 %v663
      %v1150 = vunpack.c.h.b16 %v663
      %v1151 = vunpack.c.l.b16 %v664
      %v1152 = vunpack.c.h.b16 %v664
      %v1153 = vunpack.c.l.b16 %v665
      %v1154 = vunpack.c.h.b16 %v665
      %v1155 = vunpack.c.l.b16 %v666
      %v1156 = vunpack.c.h.b16 %v666
      %v1157 = vunpack.c.l.b16 %v667
      %v1158 = vunpack.c.h.b16 %v667
      %v1159 = vunpack.c.l.b16 %v668
      %v1160 = vunpack.c.h.b16 %v668
      %v1161 = vunpack.c.l.b16 %v669
      %v1162 = vunpack.c.h.b16 %v669
      %v1163 = vunpack.c.l.b16 %v670
      %v1164 = vunpack.c.h.b16 %v670
      %v1165 = vunpack.c.l.b16 %v671
      %v1166 = vunpack.c.h.b16 %v671
      %v1167 = vunpack.c.l.b16 %v672
      %v1168 = vunpack.c.h.b16 %v672
      %v1169 = vunpack.c.l.b16 %v673
      %v1170 = vunpack.c.h.b16 %v673
      %v1171 = vunpack.c.l.b16 %v674
      %v1172 = vunpack.c.h.b16 %v674
      %v1173 = vunpack.c.l.b16 %v675
      %v1174 = vunpack.c.h.b16 %v675
      %v1175 = vunpack.c.l.b16 %v676
      %v1176 = vunpack.c.h.b16 %v676
      %v1177 = vunpack.c.l.b16 %v677
      %v1178 = vunpack.c.h.b16 %v677
      %v1179 = vunpack.c.l.b16 %v678
      %v1180 = vunpack.c.h.b16 %v678
      %v1181 = vunpack.c.l.b16 %v679
      %v1182 = vunpack.c.h.b16 %v679
      %v1183 = vunpack.c.l.b16 %v680
      %v1184 = vunpack.c.h.b16 %v680
      %v1185 = vunpack.c.l.b16 %v681
      %v1186 = vunpack.c.h.b16 %v681
      %v1187 = vunpack.c.l.b16 %v682
      %v1188 = vunpack.c.h.b16 %v682
      %v1189 = vunpack.c.l.b16 %v683
      %v1190 = vunpack.c.h.b16 %v683
      %v1191 = vunpack.c.l.b16 %v684
      %v1192 = vunpack.c.h.b16 %v684
      %v1193 = vunpack.c.l.b16 %v685
      %v1194 = vunpack.c.h.b16 %v685
      %v1195 = vunpack.c.l.b16 %v686
      %v1196 = vunpack.c.h.b16 %v686
      %v1197 = vunpack.c.l.b16 %v687
      %v1198 = vunpack.c.h.b16 %v687
      %v1199 = vunpack.c.l.b16 %v688
      %v1200 = vunpack.c.h.b16 %v688
      %v1201 = vunpack.c.l.b16 %v689
      %v1202 = vunpack.c.h.b16 %v689
      %v1203 = vunpack.c.l.b16 %v690
      %v1204 = vunpack.c.h.b16 %v690
      %v1205 = vunpack.c.l.b16 %v691
      %v1206 = vunpack.c.h.b16 %v691
      %v1207 = vunpack.c.l.b16 %v692
      %v1208 = vunpack.c.h.b16 %v692
      %v1209 = vunpack.c.l.b16 %v693
      %v1210 = vunpack.c.h.b16 %v693
      %v1211 = vunpack.c.l.b16 %v694
      %v1212 = vunpack.c.h.b16 %v694
      %v1213 = vunpack.c.l.b16 %v695
      %v1214 = vunpack.c.h.b16 %v695
      %v1215 = vunpack.c.l.b16 %v696
      %v1216 = vunpack.c.h.b16 %v696
      %v1217 = vunpack.c.l.b16 %v697
      %v1218 = vunpack.c.h.b16 %v697
      %v1219 = vunpack.c.l.b16 %v698
      %v1220 = vunpack.c.h.b16 %v698
      %v1221 = vunpack.c.l.b16 %v699
      %v1222 = vunpack.c.h.b16 %v699
      %v1223 = vunpack.c.l.b16 %v700
      %v1224 = vunpack.c.h.b16 %v700
      %v1225 = vunpack.c.l.b16 %v701
      %v1226 = vunpack.c.h.b16 %v701
      %v1227 = vunpack.c.l.b16 %v702
      %v1228 = vunpack.c.h.b16 %v702
      %v1229 = vunpack.c.l.b16 %v703
      %v1230 = vunpack.c.h.b16 %v703
      %v1231 = vunpack.c.l.b16 %v704
      %v1232 = vunpack.c.h.b16 %v704
      %v1233 = vunpack.c.l.b16 %v705
      %v1234 = vunpack.c.h.b16 %v705
      %v1235 = vunpack.c.l.b16 %v706
      %v1236 = vunpack.c.h.b16 %v706
      %v1237 = vunpack.c.l.b16 %v707
      %v1238 = vunpack.c.h.b16 %v707
      %v1239 = vunpack.c.l.b16 %v708
      %v1240 = vunpack.c.h.b16 %v708
      %v1241 = vunpack.c.l.b16 %v709
      %v1242 = vunpack.c.h.b16 %v709
      %v1243 = vunpack.c.l.b16 %v710
      %v1244 = vunpack.c.h.b16 %v710
      %v1245 = vunpack.c.l.b16 %v711
      %v1246 = vunpack.c.h.b16 %v711
      %v1247 = vunpack.c.l.b16 %v712
      %v1248 = vunpack.c.h.b16 %v712
      %v1249 = vunpack.c.l.b16 %v713
      %v1250 = vunpack.c.h.b16 %v713
      %v1251 = vunpack.c.l.b16 %v714
      %v1252 = vunpack.c.h.b16 %v714
      %v1253 = vunpack.c.l.b16 %v715
      %v1254 = vunpack.c.h.b16 %v715
      %v1255 = vunpack.c.l.b16 %v716
      %v1256 = vunpack.c.h.b16 %v716
      %v1257 = vunpack.c.l.b16 %v717
      %v1258 = vunpack.c.h.b16 %v717
      %v1259 = vunpack.c.l.b16 %v718
      %v1260 = vunpack.c.h.b16 %v718
      %v1261 = vunpack.c.l.b16 %v719
      %v1262 = vunpack.c.h.b16 %v719
      %v1263 = vunpack.c.l.b16 %v720
      %v1264 = vunpack.c.h.b16 %v720
      %v1265 = vunpack.c.l.b16 %v721
      %v1266 = vunpack.c.h.b16 %v721
      %v1267 = vunpack.c.l.b16 %v722
      %v1268 = vunpack.c.h.b16 %v722
      %v1269 = vunpack.c.l.b16 %v723
      %v1270 = vunpack.c.h.b16 %v723
      %v1271 = vunpack.c.l.b16 %v724
      %v1272 = vunpack.c.h.b16 %v724
      %v1273 = vunpack.c.l.b16 %v725
      %v1274 = vunpack.c.h.b16 %v725
      %v1275 = vunpack.c.l.b16 %v726
      %v1276 = vunpack.c.h.b16 %v726
      %v1277 = vunpack.c.l.b16 %v727
      %v1278 = vunpack.c.h.b16 %v727
      %v1279 = vunpack.c.l.b16 %v728
      %v1280 = vunpack.c.h.b16 %v728
      %v1281 = vunpack.c.l.b16 %v729
      %v1282 = vunpack.c.h.b16 %v729
      %v1283 = vunpack.c.l.b16 %v730
      %v1284 = vunpack.c.h.b16 %v730
      %v1285 = vunpack.c.l.b16 %v731
      %v1286 = vunpack.c.h.b16 %v731
      %v1287 = vunpack.c.l.b16 %v732
      %v1288 = vunpack.c.h.b16 %v732
      %v1289 = vunpack.c.l.b16 %v733
      %v1290 = vunpack.c.h.b16 %v733
      %v1291 = vunpack.c.l.b16 %v734
      %v1292 = vunpack.c.h.b16 %v734
      %v1293 = vunpack.c.l.b16 %v735
      %v1294 = vunpack.c.h.b16 %v735
      %v1295 = vunpack.c.l.b16 %v736
      %v1296 = vunpack.c.h.b16 %v736
      %v1297 = vunpack.c.l.b16 %v737
      %v1298 = vunpack.c.h.b16 %v737
      %v1299 = vunpack.c.l.b16 %v738
      %v1300 = vunpack.c.h.b16 %v738
      %v1301 = vunpack.c.l.b16 %v739
      %v1302 = vunpack.c.h.b16 %v739
      %v1303 = vunpack.c.l.b16 %v740
      %v1304 = vunpack.c.h.b16 %v740
      %v1305 = vunpack.c.l.b16 %v741
      %v1306 = vunpack.c.h.b16 %v741
      %v1307 = vunpack.c.l.b16 %v742
      %v1308 = vunpack.c.h.b16 %v742
      %v1309 = vunpack.c.l.b16 %v743
      %v1310 = vunpack.c.h.b16 %v743
      %v1311 = vunpack.c.l.b16 %v744
      %v1312 = vunpack.c.h.b16 %v744
      %v1313 = vunpack.c.l.b16 %v745
      %v1314 = vunpack.c.h.b16 %v745
      %v1315 = vunpack.c.l.b16 %v746
      %v1316 = vunpack.c.h.b16 %v746
      %v1317 = vunpack.c.l.b16 %v747
      %v1318 = vunpack.c.h.b16 %v747
      %v1319 = vunpack.c.l.b16 %v748
      %v1320 = vunpack.c.h.b16 %v748
      %v1321 = vunpack.c.l.b16 %v749
      %v1322 = vunpack.c.h.b16 %v749
      %v1323 = vunpack.c.l.b16 %v750
      %v1324 = vunpack.c.h.b16 %v750
      %v1325 = vunpack.c.l.b16 %v751
      %v1326 = vunpack.c.h.b16 %v751
      %v1327 = vunpack.c.l.b16 %v752
      %v1328 = vunpack.c.h.b16 %v752
      %v1329 = vunpack.c.l.b16 %v753
      %v1330 = vunpack.c.h.b16 %v753
      %v1331 = vunpack.c.l.b16 %v754
      %v1332 = vunpack.c.h.b16 %v754
      %v1333 = vunpack.c.l.b16 %v755
      %v1334 = vunpack.c.h.b16 %v755
      %v1335 = vunpack.c.l.b16 %v756
      %v1336 = vunpack.c.h.b16 %v756
      %v1337 = vunpack.c.l.b16 %v757
      %v1338 = vunpack.c.h.b16 %v757
      %v1339 = vunpack.c.l.b16 %v758
      %v1340 = vunpack.c.h.b16 %v758
      %v1341 = vunpack.c.l.b16 %v759
      %v1342 = vunpack.c.h.b16 %v759
      %v1343 = vunpack.c.l.b16 %v760
      %v1344 = vunpack.c.h.b16 %v760
      %v1345 = vunpack.c.l.b16 %v761
      %v1346 = vunpack.c.h.b16 %v761
      %v1347 = vunpack.c.l.b16 %v762
      %v1348 = vunpack.c.h.b16 %v762
      %v1349 = vunpack.c.l.b16 %v763
      %v1350 = vunpack.c.h.b16 %v763
      %v1351 = vunpack.c.l.b16 %v764
      %v1352 = vunpack.c.h.b16 %v764
      %v1353 = vunpack.c.l.b16 %v765
      %v1354 = vunpack.c.h.b16 %v765
      %v1355 = vunpack.c.l.b16 %v766
      %v1356 = vunpack.c.h.b16 %v766
      %v1357 = vunpack.c.l.b16 %v767
      %v1358 = vunpack.c.h.b16 %v767
      %v1359 = vunpack.c.l.b16 %v768
      %v1360 = vunpack.c.h.b16 %v768
      %v1361 = vunpack.c.l.b16 %v769
      %v1362 = vunpack.c.h.b16 %v769
      %v1363 = vunpack.c.l.b16 %v770
      %v1364 = vunpack.c.h.b16 %v770
      %v1365 = vunpack.c.l.b16 %v771
      %v1366 = vunpack.c.h.b16 %v771
      %v1367 = vunpack.c.l.b16 %v772
      %v1368 = vunpack.c.h.b16 %v772
      %v1369 = vunpack.c.l.b16 %v773
      %v1370 = vunpack.c.h.b16 %v773
      %v1371 = vunpack.c.l.b16 %v774
      %v1372 = vunpack.c.h.b16 %v774
      %v1373 = vunpack.c.l.b16 %v775
      %v1374 = vunpack.c.h.b16 %v775
      %v1375 = vunpack.c.l.b16 %v776
      %v1376 = vunpack.c.h.b16 %v776
      %v1377 = vunpack.c.l.b16 %v777
      %v1378 = vunpack.c.h.b16 %v777
      %v1379 = vunpack.c.l.b16 %v778
      %v1380 = vunpack.c.h.b16 %v778
      %v1381 = vunpack.c.l.b16 %v779
      %v1382 = vunpack.c.h.b16 %v779
      %v1383 = vunpack.c.l.b16 %v780
      %v1384 = vunpack.c.h.b16 %v780
      %v1385 = vunpack.c.l.b16 %v781
      %v1386 = vunpack.c.h.b16 %v781
      %v1387 = vunpack.c.l.b16 %v782
      %v1388 = vunpack.c.h.b16 %v782
      %v1389 = vunpack.c.l.b16 %v783
      %v1390 = vunpack.c.h.b16 %v783
      %v1391 = vunpack.c.l.b16 %v784
      %v1392 = vunpack.c.h.b16 %v784
      %v1393 = vunpack.c.l.b16 %v785
      %v1394 = vunpack.c.h.b16 %v785
      %v1395 = vunpack.c.l.b16 %v786
      %v1396 = vunpack.c.h.b16 %v786
      %v1397 = vunpack.c.l.b16 %v787
      %v1398 = vunpack.c.h.b16 %v787
      %v1399 = vunpack.c.l.b16 %v788
      %v1400 = vunpack.c.h.b16 %v788
      %v1401 = vunpack.c.l.b16 %v789
      %v1402 = vunpack.c.h.b16 %v789
      %v1403 = vunpack.c.l.b16 %v790
      %v1404 = vunpack.c.h.b16 %v790
      %v1405 = vunpack.c.l.b16 %v791
      %v1406 = vunpack.c.h.b16 %v791
      %v1407 = vunpack.c.l.b16 %v792
      %v1408 = vunpack.c.h.b16 %v792
      %v1409 = vunpack.c.l.b16 %v793
      %v1410 = vunpack.c.h.b16 %v793
      %v1411 = vunpack.c.l.b16 %v794
      %v1412 = vunpack.c.h.b16 %v794
      %v1413 = vunpack.c.l.b16 %v795
      %v1414 = vunpack.c.h.b16 %v795
      %v1415 = vunpack.c.l.b16 %v796
      %v1416 = vunpack.c.h.b16 %v796
      %v1417 = vunpack.c.l.b16 %v797
      %v1418 = vunpack.c.h.b16 %v797
      %v1419 = vunpack.c.l.b16 %v798
      %v1420 = vunpack.c.h.b16 %v798
      %v1421 = vunpack.c.l.b16 %v799
      %v1422 = vunpack.c.h.b16 %v799
      %v1423 = vunpack.c.l.b16 %v800
      %v1424 = vunpack.c.h.b16 %v800
      %v1425 = vpack.c.b16 %v1013, %v1009
      %v1426 = vpack.c.b16 %v1014, %v1010
      %v1427 = vpack.c.b16 %v1015, %v1011
      %v1428 = vpack.c.b16 %v1016, %v1012
      %v1429 = vpack.c.b16 %v1021, %v1017
      %v1430 = vpack.c.b16 %v1022, %v1018
      %v1431 = vpack.c.b16 %v1023, %v1019
      %v1432 = vpack.c.b16 %v1024, %v1020
      %v1433 = vpack.c.b16 %v1029, %v1025
      %v1434 = vpack.c.b16 %v1030, %v1026
      %v1435 = vpack.c.b16 %v1031, %v1027
      %v1436 = vpack.c.b16 %v1032, %v1028
      %v1437 = vpack.c.b16 %v1037, %v1033
      %v1438 = vpack.c.b16 %v1038, %v1034
      %v1439 = vpack.c.b16 %v1039, %v1035
      %v1440 = vpack.c.b16 %v1040, %v1036
      %v1441 = vpack.c.b16 %v1045, %v1041
      %v1442 = vpack.c.b16 %v1046, %v1042
      %v1443 = vpack.c.b16 %v1047, %v1043
      %v1444 = vpack.c.b16 %v1048, %v1044
      %v1445 = vpack.c.b16 %v1053, %v1049
      %v1446 = vpack.c.b16 %v1054, %v1050
      %v1447 = vpack.c.b16 %v1055, %v1051
      %v1448 = vpack.c.b16 %v1056, %v1052
      %v1449 = vpack.c.b16 %v1061, %v1057
      %v1450 = vpack.c.b16 %v1062, %v1058
      %v1451 = vpack.c.b16 %v1063, %v1059
      %v1452 = vpack.c.b16 %v1064, %v1060
      %v1453 = vpack.c.b16 %v1069, %v1065
      %v1454 = vpack.c.b16 %v1070, %v1066
      %v1455 = vpack.c.b16 %v1071, %v1067
      %v1456 = vpack.c.b16 %v1072, %v1068
      %v1457 = vpack.c.b16 %v1077, %v1073
      %v1458 = vpack.c.b16 %v1078, %v1074
      %v1459 = vpack.c.b16 %v1079, %v1075
      %v1460 = vpack.c.b16 %v1080, %v1076
      %v1461 = vpack.c.b16 %v1085, %v1081
      %v1462 = vpack.c.b16 %v1086, %v1082
      %v1463 = vpack.c.b16 %v1087, %v1083
      %v1464 = vpack.c.b16 %v1088, %v1084
      %v1465 = vpack.c.b16 %v1093, %v1089
      %v1466 = vpack.c.b16 %v1094, %v1090
      %v1467 = vpack.c.b16 %v1095, %v1091
      %v1468 = vpack.c.b16 %v1096, %v1092
      %v1469 = vpack.c.b16 %v1101, %v1097
      %v1470 = vpack.c.b16 %v1102, %v1098
      %v1471 = vpack.c.b16 %v1103, %v1099
      %v1472 = vpack.c.b16 %v1104, %v1100
      %v1473 = vpack.c.b16 %v1109, %v1105
      %v1474 = vpack.c.b16 %v1110, %v1106
      %v1475 = vpack.c.b16 %v1111, %v1107
      %v1476 = vpack.c.b16 %v1112, %v1108
      %v1477 = vpack.c.b16 %v1117, %v1113
      %v1478 = vpack.c.b16 %v1118, %v1114
      %v1479 = vpack.c.b16 %v1119, %v1115
      %v1480 = vpack.c.b16 %v1120, %v1116
      %v1481 = vpack.c.b16 %v1125, %v1121
      %v1482 = vpack.c.b16 %v1126, %v1122
      %v1483 = vpack.c.b16 %v1127, %v1123
      %v1484 = vpack.c.b16 %v1128, %v1124
      %v1485 = vpack.c.b16 %v1133, %v1129
      %v1486 = vpack.c.b16 %v1134, %v1130
      %v1487 = vpack.c.b16 %v1135, %v1131
      %v1488 = vpack.c.b16 %v1136, %v1132
      %v1489 = vpack.c.b16 %v1141, %v1137
      %v1490 = vpack.c.b16 %v1142, %v1138
      %v1491 = vpack.c.b16 %v1143, %v1139
      %v1492 = vpack.c.b16 %v1144, %v1140
      %v1493 = vpack.c.b16 %v1149, %v1145
      %v1494 = vpack.c.b16 %v1150, %v1146
      %v1495 = vpack.c.b16 %v1151, %v1147
      %v1496 = vpack.c.b16 %v1152, %v1148
      %v1497 = vpack.c.b16 %v1157, %v1153
      %v1498 = vpack.c.b16 %v1158, %v1154
      %v1499 = vpack.c.b16 %v1159, %v1155
      %v1500 = vpack.c.b16 %v1160, %v1156
      %v1501 = vpack.c.b16 %v1165, %v1161
      %v1502 = vpack.c.b16 %v1166, %v1162
      %v1503 = vpack.c.b16 %v1167, %v1163
      %v1504 = vpack.c.b16 %v1168, %v1164
      %v1505 = vpack.c.b16 %v1173, %v1169
      %v1506 = vpack.c.b16 %v1174, %v1170
      %v1507 = vpack.c.b16 %v1175, %v1171
      %v1508 = vpack.c.b16 %v1176, %v1172
      %v1509 = vpack.c.b16 %v1181, %v1177
      %v1510 = vpack.c.b16 %v1182, %v1178
      %v1511 = vpack.c.b16 %v1183, %v1179
      %v1512 = vpack.c.b16 %v1184, %v1180
      %v1513 = vpack.c.b16 %v1189, %v1185
      %v1514 = vpack.c.b16 %v1190, %v1186
      %v1515 = vpack.c.b16 %v1191, %v1187
      %v1516 = vpack.c.b16 %v1192, %v1188
      %v1517 = vpack.c.b16 %v1197, %v1193
      %v1518 = vpack.c.b16 %v1198, %v1194
      %v1519 = vpack.c.b16 %v1199, %v1195
      %v1520 = vpack.c.b16 %v1200, %v1196
      %v1521 = vpack.c.b16 %v1205, %v1201
      %v1522 = vpack.c.b16 %v1206, %v1202
      %v1523 = vpack.c.b16 %v1207, %v1203
      %v1524 = vpack.c.b16 %v1208, %v1204
      %v1525 = vpack.c.b16 %v1213, %v1209
      %v1526 = vpack.c.b16 %v1214, %v1210
      %v1527 = vpack.c.b16 %v1215, %v1211
      %v1528 = vpack.c.b16 %v1216, %v1212
      %v1529 = vpack.c.b16 %v1221, %v1217
      %v1530 = vpack.c.b16 %v1222, %v1218
      %v1531 = vpack.c.b16 %v1223, %v1219
      %v1532 = vpack.c.b16 %v1224, %v1220
      %v1533 = vpack.c.b16 %v1229, %v1225
      %v1534 = vpack.c.b16 %v1230, %v1226
      %v1535 = vpack.c.b16 %v1231, %v1227
      %v1536 = vpack.c.b16 %v1232, %v1228
      %v1537 = vpack.c.b16 %v1237, %v1233
      %v1538 = vpack.c.b16 %v1238, %v1234
      %v1539 = vpack.c.b16 %v1239, %v1235
      %v1540 = vpack.c.b16 %v1240, %v1236
      %v1541 = vpack.c.b16 %v1245, %v1241
      %v1542 = vpack.c.b16 %v1246, %v1242
      %v1543 = vpack.c.b16 %v1247, %v1243
      %v1544 = vpack.c.b16 %v1248, %v1244
      %v1545 = vpack.c.b16 %v1253, %v1249
      %v1546 = vpack.c.b16 %v1254, %v1250
      %v1547 = vpack.c.b16 %v1255, %v1251
      %v1548 = vpack.c.b16 %v1256, %v1252
      %v1549 = vpack.c.b16 %v1261, %v1257
      %v1550 = vpack.c.b16 %v1262, %v1258
      %v1551 = vpack.c.b16 %v1263, %v1259
      %v1552 = vpack.c.b16 %v1264, %v1260
      %v1553 = vpack.c.b16 %v1269, %v1265
      %v1554 = vpack.c.b16 %v1270, %v1266
      %v1555 = vpack.c.b16 %v1271, %v1267
      %v1556 = vpack.c.b16 %v1272, %v1268
      %v1557 = vpack.c.b16 %v1277, %v1273
      %v1558 = vpack.c.b16 %v1278, %v1274
      %v1559 = vpack.c.b16 %v1279, %v1275
      %v1560 = vpack.c.b16 %v1280, %v1276
      %v1561 = vpack.c.b16 %v1285, %v1281
      %v1562 = vpack.c.b16 %v1286, %v1282
      %v1563 = vpack.c.b16 %v1287, %v1283
      %v1564 = vpack.c.b16 %v1288, %v1284
      %v1565 = vpack.c.b16 %v1293, %v1289
      %v1566 = vpack.c.b16 %v1294, %v1290
      %v1567 = vpack.c.b16 %v1295, %v1291
      %v1568 = vpack.c.b16 %v1296, %v1292
      %v1569 = vpack.c.b16 %v1301, %v1297
      %v1570 = vpack.c.b16 %v1302, %v1298
      %v1571 = vpack.c.b16 %v1303, %v1299
      %v1572 = vpack.c.b16 %v1304, %v1300
      %v1573 = vpack.c.b16 %v1309, %v1305
      %v1574 = vpack.c.b16 %v1310, %v1306
      %v1575 = vpack.c.b16 %v1311, %v1307
      %v1576 = vpack.c.b16 %v1312, %v1308
      %v1577 = vpack.c.b16 %v1317, %v1313
      %v1578 = vpack.c.b16 %v1318, %v1314
      %v1579 = vpack.c.b16 %v1319, %v1315
      %v1580 = vpack.c.b16 %v1320, %v1316
      %v1581 = vpack.c.b16 %v1325, %v1321
      %v1582 = vpack.c.b16 %v1326, %v1322
      %v1583 = vpack.c.b16 %v1327, %v1323
      %v1584 = vpack.c.b16 %v1328, %v1324
      %v1585 = vpack.c.b16 %v1333, %v1329
      %v1586 = vpack.c.b16 %v1334, %v1330
      %v1587 = vpack.c.b16 %v1335, %v1331
      %v1588 = vpack.c.b16 %v1336, %v1332
      %v1589 = vpack.c.b16 %v1341, %v1337
      %v1590 = vpack.c.b16 %v1342, %v1338
      %v1591 = vpack.c.b16 %v1343, %v1339
      %v1592 = vpack.c.b16 %v1344, %v1340
      %v1593 = vpack.c.b16 %v1349, %v1345
      %v1594 = vpack.c.b16 %v1350, %v1346
      %v1595 = vpack.c.b16 %v1351, %v1347
      %v1596 = vpack.c.b16 %v1352, %v1348
      %v1597 = vpack.c.b16 %v1357, %v1353
      %v1598 = vpack.c.b16 %v1358, %v1354
      %v1599 = vpack.c.b16 %v1359, %v1355
      %v1600 = vpack.c.b16 %v1360, %v1356
      %v1601 = vpack.c.b16 %v1365, %v1361
      %v1602 = vpack.c.b16 %v1366, %v1362
      %v1603 = vpack.c.b16 %v1367, %v1363
      %v1604 = vpack.c.b16 %v1368, %v1364
      %v1605 = vpack.c.b16 %v1373, %v1369
      %v1606 = vpack.c.b16 %v1374, %v1370
      %v1607 = vpack.c.b16 %v1375, %v1371
      %v1608 = vpack.c.b16 %v1376, %v1372
      %v1609 = vpack.c.b16 %v1381, %v1377
      %v1610 = vpack.c.b16 %v1382, %v1378
      %v1611 = vpack.c.b16 %v1383, %v1379
      %v1612 = vpack.c.b16 %v1384, %v1380
      %v1613 = vpack.c.b16 %v1389, %v1385
      %v1614 = vpack.c.b16 %v1390, %v1386
      %v1615 = vpack.c.b16 %v1391, %v1387
      %v1616 = vpack.c.b16 %v1392, %v1388
      %v1617 = vpack.c.b16 %v1397, %v1393
      %v1618 = vpack.c.b16 %v1398, %v1394
      %v1619 = vpack.c.b16 %v1399, %v1395
      %v1620 = vpack.c.b16 %v1400, %v1396
      %v1621 = vpack.c.b16 %v1405, %v1401
      %v1622 = vpack.c.b16 %v1406, %v1402
      %v1623 = vpack.c.b16 %v1407, %v1403
      %v1624 = vpack.c.b16 %v1408, %v1404
      %v1625 = vpack.c.b16 %v1413, %v1409
      %v1626 = vpack.c.b16 %v1414, %v1410
      %v1627 = vpack.c.b16 %v1415, %v1411
      %v1628 = vpack.c.b16 %v1416, %v1412
      %v1629 = vpack.c.b16 %v1421, %v1417
      %v1630 = vpack.c.b16 %v1422, %v1418
      %v1631 = vpack.c.b16 %v1423, %v1419
      %v1632 = vpack.c.b16 %v1424, %v1420
      %vm1789 = vcmask 130048
      %v1791 = vsel %vm1789, %v1428, 0
      %v1794 = vsel %vm1789, %v1432, 0
      %v1797 = vsel %vm1789, %v1436, 0
      %v1800 = vsel %vm1789, %v1440, 0
      %v1803 = vsel %vm1789, %v1444, 0
      %v1806 = vsel %vm1789, %v1448, 0
      %v1809 = vsel %vm1789, %v1452, 0
      %v1812 = vsel %vm1789, %v1456, 0
      %v1815 = vsel %vm1789, %v1460, 0
      %v1818 = vsel %vm1789, %v1464, 0
      %v1821 = vsel %vm1789, %v1468, 0
      %v1824 = vsel %vm1789, %v1472, 0
      %v1827 = vsel %vm1789, %v1476, 0
      %v1830 = vsel %vm1789, %v1480, 0
      %v1833 = vsel %vm1789, %v1484, 0
      %v1836 = vsel %vm1789, %v1488, 0
      %v1839 = vsel %vm1789, %v1492, 0
      %v1842 = vsel %vm1789, %v1496, 0
      %v1845 = vsel %vm1789, %v1500, 0
      %v1848 = vsel %vm1789, %v1504, 0
      %v1851 = vsel %vm1789, %v1508, 0
      %v1854 = vsel %vm1789, %v1512, 0
      %v1857 = vsel %vm1789, %v1516, 0
      %v1860 = vsel %vm1789, %v1520, 0
      %v1863 = vsel %vm1789, %v1524, 0
      %v1866 = vsel %vm1789, %v1528, 0
      %v1869 = vsel %vm1789, %v1532, 0
      %v1872 = vsel %vm1789, %v1536, 0
      %v1875 = vsel %vm1789, %v1540, 0
      %v1878 = vsel %vm1789, %v1544, 0
      %v1881 = vsel %vm1789, %v1548, 0
      %v1884 = vsel %vm1789, %v1552, 0
      %v1887 = vsel %vm1789, %v1556, 0
      %v1890 = vsel %vm1789, %v1560, 0
      %v1893 = vsel %vm1789, %v1564, 0
      %v1896 = vsel %vm1789, %v1568, 0
      %v1899 = vsel %vm1789, %v1572, 0
      %v1902 = vsel %vm1789, %v1576, 0
      %v1905 = vsel %vm1789, %v1580, 0
      %v1908 = vsel %vm1789, %v1584, 0
      %v1911 = vsel %vm1789, %v1588, 0
      %v1914 = vsel %vm1789, %v1592, 0
      %v1917 = vsel %vm1789, %v1596, 0
      %v1920 = vsel %vm1789, %v1600, 0
      %v1923 = vsel %vm1789, %v1604, 0
      %v1926 = vsel %vm1789, %v1608, 0
      %v1929 = vsel %vm1789, %v1612, 0
      %v1932 = vsel %vm1789, %v1616, 0
      %v1935 = vsel %vm1789, %v1620, 0
      %v1938 = vsel %vm1789, %v1624, 0
      %v1941 = vsel %vm1789, %v1628, 0
      %v1944 = vsel %vm1789, %v1632, 0
      %1946 = vmatprep.subr.bf16.mxu0 0
      %1947 = vmatpush1.bf16.msra.mxu0 %v443
      %1948 = vmatprep.subr.bf16.mxu0 0
      %1949 = vmatpush1.bf16.msra.mxu0 %v444
      %1950 = vmatprep.subr.bf16.mxu0 0
      %1951 = vmatpush1.bf16.msra.mxu0 %v445
      %1952 = vmatprep.subr.bf16.mxu0 0
      %1953 = vmatpush1.bf16.msra.mxu0 %v446
      %1954 = vmatprep.subr.bf16.mxu0 0
      %1955 = vmatpush1.bf16.msra.mxu0 %v447
      %1956 = vmatprep.subr.bf16.mxu0 0
      %1957 = vmatpush1.bf16.msra.mxu0 %v448
      %1958 = vmatprep.subr.bf16.mxu0 0
      %1959 = vmatpush1.bf16.msra.mxu0 %v449
      %1960 = vmatprep.subr.bf16.mxu0 0
      %1961 = vmatpush1.bf16.msra.mxu0 %v450
      %1962 = vmatprep.subr.bf16.mxu0 0
      %1963 = vmatpush1.bf16.msra.mxu0 %v451
      %1964 = vmatprep.subr.bf16.mxu0 0
      %1965 = vmatpush1.bf16.msra.mxu0 %v452
      %1966 = vmatprep.subr.bf16.mxu0 0
      %1967 = vmatpush1.bf16.msra.mxu0 %v453
      %1968 = vmatprep.subr.bf16.mxu0 0
      %1969 = vmatpush1.bf16.msra.mxu0 %v454
      %1970 = vmatprep.subr.bf16.mxu0 0
      %1971 = vmatpush1.bf16.msra.mxu0 %v455
      %1972 = vmatprep.subr.bf16.mxu0 0
      %1973 = vmatpush1.bf16.msra.mxu0 %v456
      %1974 = vmatprep.subr.bf16.mxu0 0
      %1975 = vmatpush1.bf16.msra.mxu0 %v457
      %1976 = vmatprep.subr.bf16.mxu0 0
      %1977 = vmatpush1.bf16.msra.mxu0 %v458
      %1978 = vmatprep.mubr.bf16.mxu0 %v1426
      %1979 = vmatmul.mubr.bf16.gmra.mrb[0].mxu0 %v1425
      %v1980 = vpop.f32.mrb[0].mxu0
      %v1981 = vadd.f32 0.0, %v1980
      %v1982 = vpop.f32.mrb[0].mxu0
      %v1983 = vpop.f32.mrb[0].mxu0
      %v1984 = vadd.f32 0.0, %v1983
      %v1985 = vpop.f32.mrb[0].mxu0
      %1986 = vmatprep.mubr.bf16.mxu0 %v1430
      %1987 = vmatmul.mubr.bf16.gmra.mrb[0].mxu0 %v1429
      %v1988 = vpop.f32.mrb[0].mxu0
      %v1989 = vadd.f32 0.0, %v1988
      %v1990 = vpop.f32.mrb[0].mxu0
      %v1991 = vpop.f32.mrb[0].mxu0
      %v1992 = vadd.f32 0.0, %v1991
      %v1993 = vpop.f32.mrb[0].mxu0
      %1994 = vmatprep.mubr.bf16.mxu0 %v1434
      %1995 = vmatmul.mubr.bf16.gmra.mrb[0].mxu0 %v1433
      %v1996 = vpop.f32.mrb[0].mxu0
      %v1997 = vadd.f32 0.0, %v1996
      %v1998 = vpop.f32.mrb[0].mxu0
      %v1999 = vpop.f32.mrb[0].mxu0
      %v2000 = vadd.f32 0.0, %v1999
      %v2001 = vpop.f32.mrb[0].mxu0
      %2002 = vmatprep.mubr.bf16.mxu0 %v1438
      %2003 = vmatmul.mubr.bf16.gmra.mrb[0].mxu0 %v1437
      %v2004 = vpop.f32.mrb[0].mxu0
      %v2005 = vadd.f32 0.0, %v2004
      %v2006 = vpop.f32.mrb[0].mxu0
      %v2007 = vpop.f32.mrb[0].mxu0
      %v2008 = vadd.f32 0.0, %v2007
      %v2009 = vpop.f32.mrb[0].mxu0
      %2010 = vmatprep.mubr.bf16.mxu0 %v1442
      %2011 = vmatmul.mubr.bf16.gmra.mrb[0].mxu0 %v1441
      %v2012 = vpop.f32.mrb[0].mxu0
      %v2013 = vadd.f32 0.0, %v2012
      %v2014 = vpop.f32.mrb[0].mxu0
      %v2015 = vpop.f32.mrb[0].mxu0
      %v2016 = vadd.f32 0.0, %v2015
      %v2017 = vpop.f32.mrb[0].mxu0
      %2018 = vmatprep.mubr.bf16.mxu0 %v1446
      %2019 = vmatmul.mubr.bf16.gmra.mrb[0].mxu0 %v1445
      %v2020 = vpop.f32.mrb[0].mxu0
      %v2021 = vadd.f32 0.0, %v2020
      %v2022 = vpop.f32.mrb[0].mxu0
      %v2023 = vpop.f32.mrb[0].mxu0
      %v2024 = vadd.f32 0.0, %v2023
      %v2025 = vpop.f32.mrb[0].mxu0
      %2026 = vmatprep.mubr.bf16.mxu0 %v1450
      %2027 = vmatmul.mubr.bf16.gmra.mrb[0].mxu0 %v1449
      %v2028 = vpop.f32.mrb[0].mxu0
      %v2029 = vadd.f32 0.0, %v2028
      %v2030 = vpop.f32.mrb[0].mxu0
      %v2031 = vpop.f32.mrb[0].mxu0
      %v2032 = vadd.f32 0.0, %v2031
      %v2033 = vpop.f32.mrb[0].mxu0
      %2034 = vmatprep.mubr.bf16.mxu0 %v1454
      %2035 = vmatmul.mubr.bf16.gmra.mrb[0].mxu0 %v1453
      %v2036 = vpop.f32.mrb[0].mxu0
      %v2037 = vadd.f32 0.0, %v2036
      %v2038 = vpop.f32.mrb[0].mxu0
      %v2039 = vpop.f32.mrb[0].mxu0
      %v2040 = vadd.f32 0.0, %v2039
      %v2041 = vpop.f32.mrb[0].mxu0
      %2042 = vmatprep.mubr.bf16.mxu0 %v1458
      %2043 = vmatmul.mubr.bf16.gmra.mrb[0].mxu0 %v1457
      %v2044 = vpop.f32.mrb[0].mxu0
      %v2045 = vadd.f32 0.0, %v2044
      %v2046 = vpop.f32.mrb[0].mxu0
      %v2047 = vpop.f32.mrb[0].mxu0
      %v2048 = vadd.f32 0.0, %v2047
      %v2049 = vpop.f32.mrb[0].mxu0
      %2050 = vmatprep.mubr.bf16.mxu0 %v1462
      %2051 = vmatmul.mubr.bf16.gmra.mrb[0].mxu0 %v1461
      %v2052 = vpop.f32.mrb[0].mxu0
      %v2053 = vadd.f32 0.0, %v2052
      %v2054 = vpop.f32.mrb[0].mxu0
      %v2055 = vpop.f32.mrb[0].mxu0
      %v2056 = vadd.f32 0.0, %v2055
      %v2057 = vpop.f32.mrb[0].mxu0
      %2058 = vmatprep.mubr.bf16.mxu0 %v1466
      %2059 = vmatmul.mubr.bf16.gmra.mrb[0].mxu0 %v1465
      %v2060 = vpop.f32.mrb[0].mxu0
      %v2061 = vadd.f32 0.0, %v2060
      %v2062 = vpop.f32.mrb[0].mxu0
      %v2063 = vpop.f32.mrb[0].mxu0
      %v2064 = vadd.f32 0.0, %v2063
      %v2065 = vpop.f32.mrb[0].mxu0
      %2066 = vmatprep.mubr.bf16.mxu0 %v1470
      %2067 = vmatmul.mubr.bf16.gmra.mrb[0].mxu0 %v1469
      %v2068 = vpop.f32.mrb[0].mxu0
      %v2069 = vadd.f32 0.0, %v2068
      %v2070 = vpop.f32.mrb[0].mxu0
      %v2071 = vpop.f32.mrb[0].mxu0
      %v2072 = vadd.f32 0.0, %v2071
      %v2073 = vpop.f32.mrb[0].mxu0
      %2074 = vmatprep.mubr.bf16.mxu0 %v1474
      %2075 = vmatmul.mubr.bf16.gmra.mrb[0].mxu0 %v1473
      %v2076 = vpop.f32.mrb[0].mxu0
      %v2077 = vadd.f32 0.0, %v2076
      %v2078 = vpop.f32.mrb[0].mxu0
      %v2079 = vpop.f32.mrb[0].mxu0
      %v2080 = vadd.f32 0.0, %v2079
      %v2081 = vpop.f32.mrb[0].mxu0
      %2082 = vmatprep.mubr.bf16.mxu0 %v1478
      %2083 = vmatmul.mubr.bf16.gmra.mrb[0].mxu0 %v1477
      %v2084 = vpop.f32.mrb[0].mxu0
      %v2085 = vadd.f32 0.0, %v2084
      %v2086 = vpop.f32.mrb[0].mxu0
      %v2087 = vpop.f32.mrb[0].mxu0
      %v2088 = vadd.f32 0.0, %v2087
      %v2089 = vpop.f32.mrb[0].mxu0
      %2090 = vmatprep.mubr.bf16.mxu0 %v1482
      %2091 = vmatmul.mubr.bf16.gmra.mrb[0].mxu0 %v1481
      %v2092 = vpop.f32.mrb[0].mxu0
      %v2093 = vadd.f32 0.0, %v2092
      %v2094 = vpop.f32.mrb[0].mxu0
      %v2095 = vpop.f32.mrb[0].mxu0
      %v2096 = vadd.f32 0.0, %v2095
      %v2097 = vpop.f32.mrb[0].mxu0
      %2098 = vmatprep.mubr.bf16.mxu0 %v1486
      %2099 = vmatmul.mubr.bf16.gmra.mrb[0].mxu0 %v1485
      %v2100 = vpop.f32.mrb[0].mxu0
      %v2101 = vadd.f32 0.0, %v2100
      %v2102 = vpop.f32.mrb[0].mxu0
      %v2103 = vpop.f32.mrb[0].mxu0
      %v2104 = vadd.f32 0.0, %v2103
      %v2105 = vpop.f32.mrb[0].mxu0
      %2106 = vmatprep.mubr.bf16.mxu0 %v1490
      %2107 = vmatmul.mubr.bf16.gmra.mrb[0].mxu0 %v1489
      %v2108 = vpop.f32.mrb[0].mxu0
      %v2109 = vadd.f32 0.0, %v2108
      %v2110 = vpop.f32.mrb[0].mxu0
      %v2111 = vpop.f32.mrb[0].mxu0
      %v2112 = vadd.f32 0.0, %v2111
      %v2113 = vpop.f32.mrb[0].mxu0
      %2114 = vmatprep.mubr.bf16.mxu0 %v1494
      %2115 = vmatmul.mubr.bf16.gmra.mrb[0].mxu0 %v1493
      %v2116 = vpop.f32.mrb[0].mxu0
      %v2117 = vadd.f32 0.0, %v2116
      %v2118 = vpop.f32.mrb[0].mxu0
      %v2119 = vpop.f32.mrb[0].mxu0
      %v2120 = vadd.f32 0.0, %v2119
      %v2121 = vpop.f32.mrb[0].mxu0
      %2122 = vmatprep.mubr.bf16.mxu0 %v1498
      %2123 = vmatmul.mubr.bf16.gmra.mrb[0].mxu0 %v1497
      %v2124 = vpop.f32.mrb[0].mxu0
      %v2125 = vadd.f32 0.0, %v2124
      %v2126 = vpop.f32.mrb[0].mxu0
      %v2127 = vpop.f32.mrb[0].mxu0
      %v2128 = vadd.f32 0.0, %v2127
      %v2129 = vpop.f32.mrb[0].mxu0
      %2130 = vmatprep.mubr.bf16.mxu0 %v1502
      %2131 = vmatmul.mubr.bf16.gmra.mrb[0].mxu0 %v1501
      %v2132 = vpop.f32.mrb[0].mxu0
      %v2133 = vadd.f32 0.0, %v2132
      %v2134 = vpop.f32.mrb[0].mxu0
      %v2135 = vpop.f32.mrb[0].mxu0
      %v2136 = vadd.f32 0.0, %v2135
      %v2137 = vpop.f32.mrb[0].mxu0
      %2138 = vmatprep.mubr.bf16.mxu0 %v1506
      %2139 = vmatmul.mubr.bf16.gmra.mrb[0].mxu0 %v1505
      %v2140 = vpop.f32.mrb[0].mxu0
      %v2141 = vadd.f32 0.0, %v2140
      %v2142 = vpop.f32.mrb[0].mxu0
      %v2143 = vpop.f32.mrb[0].mxu0
      %v2144 = vadd.f32 0.0, %v2143
      %v2145 = vpop.f32.mrb[0].mxu0
      %2146 = vmatprep.mubr.bf16.mxu0 %v1510
      %2147 = vmatmul.mubr.bf16.gmra.mrb[0].mxu0 %v1509
      %v2148 = vpop.f32.mrb[0].mxu0
      %v2149 = vadd.f32 0.0, %v2148
      %v2150 = vpop.f32.mrb[0].mxu0
      %v2151 = vpop.f32.mrb[0].mxu0
      %v2152 = vadd.f32 0.0, %v2151
      %v2153 = vpop.f32.mrb[0].mxu0
      %2154 = vmatprep.mubr.bf16.mxu0 %v1514
      %2155 = vmatmul.mubr.bf16.gmra.mrb[0].mxu0 %v1513
      %v2156 = vpop.f32.mrb[0].mxu0
      %v2157 = vadd.f32 0.0, %v2156
      %v2158 = vpop.f32.mrb[0].mxu0
      %v2159 = vpop.f32.mrb[0].mxu0
      %v2160 = vadd.f32 0.0, %v2159
      %v2161 = vpop.f32.mrb[0].mxu0
      %2162 = vmatprep.mubr.bf16.mxu0 %v1518
      %2163 = vmatmul.mubr.bf16.gmra.mrb[0].mxu0 %v1517
      %v2164 = vpop.f32.mrb[0].mxu0
      %v2165 = vadd.f32 0.0, %v2164
      %v2166 = vpop.f32.mrb[0].mxu0
      %v2167 = vpop.f32.mrb[0].mxu0
      %v2168 = vadd.f32 0.0, %v2167
      %v2169 = vpop.f32.mrb[0].mxu0
      %2170 = vmatprep.mubr.bf16.mxu0 %v1522
      %2171 = vmatmul.mubr.bf16.gmra.mrb[0].mxu0 %v1521
      %v2172 = vpop.f32.mrb[0].mxu0
      %v2173 = vadd.f32 0.0, %v2172
      %v2174 = vpop.f32.mrb[0].mxu0
      %v2175 = vpop.f32.mrb[0].mxu0
      %v2176 = vadd.f32 0.0, %v2175
      %v2177 = vpop.f32.mrb[0].mxu0
      %2178 = vmatprep.mubr.bf16.mxu0 %v1526
      %2179 = vmatmul.mubr.bf16.gmra.mrb[0].mxu0 %v1525
      %v2180 = vpop.f32.mrb[0].mxu0
      %v2181 = vadd.f32 0.0, %v2180
      %v2182 = vpop.f32.mrb[0].mxu0
      %v2183 = vpop.f32.mrb[0].mxu0
      %v2184 = vadd.f32 0.0, %v2183
      %v2185 = vpop.f32.mrb[0].mxu0
      %2186 = vmatprep.mubr.bf16.mxu0 %v1530
      %2187 = vmatmul.mubr.bf16.gmra.mrb[0].mxu0 %v1529
      %v2188 = vpop.f32.mrb[0].mxu0
      %v2189 = vadd.f32 0.0, %v2188
      %v2190 = vpop.f32.mrb[0].mxu0
      %v2191 = vpop.f32.mrb[0].mxu0
      %v2192 = vadd.f32 0.0, %v2191
      %v2193 = vpop.f32.mrb[0].mxu0
      %2194 = vmatprep.mubr.bf16.mxu0 %v1534
      %2195 = vmatmul.mubr.bf16.gmra.mrb[0].mxu0 %v1533
      %v2196 = vpop.f32.mrb[0].mxu0
      %v2197 = vadd.f32 0.0, %v2196
      %v2198 = vpop.f32.mrb[0].mxu0
      %v2199 = vpop.f32.mrb[0].mxu0
      %v2200 = vadd.f32 0.0, %v2199
      %v2201 = vpop.f32.mrb[0].mxu0
      %2202 = vmatprep.mubr.bf16.mxu0 %v1538
      %2203 = vmatmul.mubr.bf16.gmra.mrb[0].mxu0 %v1537
      %v2204 = vpop.f32.mrb[0].mxu0
      %v2205 = vadd.f32 0.0, %v2204
      %v2206 = vpop.f32.mrb[0].mxu0
      %v2207 = vpop.f32.mrb[0].mxu0
      %v2208 = vadd.f32 0.0, %v2207
      %v2209 = vpop.f32.mrb[0].mxu0
      %2210 = vmatprep.mubr.bf16.mxu0 %v1542
      %2211 = vmatmul.mubr.bf16.gmra.mrb[0].mxu0 %v1541
      %v2212 = vpop.f32.mrb[0].mxu0
      %v2213 = vadd.f32 0.0, %v2212
      %v2214 = vpop.f32.mrb[0].mxu0
      %v2215 = vpop.f32.mrb[0].mxu0
      %v2216 = vadd.f32 0.0, %v2215
      %v2217 = vpop.f32.mrb[0].mxu0
      %2218 = vmatprep.mubr.bf16.mxu0 %v1546
      %2219 = vmatmul.mubr.bf16.gmra.mrb[0].mxu0 %v1545
      %v2220 = vpop.f32.mrb[0].mxu0
      %v2221 = vadd.f32 0.0, %v2220
      %v2222 = vpop.f32.mrb[0].mxu0
      %v2223 = vpop.f32.mrb[0].mxu0
      %v2224 = vadd.f32 0.0, %v2223
      %v2225 = vpop.f32.mrb[0].mxu0
      %2226 = vmatprep.mubr.bf16.mxu0 %v1550
      %2227 = vmatmul.mubr.bf16.gmra.mrb[0].mxu0 %v1549
      %v2228 = vpop.f32.mrb[0].mxu0
      %v2229 = vadd.f32 0.0, %v2228
      %v2230 = vpop.f32.mrb[0].mxu0
      %v2231 = vpop.f32.mrb[0].mxu0
      %v2232 = vadd.f32 0.0, %v2231
      %v2233 = vpop.f32.mrb[0].mxu0
      %2234 = vmatprep.mubr.bf16.mxu0 %v1554
      %2235 = vmatmul.mubr.bf16.gmra.mrb[0].mxu0 %v1553
      %v2236 = vpop.f32.mrb[0].mxu0
      %v2237 = vadd.f32 0.0, %v2236
      %v2238 = vpop.f32.mrb[0].mxu0
      %v2239 = vpop.f32.mrb[0].mxu0
      %v2240 = vadd.f32 0.0, %v2239
      %v2241 = vpop.f32.mrb[0].mxu0
      %2242 = vmatprep.mubr.bf16.mxu0 %v1558
      %2243 = vmatmul.mubr.bf16.gmra.mrb[0].mxu0 %v1557
      %v2244 = vpop.f32.mrb[0].mxu0
      %v2245 = vadd.f32 0.0, %v2244
      %v2246 = vpop.f32.mrb[0].mxu0
      %v2247 = vpop.f32.mrb[0].mxu0
      %v2248 = vadd.f32 0.0, %v2247
      %v2249 = vpop.f32.mrb[0].mxu0
      %2250 = vmatprep.mubr.bf16.mxu0 %v1562
      %2251 = vmatmul.mubr.bf16.gmra.mrb[0].mxu0 %v1561
      %v2252 = vpop.f32.mrb[0].mxu0
      %v2253 = vadd.f32 0.0, %v2252
      %v2254 = vpop.f32.mrb[0].mxu0
      %v2255 = vpop.f32.mrb[0].mxu0
      %v2256 = vadd.f32 0.0, %v2255
      %v2257 = vpop.f32.mrb[0].mxu0
      %2258 = vmatprep.mubr.bf16.mxu0 %v1566
      %2259 = vmatmul.mubr.bf16.gmra.mrb[0].mxu0 %v1565
      %v2260 = vpop.f32.mrb[0].mxu0
      %v2261 = vadd.f32 0.0, %v2260
      %v2262 = vpop.f32.mrb[0].mxu0
      %v2263 = vpop.f32.mrb[0].mxu0
      %v2264 = vadd.f32 0.0, %v2263
      %v2265 = vpop.f32.mrb[0].mxu0
      %2266 = vmatprep.mubr.bf16.mxu0 %v1570
      %2267 = vmatmul.mubr.bf16.gmra.mrb[0].mxu0 %v1569
      %v2268 = vpop.f32.mrb[0].mxu0
      %v2269 = vadd.f32 0.0, %v2268
      %v2270 = vpop.f32.mrb[0].mxu0
      %v2271 = vpop.f32.mrb[0].mxu0
      %v2272 = vadd.f32 0.0, %v2271
      %v2273 = vpop.f32.mrb[0].mxu0
      %2274 = vmatprep.mubr.bf16.mxu0 %v1574
      %2275 = vmatmul.mubr.bf16.gmra.mrb[0].mxu0 %v1573
      %v2276 = vpop.f32.mrb[0].mxu0
      %v2277 = vadd.f32 0.0, %v2276
      %v2278 = vpop.f32.mrb[0].mxu0
      %v2279 = vpop.f32.mrb[0].mxu0
      %v2280 = vadd.f32 0.0, %v2279
      %v2281 = vpop.f32.mrb[0].mxu0
      %2282 = vmatprep.mubr.bf16.mxu0 %v1578
      %2283 = vmatmul.mubr.bf16.gmra.mrb[0].mxu0 %v1577
      %v2284 = vpop.f32.mrb[0].mxu0
      %v2285 = vadd.f32 0.0, %v2284
      %v2286 = vpop.f32.mrb[0].mxu0
      %v2287 = vpop.f32.mrb[0].mxu0
      %v2288 = vadd.f32 0.0, %v2287
      %v2289 = vpop.f32.mrb[0].mxu0
      %2290 = vmatprep.mubr.bf16.mxu0 %v1582
      %2291 = vmatmul.mubr.bf16.gmra.mrb[0].mxu0 %v1581
      %v2292 = vpop.f32.mrb[0].mxu0
      %v2293 = vadd.f32 0.0, %v2292
      %v2294 = vpop.f32.mrb[0].mxu0
      %v2295 = vpop.f32.mrb[0].mxu0
      %v2296 = vadd.f32 0.0, %v2295
      %v2297 = vpop.f32.mrb[0].mxu0
      %2298 = vmatprep.mubr.bf16.mxu0 %v1586
      %2299 = vmatmul.mubr.bf16.gmra.mrb[0].mxu0 %v1585
      %v2300 = vpop.f32.mrb[0].mxu0
      %v2301 = vadd.f32 0.0, %v2300
      %v2302 = vpop.f32.mrb[0].mxu0
      %v2303 = vpop.f32.mrb[0].mxu0
      %v2304 = vadd.f32 0.0, %v2303
      %v2305 = vpop.f32.mrb[0].mxu0
      %2306 = vmatprep.mubr.bf16.mxu0 %v1590
      %2307 = vmatmul.mubr.bf16.gmra.mrb[0].mxu0 %v1589
      %v2308 = vpop.f32.mrb[0].mxu0
      %v2309 = vadd.f32 0.0, %v2308
      %v2310 = vpop.f32.mrb[0].mxu0
      %v2311 = vpop.f32.mrb[0].mxu0
      %v2312 = vadd.f32 0.0, %v2311
      %v2313 = vpop.f32.mrb[0].mxu0
      %2314 = vmatprep.mubr.bf16.mxu0 %v1594
      %2315 = vmatmul.mubr.bf16.gmra.mrb[0].mxu0 %v1593
      %v2316 = vpop.f32.mrb[0].mxu0
      %v2317 = vadd.f32 0.0, %v2316
      %v2318 = vpop.f32.mrb[0].mxu0
      %v2319 = vpop.f32.mrb[0].mxu0
      %v2320 = vadd.f32 0.0, %v2319
      %v2321 = vpop.f32.mrb[0].mxu0
      %2322 = vmatprep.mubr.bf16.mxu0 %v1598
      %2323 = vmatmul.mubr.bf16.gmra.mrb[0].mxu0 %v1597
      %v2324 = vpop.f32.mrb[0].mxu0
      %v2325 = vadd.f32 0.0, %v2324
      %v2326 = vpop.f32.mrb[0].mxu0
      %v2327 = vpop.f32.mrb[0].mxu0
      %v2328 = vadd.f32 0.0, %v2327
      %v2329 = vpop.f32.mrb[0].mxu0
      %2330 = vmatprep.mubr.bf16.mxu0 %v1602
      %2331 = vmatmul.mubr.bf16.gmra.mrb[0].mxu0 %v1601
      %v2332 = vpop.f32.mrb[0].mxu0
      %v2333 = vadd.f32 0.0, %v2332
      %v2334 = vpop.f32.mrb[0].mxu0
      %v2335 = vpop.f32.mrb[0].mxu0
      %v2336 = vadd.f32 0.0, %v2335
      %v2337 = vpop.f32.mrb[0].mxu0
      %2338 = vmatprep.mubr.bf16.mxu0 %v1606
      %2339 = vmatmul.mubr.bf16.gmra.mrb[0].mxu0 %v1605
      %v2340 = vpop.f32.mrb[0].mxu0
      %v2341 = vadd.f32 0.0, %v2340
      %v2342 = vpop.f32.mrb[0].mxu0
      %v2343 = vpop.f32.mrb[0].mxu0
      %v2344 = vadd.f32 0.0, %v2343
      %v2345 = vpop.f32.mrb[0].mxu0
      %2346 = vmatprep.mubr.bf16.mxu0 %v1610
      %2347 = vmatmul.mubr.bf16.gmra.mrb[0].mxu0 %v1609
      %v2348 = vpop.f32.mrb[0].mxu0
      %v2349 = vadd.f32 0.0, %v2348
      %v2350 = vpop.f32.mrb[0].mxu0
      %v2351 = vpop.f32.mrb[0].mxu0
      %v2352 = vadd.f32 0.0, %v2351
      %v2353 = vpop.f32.mrb[0].mxu0
      %2354 = vmatprep.mubr.bf16.mxu0 %v1614
      %2355 = vmatmul.mubr.bf16.gmra.mrb[0].mxu0 %v1613
      %v2356 = vpop.f32.mrb[0].mxu0
      %v2357 = vadd.f32 0.0, %v2356
      %v2358 = vpop.f32.mrb[0].mxu0
      %v2359 = vpop.f32.mrb[0].mxu0
      %v2360 = vadd.f32 0.0, %v2359
      %v2361 = vpop.f32.mrb[0].mxu0
      %2362 = vmatprep.mubr.bf16.mxu0 %v1618
      %2363 = vmatmul.mubr.bf16.gmra.mrb[0].mxu0 %v1617
      %v2364 = vpop.f32.mrb[0].mxu0
      %v2365 = vadd.f32 0.0, %v2364
      %v2366 = vpop.f32.mrb[0].mxu0
      %v2367 = vpop.f32.mrb[0].mxu0
      %v2368 = vadd.f32 0.0, %v2367
      %v2369 = vpop.f32.mrb[0].mxu0
      %2370 = vmatprep.mubr.bf16.mxu0 %v1622
      %2371 = vmatmul.mubr.bf16.gmra.mrb[0].mxu0 %v1621
      %v2372 = vpop.f32.mrb[0].mxu0
      %v2373 = vadd.f32 0.0, %v2372
      %v2374 = vpop.f32.mrb[0].mxu0
      %v2375 = vpop.f32.mrb[0].mxu0
      %v2376 = vadd.f32 0.0, %v2375
      %v2377 = vpop.f32.mrb[0].mxu0
      %2378 = vmatprep.mubr.bf16.mxu0 %v1626
      %2379 = vmatmul.mubr.bf16.gmra.mrb[0].mxu0 %v1625
      %v2380 = vpop.f32.mrb[0].mxu0
      %v2381 = vadd.f32 0.0, %v2380
      %v2382 = vpop.f32.mrb[0].mxu0
      %v2383 = vpop.f32.mrb[0].mxu0
      %v2384 = vadd.f32 0.0, %v2383
      %v2385 = vpop.f32.mrb[0].mxu0
      %2386 = vmatprep.mubr.bf16.mxu0 %v1630
      %2387 = vmatmul.mubr.bf16.gmra.mrb[0].mxu0 %v1629
      %v2388 = vpop.f32.mrb[0].mxu0
      %v2389 = vadd.f32 0.0, %v2388
      %v2390 = vpop.f32.mrb[0].mxu0
      %v2391 = vpop.f32.mrb[0].mxu0
      %v2392 = vadd.f32 0.0, %v2391
      %v2393 = vpop.f32.mrb[0].mxu0
      %2394 = vdwg.mxu0
      %2395 = vmatprep.subr.bf16.mxu0 0
      %2396 = vmatpush1.bf16.msra.mxu0 %v459
      %2397 = vmatprep.subr.bf16.mxu0 0
      %2398 = vmatpush1.bf16.msra.mxu0 %v460
      %2399 = vmatprep.subr.bf16.mxu0 0
      %2400 = vmatpush1.bf16.msra.mxu0 %v461
      %2401 = vmatprep.subr.bf16.mxu0 0
      %2402 = vmatpush1.bf16.msra.mxu0 %v462
      %2403 = vmatprep.subr.bf16.mxu0 0
      %2404 = vmatpush1.bf16.msra.mxu0 %v463
      %2405 = vmatprep.subr.bf16.mxu0 0
      %2406 = vmatpush1.bf16.msra.mxu0 %v464
      %2407 = vmatprep.subr.bf16.mxu0 0
      %2408 = vmatpush1.bf16.msra.mxu0 %v465
      %2409 = vmatprep.subr.bf16.mxu0 0
      %2410 = vmatpush1.bf16.msra.mxu0 %v466
      %2411 = vmatprep.subr.bf16.mxu0 0
      %2412 = vmatpush1.bf16.msra.mxu0 %v467
      %2413 = vmatprep.subr.bf16.mxu0 0
      %2414 = vmatpush1.bf16.msra.mxu0 0
      %2415 = vmatprep.subr.bf16.mxu0 0
      %2416 = vmatpush1.bf16.msra.mxu0 0
      %2417 = vmatprep.subr.bf16.mxu0 0
      %2418 = vmatpush1.bf16.msra.mxu0 0
      %2419 = vmatprep.subr.bf16.mxu0 0
      %2420 = vmatpush1.bf16.msra.mxu0 0
      %2421 = vmatprep.subr.bf16.mxu0 0
      %2422 = vmatpush1.bf16.msra.mxu0 0
      %2423 = vmatprep.subr.bf16.mxu0 0
      %2424 = vmatpush1.bf16.msra.mxu0 0
      %2425 = vmatprep.subr.bf16.mxu0 0
      %2426 = vmatpush1.bf16.msra.mxu0 0
      %2427 = vmatprep.mubr.bf16.mxu0 %v1791
      %2428 = vmatmul.mubr.bf16.gmra.mrb[0].mxu0 %v1427
      %v2429 = vpop.f32.mrb[0].mxu0
      %v2430 = vadd.f32 %v1981, %v2429
      %v2431 = vpop.f32.mrb[0].mxu0
      %v2432 = vpop.f32.mrb[0].mxu0
      %v2433 = vadd.f32 %v1984, %v2432
      %v2434 = vpop.f32.mrb[0].mxu0
      %2435 = vmatprep.mubr.bf16.mxu0 %v1794
      %2436 = vmatmul.mubr.bf16.gmra.mrb[0].mxu0 %v1431
      %v2437 = vpop.f32.mrb[0].mxu0
      %v2438 = vadd.f32 %v1989, %v2437
      %v2439 = vpop.f32.mrb[0].mxu0
      %v2440 = vpop.f32.mrb[0].mxu0
      %v2441 = vadd.f32 %v1992, %v2440
      %v2442 = vpop.f32.mrb[0].mxu0
      %2443 = vmatprep.mubr.bf16.mxu0 %v1797
      %2444 = vmatmul.mubr.bf16.gmra.mrb[0].mxu0 %v1435
      %v2445 = vpop.f32.mrb[0].mxu0
      %v2446 = vadd.f32 %v1997, %v2445
      %v2447 = vpop.f32.mrb[0].mxu0
      %v2448 = vpop.f32.mrb[0].mxu0
      %v2449 = vadd.f32 %v2000, %v2448
      %v2450 = vpop.f32.mrb[0].mxu0
      %2451 = vmatprep.mubr.bf16.mxu0 %v1800
      %2452 = vmatmul.mubr.bf16.gmra.mrb[0].mxu0 %v1439
      %v2453 = vpop.f32.mrb[0].mxu0
      %v2454 = vadd.f32 %v2005, %v2453
      %v2455 = vpop.f32.mrb[0].mxu0
      %v2456 = vpop.f32.mrb[0].mxu0
      %v2457 = vadd.f32 %v2008, %v2456
      %v2458 = vpop.f32.mrb[0].mxu0
      %2459 = vmatprep.mubr.bf16.mxu0 %v1803
      %2460 = vmatmul.mubr.bf16.gmra.mrb[0].mxu0 %v1443
      %v2461 = vpop.f32.mrb[0].mxu0
      %v2462 = vadd.f32 %v2013, %v2461
      %v2463 = vpop.f32.mrb[0].mxu0
      %v2464 = vpop.f32.mrb[0].mxu0
      %v2465 = vadd.f32 %v2016, %v2464
      %v2466 = vpop.f32.mrb[0].mxu0
      %2467 = vmatprep.mubr.bf16.mxu0 %v1806
      %2468 = vmatmul.mubr.bf16.gmra.mrb[0].mxu0 %v1447
      %v2469 = vpop.f32.mrb[0].mxu0
      %v2470 = vadd.f32 %v2021, %v2469
      %v2471 = vpop.f32.mrb[0].mxu0
      %v2472 = vpop.f32.mrb[0].mxu0
      %v2473 = vadd.f32 %v2024, %v2472
      %v2474 = vpop.f32.mrb[0].mxu0
      %2475 = vmatprep.mubr.bf16.mxu0 %v1809
      %2476 = vmatmul.mubr.bf16.gmra.mrb[0].mxu0 %v1451
      %v2477 = vpop.f32.mrb[0].mxu0
      %v2478 = vadd.f32 %v2029, %v2477
      %v2479 = vpop.f32.mrb[0].mxu0
      %v2480 = vpop.f32.mrb[0].mxu0
      %v2481 = vadd.f32 %v2032, %v2480
      %v2482 = vpop.f32.mrb[0].mxu0
      %2483 = vmatprep.mubr.bf16.mxu0 %v1812
      %2484 = vmatmul.mubr.bf16.gmra.mrb[0].mxu0 %v1455
      %v2485 = vpop.f32.mrb[0].mxu0
      %v2486 = vadd.f32 %v2037, %v2485
      %v2487 = vpop.f32.mrb[0].mxu0
      %v2488 = vpop.f32.mrb[0].mxu0
      %v2489 = vadd.f32 %v2040, %v2488
      %v2490 = vpop.f32.mrb[0].mxu0
      %2491 = vmatprep.mubr.bf16.mxu0 %v1815
      %2492 = vmatmul.mubr.bf16.gmra.mrb[0].mxu0 %v1459
      %v2493 = vpop.f32.mrb[0].mxu0
      %v2494 = vadd.f32 %v2045, %v2493
      %v2495 = vpop.f32.mrb[0].mxu0
      %v2496 = vpop.f32.mrb[0].mxu0
      %v2497 = vadd.f32 %v2048, %v2496
      %v2498 = vpop.f32.mrb[0].mxu0
      %2499 = vmatprep.mubr.bf16.mxu0 %v1818
      %2500 = vmatmul.mubr.bf16.gmra.mrb[0].mxu0 %v1463
      %v2501 = vpop.f32.mrb[0].mxu0
      %v2502 = vadd.f32 %v2053, %v2501
      %v2503 = vpop.f32.mrb[0].mxu0
      %v2504 = vpop.f32.mrb[0].mxu0
      %v2505 = vadd.f32 %v2056, %v2504
      %v2506 = vpop.f32.mrb[0].mxu0
      %2507 = vmatprep.mubr.bf16.mxu0 %v1821
      %2508 = vmatmul.mubr.bf16.gmra.mrb[0].mxu0 %v1467
      %v2509 = vpop.f32.mrb[0].mxu0
      %v2510 = vadd.f32 %v2061, %v2509
      %v2511 = vpop.f32.mrb[0].mxu0
      %v2512 = vpop.f32.mrb[0].mxu0
      %v2513 = vadd.f32 %v2064, %v2512
      %v2514 = vpop.f32.mrb[0].mxu0
      %2515 = vmatprep.mubr.bf16.mxu0 %v1824
      %2516 = vmatmul.mubr.bf16.gmra.mrb[0].mxu0 %v1471
      %v2517 = vpop.f32.mrb[0].mxu0
      %v2518 = vadd.f32 %v2069, %v2517
      %v2519 = vpop.f32.mrb[0].mxu0
      %v2520 = vpop.f32.mrb[0].mxu0
      %v2521 = vadd.f32 %v2072, %v2520
      %v2522 = vpop.f32.mrb[0].mxu0
      %2523 = vmatprep.mubr.bf16.mxu0 %v1827
      %2524 = vmatmul.mubr.bf16.gmra.mrb[0].mxu0 %v1475
      %v2525 = vpop.f32.mrb[0].mxu0
      %v2526 = vadd.f32 %v2077, %v2525
      %v2527 = vpop.f32.mrb[0].mxu0
      %v2528 = vpop.f32.mrb[0].mxu0
      %v2529 = vadd.f32 %v2080, %v2528
      %v2530 = vpop.f32.mrb[0].mxu0
      %2531 = vmatprep.mubr.bf16.mxu0 %v1830
      %2532 = vmatmul.mubr.bf16.gmra.mrb[0].mxu0 %v1479
      %v2533 = vpop.f32.mrb[0].mxu0
      %v2534 = vadd.f32 %v2085, %v2533
      %v2535 = vpop.f32.mrb[0].mxu0
      %v2536 = vpop.f32.mrb[0].mxu0
      %v2537 = vadd.f32 %v2088, %v2536
      %v2538 = vpop.f32.mrb[0].mxu0
      %2539 = vmatprep.mubr.bf16.mxu0 %v1833
      %2540 = vmatmul.mubr.bf16.gmra.mrb[0].mxu0 %v1483
      %v2541 = vpop.f32.mrb[0].mxu0
      %v2542 = vadd.f32 %v2093, %v2541
      %v2543 = vpop.f32.mrb[0].mxu0
      %v2544 = vpop.f32.mrb[0].mxu0
      %v2545 = vadd.f32 %v2096, %v2544
      %v2546 = vpop.f32.mrb[0].mxu0
      %2547 = vmatprep.mubr.bf16.mxu0 %v1836
      %2548 = vmatmul.mubr.bf16.gmra.mrb[0].mxu0 %v1487
      %v2549 = vpop.f32.mrb[0].mxu0
      %v2550 = vadd.f32 %v2101, %v2549
      %v2551 = vpop.f32.mrb[0].mxu0
      %v2552 = vpop.f32.mrb[0].mxu0
      %v2553 = vadd.f32 %v2104, %v2552
      %v2554 = vpop.f32.mrb[0].mxu0
      %2555 = vmatprep.mubr.bf16.mxu0 %v1839
      %2556 = vmatmul.mubr.bf16.gmra.mrb[0].mxu0 %v1491
      %v2557 = vpop.f32.mrb[0].mxu0
      %v2558 = vadd.f32 %v2109, %v2557
      %v2559 = vpop.f32.mrb[0].mxu0
      %v2560 = vpop.f32.mrb[0].mxu0
      %v2561 = vadd.f32 %v2112, %v2560
      %v2562 = vpop.f32.mrb[0].mxu0
      %2563 = vmatprep.mubr.bf16.mxu0 %v1842
      %2564 = vmatmul.mubr.bf16.gmra.mrb[0].mxu0 %v1495
      %v2565 = vpop.f32.mrb[0].mxu0
      %v2566 = vadd.f32 %v2117, %v2565
      %v2567 = vpop.f32.mrb[0].mxu0
      %v2568 = vpop.f32.mrb[0].mxu0
      %v2569 = vadd.f32 %v2120, %v2568
      %v2570 = vpop.f32.mrb[0].mxu0
      %2571 = vmatprep.mubr.bf16.mxu0 %v1845
      %2572 = vmatmul.mubr.bf16.gmra.mrb[0].mxu0 %v1499
      %v2573 = vpop.f32.mrb[0].mxu0
      %v2574 = vadd.f32 %v2125, %v2573
      %v2575 = vpop.f32.mrb[0].mxu0
      %v2576 = vpop.f32.mrb[0].mxu0
      %v2577 = vadd.f32 %v2128, %v2576
      %v2578 = vpop.f32.mrb[0].mxu0
      %2579 = vmatprep.mubr.bf16.mxu0 %v1848
      %2580 = vmatmul.mubr.bf16.gmra.mrb[0].mxu0 %v1503
      %v2581 = vpop.f32.mrb[0].mxu0
      %v2582 = vadd.f32 %v2133, %v2581
      %v2583 = vpop.f32.mrb[0].mxu0
      %v2584 = vpop.f32.mrb[0].mxu0
      %v2585 = vadd.f32 %v2136, %v2584
      %v2586 = vpop.f32.mrb[0].mxu0
      %2587 = vmatprep.mubr.bf16.mxu0 %v1851
      %2588 = vmatmul.mubr.bf16.gmra.mrb[0].mxu0 %v1507
      %v2589 = vpop.f32.mrb[0].mxu0
      %v2590 = vadd.f32 %v2141, %v2589
      %v2591 = vpop.f32.mrb[0].mxu0
      %v2592 = vpop.f32.mrb[0].mxu0
      %v2593 = vadd.f32 %v2144, %v2592
      %v2594 = vpop.f32.mrb[0].mxu0
      %2595 = vmatprep.mubr.bf16.mxu0 %v1854
      %2596 = vmatmul.mubr.bf16.gmra.mrb[0].mxu0 %v1511
      %v2597 = vpop.f32.mrb[0].mxu0
      %v2598 = vadd.f32 %v2149, %v2597
      %v2599 = vpop.f32.mrb[0].mxu0
      %v2600 = vpop.f32.mrb[0].mxu0
      %v2601 = vadd.f32 %v2152, %v2600
      %v2602 = vpop.f32.mrb[0].mxu0
      %2603 = vmatprep.mubr.bf16.mxu0 %v1857
      %2604 = vmatmul.mubr.bf16.gmra.mrb[0].mxu0 %v1515
      %v2605 = vpop.f32.mrb[0].mxu0
      %v2606 = vadd.f32 %v2157, %v2605
      %v2607 = vpop.f32.mrb[0].mxu0
      %v2608 = vpop.f32.mrb[0].mxu0
      %v2609 = vadd.f32 %v2160, %v2608
      %v2610 = vpop.f32.mrb[0].mxu0
      %2611 = vmatprep.mubr.bf16.mxu0 %v1860
      %2612 = vmatmul.mubr.bf16.gmra.mrb[0].mxu0 %v1519
      %v2613 = vpop.f32.mrb[0].mxu0
      %v2614 = vadd.f32 %v2165, %v2613
      %v2615 = vpop.f32.mrb[0].mxu0
      %v2616 = vpop.f32.mrb[0].mxu0
      %v2617 = vadd.f32 %v2168, %v2616
      %v2618 = vpop.f32.mrb[0].mxu0
      %2619 = vmatprep.mubr.bf16.mxu0 %v1863
      %2620 = vmatmul.mubr.bf16.gmra.mrb[0].mxu0 %v1523
      %v2621 = vpop.f32.mrb[0].mxu0
      %v2622 = vadd.f32 %v2173, %v2621
      %v2623 = vpop.f32.mrb[0].mxu0
      %v2624 = vpop.f32.mrb[0].mxu0
      %v2625 = vadd.f32 %v2176, %v2624
      %v2626 = vpop.f32.mrb[0].mxu0
      %2627 = vmatprep.mubr.bf16.mxu0 %v1866
      %2628 = vmatmul.mubr.bf16.gmra.mrb[0].mxu0 %v1527
      %v2629 = vpop.f32.mrb[0].mxu0
      %v2630 = vadd.f32 %v2181, %v2629
      %v2631 = vpop.f32.mrb[0].mxu0
      %v2632 = vpop.f32.mrb[0].mxu0
      %v2633 = vadd.f32 %v2184, %v2632
      %v2634 = vpop.f32.mrb[0].mxu0
      %2635 = vmatprep.mubr.bf16.mxu0 %v1869
      %2636 = vmatmul.mubr.bf16.gmra.mrb[0].mxu0 %v1531
      %v2637 = vpop.f32.mrb[0].mxu0
      %v2638 = vadd.f32 %v2189, %v2637
      %v2639 = vpop.f32.mrb[0].mxu0
      %v2640 = vpop.f32.mrb[0].mxu0
      %v2641 = vadd.f32 %v2192, %v2640
      %v2642 = vpop.f32.mrb[0].mxu0
      %2643 = vmatprep.mubr.bf16.mxu0 %v1872
      %2644 = vmatmul.mubr.bf16.gmra.mrb[0].mxu0 %v1535
      %v2645 = vpop.f32.mrb[0].mxu0
      %v2646 = vadd.f32 %v2197, %v2645
      %v2647 = vpop.f32.mrb[0].mxu0
      %v2648 = vpop.f32.mrb[0].mxu0
      %v2649 = vadd.f32 %v2200, %v2648
      %v2650 = vpop.f32.mrb[0].mxu0
      %2651 = vmatprep.mubr.bf16.mxu0 %v1875
      %2652 = vmatmul.mubr.bf16.gmra.mrb[0].mxu0 %v1539
      %v2653 = vpop.f32.mrb[0].mxu0
      %v2654 = vadd.f32 %v2205, %v2653
      %v2655 = vpop.f32.mrb[0].mxu0
      %v2656 = vpop.f32.mrb[0].mxu0
      %v2657 = vadd.f32 %v2208, %v2656
      %v2658 = vpop.f32.mrb[0].mxu0
      %2659 = vmatprep.mubr.bf16.mxu0 %v1878
      %2660 = vmatmul.mubr.bf16.gmra.mrb[0].mxu0 %v1543
      %v2661 = vpop.f32.mrb[0].mxu0
      %v2662 = vadd.f32 %v2213, %v2661
      %v2663 = vpop.f32.mrb[0].mxu0
      %v2664 = vpop.f32.mrb[0].mxu0
      %v2665 = vadd.f32 %v2216, %v2664
      %v2666 = vpop.f32.mrb[0].mxu0
      %2667 = vmatprep.mubr.bf16.mxu0 %v1881
      %2668 = vmatmul.mubr.bf16.gmra.mrb[0].mxu0 %v1547
      %v2669 = vpop.f32.mrb[0].mxu0
      %v2670 = vadd.f32 %v2221, %v2669
      %v2671 = vpop.f32.mrb[0].mxu0
      %v2672 = vpop.f32.mrb[0].mxu0
      %v2673 = vadd.f32 %v2224, %v2672
      %v2674 = vpop.f32.mrb[0].mxu0
      %2675 = vmatprep.mubr.bf16.mxu0 %v1884
      %2676 = vmatmul.mubr.bf16.gmra.mrb[0].mxu0 %v1551
      %v2677 = vpop.f32.mrb[0].mxu0
      %v2678 = vadd.f32 %v2229, %v2677
      %v2679 = vpop.f32.mrb[0].mxu0
      %v2680 = vpop.f32.mrb[0].mxu0
      %v2681 = vadd.f32 %v2232, %v2680
      %v2682 = vpop.f32.mrb[0].mxu0
      %2683 = vmatprep.mubr.bf16.mxu0 %v1887
      %2684 = vmatmul.mubr.bf16.gmra.mrb[0].mxu0 %v1555
      %v2685 = vpop.f32.mrb[0].mxu0
      %v2686 = vadd.f32 %v2237, %v2685
      %v2687 = vpop.f32.mrb[0].mxu0
      %v2688 = vpop.f32.mrb[0].mxu0
      %v2689 = vadd.f32 %v2240, %v2688
      %v2690 = vpop.f32.mrb[0].mxu0
      %2691 = vmatprep.mubr.bf16.mxu0 %v1890
      %2692 = vmatmul.mubr.bf16.gmra.mrb[0].mxu0 %v1559
      %v2693 = vpop.f32.mrb[0].mxu0
      %v2694 = vadd.f32 %v2245, %v2693
      %v2695 = vpop.f32.mrb[0].mxu0
      %v2696 = vpop.f32.mrb[0].mxu0
      %v2697 = vadd.f32 %v2248, %v2696
      %v2698 = vpop.f32.mrb[0].mxu0
      %2699 = vmatprep.mubr.bf16.mxu0 %v1893
      %2700 = vmatmul.mubr.bf16.gmra.mrb[0].mxu0 %v1563
      %v2701 = vpop.f32.mrb[0].mxu0
      %v2702 = vadd.f32 %v2253, %v2701
      %v2703 = vpop.f32.mrb[0].mxu0
      %v2704 = vpop.f32.mrb[0].mxu0
      %v2705 = vadd.f32 %v2256, %v2704
      %v2706 = vpop.f32.mrb[0].mxu0
      %2707 = vmatprep.mubr.bf16.mxu0 %v1896
      %2708 = vmatmul.mubr.bf16.gmra.mrb[0].mxu0 %v1567
      %v2709 = vpop.f32.mrb[0].mxu0
      %v2710 = vadd.f32 %v2261, %v2709
      %v2711 = vpop.f32.mrb[0].mxu0
      %v2712 = vpop.f32.mrb[0].mxu0
      %v2713 = vadd.f32 %v2264, %v2712
      %v2714 = vpop.f32.mrb[0].mxu0
      %2715 = vmatprep.mubr.bf16.mxu0 %v1899
      %2716 = vmatmul.mubr.bf16.gmra.mrb[0].mxu0 %v1571
      %v2717 = vpop.f32.mrb[0].mxu0
      %v2718 = vadd.f32 %v2269, %v2717
      %v2719 = vpop.f32.mrb[0].mxu0
      %v2720 = vpop.f32.mrb[0].mxu0
      %v2721 = vadd.f32 %v2272, %v2720
      %v2722 = vpop.f32.mrb[0].mxu0
      %2723 = vmatprep.mubr.bf16.mxu0 %v1902
      %2724 = vmatmul.mubr.bf16.gmra.mrb[0].mxu0 %v1575
      %v2725 = vpop.f32.mrb[0].mxu0
      %v2726 = vadd.f32 %v2277, %v2725
      %v2727 = vpop.f32.mrb[0].mxu0
      %v2728 = vpop.f32.mrb[0].mxu0
      %v2729 = vadd.f32 %v2280, %v2728
      %v2730 = vpop.f32.mrb[0].mxu0
      %2731 = vmatprep.mubr.bf16.mxu0 %v1905
      %2732 = vmatmul.mubr.bf16.gmra.mrb[0].mxu0 %v1579
      %v2733 = vpop.f32.mrb[0].mxu0
      %v2734 = vadd.f32 %v2285, %v2733
      %v2735 = vpop.f32.mrb[0].mxu0
      %v2736 = vpop.f32.mrb[0].mxu0
      %v2737 = vadd.f32 %v2288, %v2736
      %v2738 = vpop.f32.mrb[0].mxu0
      %2739 = vmatprep.mubr.bf16.mxu0 %v1908
      %2740 = vmatmul.mubr.bf16.gmra.mrb[0].mxu0 %v1583
      %v2741 = vpop.f32.mrb[0].mxu0
      %v2742 = vadd.f32 %v2293, %v2741
      %v2743 = vpop.f32.mrb[0].mxu0
      %v2744 = vpop.f32.mrb[0].mxu0
      %v2745 = vadd.f32 %v2296, %v2744
      %v2746 = vpop.f32.mrb[0].mxu0
      %2747 = vmatprep.mubr.bf16.mxu0 %v1911
      %2748 = vmatmul.mubr.bf16.gmra.mrb[0].mxu0 %v1587
      %v2749 = vpop.f32.mrb[0].mxu0
      %v2750 = vadd.f32 %v2301, %v2749
      %v2751 = vpop.f32.mrb[0].mxu0
      %v2752 = vpop.f32.mrb[0].mxu0
      %v2753 = vadd.f32 %v2304, %v2752
      %v2754 = vpop.f32.mrb[0].mxu0
      %2755 = vmatprep.mubr.bf16.mxu0 %v1914
      %2756 = vmatmul.mubr.bf16.gmra.mrb[0].mxu0 %v1591
      %v2757 = vpop.f32.mrb[0].mxu0
      %v2758 = vadd.f32 %v2309, %v2757
      %v2759 = vpop.f32.mrb[0].mxu0
      %v2760 = vpop.f32.mrb[0].mxu0
      %v2761 = vadd.f32 %v2312, %v2760
      %v2762 = vpop.f32.mrb[0].mxu0
      %2763 = vmatprep.mubr.bf16.mxu0 %v1917
      %2764 = vmatmul.mubr.bf16.gmra.mrb[0].mxu0 %v1595
      %v2765 = vpop.f32.mrb[0].mxu0
      %v2766 = vadd.f32 %v2317, %v2765
      %v2767 = vpop.f32.mrb[0].mxu0
      %v2768 = vpop.f32.mrb[0].mxu0
      %v2769 = vadd.f32 %v2320, %v2768
      %v2770 = vpop.f32.mrb[0].mxu0
      %2771 = vmatprep.mubr.bf16.mxu0 %v1920
      %2772 = vmatmul.mubr.bf16.gmra.mrb[0].mxu0 %v1599
      %v2773 = vpop.f32.mrb[0].mxu0
      %v2774 = vadd.f32 %v2325, %v2773
      %v2775 = vpop.f32.mrb[0].mxu0
      %v2776 = vpop.f32.mrb[0].mxu0
      %v2777 = vadd.f32 %v2328, %v2776
      %v2778 = vpop.f32.mrb[0].mxu0
      %2779 = vmatprep.mubr.bf16.mxu0 %v1923
      %2780 = vmatmul.mubr.bf16.gmra.mrb[0].mxu0 %v1603
      %v2781 = vpop.f32.mrb[0].mxu0
      %v2782 = vadd.f32 %v2333, %v2781
      %v2783 = vpop.f32.mrb[0].mxu0
      %v2784 = vpop.f32.mrb[0].mxu0
      %v2785 = vadd.f32 %v2336, %v2784
      %v2786 = vpop.f32.mrb[0].mxu0
      %2787 = vmatprep.mubr.bf16.mxu0 %v1926
      %2788 = vmatmul.mubr.bf16.gmra.mrb[0].mxu0 %v1607
      %v2789 = vpop.f32.mrb[0].mxu0
      %v2790 = vadd.f32 %v2341, %v2789
      %v2791 = vpop.f32.mrb[0].mxu0
      %v2792 = vpop.f32.mrb[0].mxu0
      %v2793 = vadd.f32 %v2344, %v2792
      %v2794 = vpop.f32.mrb[0].mxu0
      %2795 = vmatprep.mubr.bf16.mxu0 %v1929
      %2796 = vmatmul.mubr.bf16.gmra.mrb[0].mxu0 %v1611
      %v2797 = vpop.f32.mrb[0].mxu0
      %v2798 = vadd.f32 %v2349, %v2797
      %v2799 = vpop.f32.mrb[0].mxu0
      %v2800 = vpop.f32.mrb[0].mxu0
      %v2801 = vadd.f32 %v2352, %v2800
      %v2802 = vpop.f32.mrb[0].mxu0
      %2803 = vmatprep.mubr.bf16.mxu0 %v1932
      %2804 = vmatmul.mubr.bf16.gmra.mrb[0].mxu0 %v1615
      %v2805 = vpop.f32.mrb[0].mxu0
      %v2806 = vadd.f32 %v2357, %v2805
      %v2807 = vpop.f32.mrb[0].mxu0
      %v2808 = vpop.f32.mrb[0].mxu0
      %v2809 = vadd.f32 %v2360, %v2808
      %v2810 = vpop.f32.mrb[0].mxu0
      %2811 = vmatprep.mubr.bf16.mxu0 %v1935
      %2812 = vmatmul.mubr.bf16.gmra.mrb[0].mxu0 %v1619
      %v2813 = vpop.f32.mrb[0].mxu0
      %v2814 = vadd.f32 %v2365, %v2813
      %v2815 = vpop.f32.mrb[0].mxu0
      %v2816 = vpop.f32.mrb[0].mxu0
      %v2817 = vadd.f32 %v2368, %v2816
      %v2818 = vpop.f32.mrb[0].mxu0
      %2819 = vmatprep.mubr.bf16.mxu0 %v1938
      %2820 = vmatmul.mubr.bf16.gmra.mrb[0].mxu0 %v1623
      %v2821 = vpop.f32.mrb[0].mxu0
      %v2822 = vadd.f32 %v2373, %v2821
      %v2823 = vpop.f32.mrb[0].mxu0
      %v2824 = vpop.f32.mrb[0].mxu0
      %v2825 = vadd.f32 %v2376, %v2824
      %v2826 = vpop.f32.mrb[0].mxu0
      %2827 = vmatprep.mubr.bf16.mxu0 %v1941
      %2828 = vmatmul.mubr.bf16.gmra.mrb[0].mxu0 %v1627
      %v2829 = vpop.f32.mrb[0].mxu0
      %v2830 = vadd.f32 %v2381, %v2829
      %v2831 = vpop.f32.mrb[0].mxu0
      %v2832 = vpop.f32.mrb[0].mxu0
      %v2833 = vadd.f32 %v2384, %v2832
      %v2834 = vpop.f32.mrb[0].mxu0
      %2835 = vmatprep.mubr.bf16.mxu0 %v1944
      %2836 = vmatmul.mubr.bf16.gmra.mrb[0].mxu0 %v1631
      %v2837 = vpop.f32.mrb[0].mxu0
      %v2838 = vadd.f32 %v2389, %v2837
      %v2839 = vpop.f32.mrb[0].mxu0
      %v2840 = vpop.f32.mrb[0].mxu0
      %v2841 = vadd.f32 %v2392, %v2840
      %v2842 = vpop.f32.mrb[0].mxu0
      %2843 = vdwg.mxu0
      %2844 = vmatprep.subr.bf16.mxu0 0
      %2845 = vmatpush1.bf16.msra.mxu0 %v568
      %2846 = vmatprep.subr.bf16.mxu0 0
      %2847 = vmatpush1.bf16.msra.mxu0 %v569
      %2848 = vmatprep.subr.bf16.mxu0 0
      %2849 = vmatpush1.bf16.msra.mxu0 %v570
      %2850 = vmatprep.subr.bf16.mxu0 0
      %2851 = vmatpush1.bf16.msra.mxu0 %v571
      %2852 = vmatprep.subr.bf16.mxu0 0
      %2853 = vmatpush1.bf16.msra.mxu0 %v572
      %2854 = vmatprep.subr.bf16.mxu0 0
      %2855 = vmatpush1.bf16.msra.mxu0 %v573
      %2856 = vmatprep.subr.bf16.mxu0 0
      %2857 = vmatpush1.bf16.msra.mxu0 %v574
      %2858 = vmatprep.subr.bf16.mxu0 0
      %2859 = vmatpush1.bf16.msra.mxu0 %v575
      %2860 = vmatprep.subr.bf16.mxu0 0
      %2861 = vmatpush1.bf16.msra.mxu0 %v576
      %2862 = vmatprep.subr.bf16.mxu0 0
      %2863 = vmatpush1.bf16.msra.mxu0 %v577
      %2864 = vmatprep.subr.bf16.mxu0 0
      %2865 = vmatpush1.bf16.msra.mxu0 %v578
      %2866 = vmatprep.subr.bf16.mxu0 0
      %2867 = vmatpush1.bf16.msra.mxu0 %v579
      %2868 = vmatprep.subr.bf16.mxu0 0
      %2869 = vmatpush1.bf16.msra.mxu0 %v580
      %2870 = vmatprep.subr.bf16.mxu0 0
      %2871 = vmatpush1.bf16.msra.mxu0 %v581
      %2872 = vmatprep.subr.bf16.mxu0 0
      %2873 = vmatpush1.bf16.msra.mxu0 %v582
      %2874 = vmatprep.subr.bf16.mxu0 0
      %2875 = vmatpush1.bf16.msra.mxu0 %v583
      %2876 = vmatprep.mubr.bf16.mxu0 %v1426
      %2877 = vmatmul.mubr.bf16.gmra.mrb[0].mxu0 %v1425
      %v2878 = vpop.f32.mrb[0].mxu0
      %v2879 = vadd.f32 0.0, %v2878
      %v2880 = vpop.f32.mrb[0].mxu0
      %v2881 = vpop.f32.mrb[0].mxu0
      %v2882 = vadd.f32 0.0, %v2881
      %v2883 = vpop.f32.mrb[0].mxu0
      %2884 = vmatprep.mubr.bf16.mxu0 %v1430
      %2885 = vmatmul.mubr.bf16.gmra.mrb[0].mxu0 %v1429
      %v2886 = vpop.f32.mrb[0].mxu0
      %v2887 = vadd.f32 0.0, %v2886
      %v2888 = vpop.f32.mrb[0].mxu0
      %v2889 = vpop.f32.mrb[0].mxu0
      %v2890 = vadd.f32 0.0, %v2889
      %v2891 = vpop.f32.mrb[0].mxu0
      %2892 = vmatprep.mubr.bf16.mxu0 %v1434
      %2893 = vmatmul.mubr.bf16.gmra.mrb[0].mxu0 %v1433
      %v2894 = vpop.f32.mrb[0].mxu0
      %v2895 = vadd.f32 0.0, %v2894
      %v2896 = vpop.f32.mrb[0].mxu0
      %v2897 = vpop.f32.mrb[0].mxu0
      %v2898 = vadd.f32 0.0, %v2897
      %v2899 = vpop.f32.mrb[0].mxu0
      %2900 = vmatprep.mubr.bf16.mxu0 %v1438
      %2901 = vmatmul.mubr.bf16.gmra.mrb[0].mxu0 %v1437
      %v2902 = vpop.f32.mrb[0].mxu0
      %v2903 = vadd.f32 0.0, %v2902
      %v2904 = vpop.f32.mrb[0].mxu0
      %v2905 = vpop.f32.mrb[0].mxu0
      %v2906 = vadd.f32 0.0, %v2905
      %v2907 = vpop.f32.mrb[0].mxu0
      %2908 = vmatprep.mubr.bf16.mxu0 %v1442
      %2909 = vmatmul.mubr.bf16.gmra.mrb[0].mxu0 %v1441
      %v2910 = vpop.f32.mrb[0].mxu0
      %v2911 = vadd.f32 0.0, %v2910
      %v2912 = vpop.f32.mrb[0].mxu0
      %v2913 = vpop.f32.mrb[0].mxu0
      %v2914 = vadd.f32 0.0, %v2913
      %v2915 = vpop.f32.mrb[0].mxu0
      %2916 = vmatprep.mubr.bf16.mxu0 %v1446
      %2917 = vmatmul.mubr.bf16.gmra.mrb[0].mxu0 %v1445
      %v2918 = vpop.f32.mrb[0].mxu0
      %v2919 = vadd.f32 0.0, %v2918
      %v2920 = vpop.f32.mrb[0].mxu0
      %v2921 = vpop.f32.mrb[0].mxu0
      %v2922 = vadd.f32 0.0, %v2921
      %v2923 = vpop.f32.mrb[0].mxu0
      %2924 = vmatprep.mubr.bf16.mxu0 %v1450
      %2925 = vmatmul.mubr.bf16.gmra.mrb[0].mxu0 %v1449
      %v2926 = vpop.f32.mrb[0].mxu0
      %v2927 = vadd.f32 0.0, %v2926
      %v2928 = vpop.f32.mrb[0].mxu0
      %v2929 = vpop.f32.mrb[0].mxu0
      %v2930 = vadd.f32 0.0, %v2929
      %v2931 = vpop.f32.mrb[0].mxu0
      %2932 = vmatprep.mubr.bf16.mxu0 %v1454
      %2933 = vmatmul.mubr.bf16.gmra.mrb[0].mxu0 %v1453
      %v2934 = vpop.f32.mrb[0].mxu0
      %v2935 = vadd.f32 0.0, %v2934
      %v2936 = vpop.f32.mrb[0].mxu0
      %v2937 = vpop.f32.mrb[0].mxu0
      %v2938 = vadd.f32 0.0, %v2937
      %v2939 = vpop.f32.mrb[0].mxu0
      %2940 = vmatprep.mubr.bf16.mxu0 %v1458
      %2941 = vmatmul.mubr.bf16.gmra.mrb[0].mxu0 %v1457
      %v2942 = vpop.f32.mrb[0].mxu0
      %v2943 = vadd.f32 0.0, %v2942
      %v2944 = vpop.f32.mrb[0].mxu0
      %v2945 = vpop.f32.mrb[0].mxu0
      %v2946 = vadd.f32 0.0, %v2945
      %v2947 = vpop.f32.mrb[0].mxu0
      %2948 = vmatprep.mubr.bf16.mxu0 %v1462
      %2949 = vmatmul.mubr.bf16.gmra.mrb[0].mxu0 %v1461
      %v2950 = vpop.f32.mrb[0].mxu0
      %v2951 = vadd.f32 0.0, %v2950
      %v2952 = vpop.f32.mrb[0].mxu0
      %v2953 = vpop.f32.mrb[0].mxu0
      %v2954 = vadd.f32 0.0, %v2953
      %v2955 = vpop.f32.mrb[0].mxu0
      %2956 = vmatprep.mubr.bf16.mxu0 %v1466
      %2957 = vmatmul.mubr.bf16.gmra.mrb[0].mxu0 %v1465
      %v2958 = vpop.f32.mrb[0].mxu0
      %v2959 = vadd.f32 0.0, %v2958
      %v2960 = vpop.f32.mrb[0].mxu0
      %v2961 = vpop.f32.mrb[0].mxu0
      %v2962 = vadd.f32 0.0, %v2961
      %v2963 = vpop.f32.mrb[0].mxu0
      %2964 = vmatprep.mubr.bf16.mxu0 %v1470
      %2965 = vmatmul.mubr.bf16.gmra.mrb[0].mxu0 %v1469
      %v2966 = vpop.f32.mrb[0].mxu0
      %v2967 = vadd.f32 0.0, %v2966
      %v2968 = vpop.f32.mrb[0].mxu0
      %v2969 = vpop.f32.mrb[0].mxu0
      %v2970 = vadd.f32 0.0, %v2969
      %v2971 = vpop.f32.mrb[0].mxu0
      %2972 = vmatprep.mubr.bf16.mxu0 %v1474
      %2973 = vmatmul.mubr.bf16.gmra.mrb[0].mxu0 %v1473
      %v2974 = vpop.f32.mrb[0].mxu0
      %v2975 = vadd.f32 0.0, %v2974
      %v2976 = vpop.f32.mrb[0].mxu0
      %v2977 = vpop.f32.mrb[0].mxu0
      %v2978 = vadd.f32 0.0, %v2977
      %v2979 = vpop.f32.mrb[0].mxu0
      %2980 = vmatprep.mubr.bf16.mxu0 %v1478
      %2981 = vmatmul.mubr.bf16.gmra.mrb[0].mxu0 %v1477
      %v2982 = vpop.f32.mrb[0].mxu0
      %v2983 = vadd.f32 0.0, %v2982
      %v2984 = vpop.f32.mrb[0].mxu0
      %v2985 = vpop.f32.mrb[0].mxu0
      %v2986 = vadd.f32 0.0, %v2985
      %v2987 = vpop.f32.mrb[0].mxu0
      %2988 = vmatprep.mubr.bf16.mxu0 %v1482
      %2989 = vmatmul.mubr.bf16.gmra.mrb[0].mxu0 %v1481
      %v2990 = vpop.f32.mrb[0].mxu0
      %v2991 = vadd.f32 0.0, %v2990
      %v2992 = vpop.f32.mrb[0].mxu0
      %v2993 = vpop.f32.mrb[0].mxu0
      %v2994 = vadd.f32 0.0, %v2993
      %v2995 = vpop.f32.mrb[0].mxu0
      %2996 = vmatprep.mubr.bf16.mxu0 %v1486
      %2997 = vmatmul.mubr.bf16.gmra.mrb[0].mxu0 %v1485
      %v2998 = vpop.f32.mrb[0].mxu0
      %v2999 = vadd.f32 0.0, %v2998
      %v3000 = vpop.f32.mrb[0].mxu0
      %v3001 = vpop.f32.mrb[0].mxu0
      %v3002 = vadd.f32 0.0, %v3001
      %v3003 = vpop.f32.mrb[0].mxu0
      %3004 = vmatprep.mubr.bf16.mxu0 %v1490
      %3005 = vmatmul.mubr.bf16.gmra.mrb[0].mxu0 %v1489
      %v3006 = vpop.f32.mrb[0].mxu0
      %v3007 = vadd.f32 0.0, %v3006
      %v3008 = vpop.f32.mrb[0].mxu0
      %v3009 = vpop.f32.mrb[0].mxu0
      %v3010 = vadd.f32 0.0, %v3009
      %v3011 = vpop.f32.mrb[0].mxu0
      %3012 = vmatprep.mubr.bf16.mxu0 %v1494
      %3013 = vmatmul.mubr.bf16.gmra.mrb[0].mxu0 %v1493
      %v3014 = vpop.f32.mrb[0].mxu0
      %v3015 = vadd.f32 0.0, %v3014
      %v3016 = vpop.f32.mrb[0].mxu0
      %v3017 = vpop.f32.mrb[0].mxu0
      %v3018 = vadd.f32 0.0, %v3017
      %v3019 = vpop.f32.mrb[0].mxu0
      %3020 = vmatprep.mubr.bf16.mxu0 %v1498
      %3021 = vmatmul.mubr.bf16.gmra.mrb[0].mxu0 %v1497
      %v3022 = vpop.f32.mrb[0].mxu0
      %v3023 = vadd.f32 0.0, %v3022
      %v3024 = vpop.f32.mrb[0].mxu0
      %v3025 = vpop.f32.mrb[0].mxu0
      %v3026 = vadd.f32 0.0, %v3025
      %v3027 = vpop.f32.mrb[0].mxu0
      %3028 = vmatprep.mubr.bf16.mxu0 %v1502
      %3029 = vmatmul.mubr.bf16.gmra.mrb[0].mxu0 %v1501
      %v3030 = vpop.f32.mrb[0].mxu0
      %v3031 = vadd.f32 0.0, %v3030
      %v3032 = vpop.f32.mrb[0].mxu0
      %v3033 = vpop.f32.mrb[0].mxu0
      %v3034 = vadd.f32 0.0, %v3033
      %v3035 = vpop.f32.mrb[0].mxu0
      %3036 = vmatprep.mubr.bf16.mxu0 %v1506
      %3037 = vmatmul.mubr.bf16.gmra.mrb[0].mxu0 %v1505
      %v3038 = vpop.f32.mrb[0].mxu0
      %v3039 = vadd.f32 0.0, %v3038
      %v3040 = vpop.f32.mrb[0].mxu0
      %v3041 = vpop.f32.mrb[0].mxu0
      %v3042 = vadd.f32 0.0, %v3041
      %v3043 = vpop.f32.mrb[0].mxu0
      %3044 = vmatprep.mubr.bf16.mxu0 %v1510
      %3045 = vmatmul.mubr.bf16.gmra.mrb[0].mxu0 %v1509
      %v3046 = vpop.f32.mrb[0].mxu0
      %v3047 = vadd.f32 0.0, %v3046
      %v3048 = vpop.f32.mrb[0].mxu0
      %v3049 = vpop.f32.mrb[0].mxu0
      %v3050 = vadd.f32 0.0, %v3049
      %v3051 = vpop.f32.mrb[0].mxu0
      %3052 = vmatprep.mubr.bf16.mxu0 %v1514
      %3053 = vmatmul.mubr.bf16.gmra.mrb[0].mxu0 %v1513
      %v3054 = vpop.f32.mrb[0].mxu0
      %v3055 = vadd.f32 0.0, %v3054
      %v3056 = vpop.f32.mrb[0].mxu0
      %v3057 = vpop.f32.mrb[0].mxu0
      %v3058 = vadd.f32 0.0, %v3057
      %v3059 = vpop.f32.mrb[0].mxu0
      %3060 = vmatprep.mubr.bf16.mxu0 %v1518
      %3061 = vmatmul.mubr.bf16.gmra.mrb[0].mxu0 %v1517
      %v3062 = vpop.f32.mrb[0].mxu0
      %v3063 = vadd.f32 0.0, %v3062
      %v3064 = vpop.f32.mrb[0].mxu0
      %v3065 = vpop.f32.mrb[0].mxu0
      %v3066 = vadd.f32 0.0, %v3065
      %v3067 = vpop.f32.mrb[0].mxu0
      %3068 = vmatprep.mubr.bf16.mxu0 %v1522
      %3069 = vmatmul.mubr.bf16.gmra.mrb[0].mxu0 %v1521
      %v3070 = vpop.f32.mrb[0].mxu0
      %v3071 = vadd.f32 0.0, %v3070
      %v3072 = vpop.f32.mrb[0].mxu0
      %v3073 = vpop.f32.mrb[0].mxu0
      %v3074 = vadd.f32 0.0, %v3073
      %v3075 = vpop.f32.mrb[0].mxu0
      %3076 = vmatprep.mubr.bf16.mxu0 %v1526
      %3077 = vmatmul.mubr.bf16.gmra.mrb[0].mxu0 %v1525
      %v3078 = vpop.f32.mrb[0].mxu0
      %v3079 = vadd.f32 0.0, %v3078
      %v3080 = vpop.f32.mrb[0].mxu0
      %v3081 = vpop.f32.mrb[0].mxu0
      %v3082 = vadd.f32 0.0, %v3081
      %v3083 = vpop.f32.mrb[0].mxu0
      %3084 = vdwg.mxu0
      %3085 = vmatprep.subr.bf16.mxu0 0
      %3086 = vmatpush1.bf16.msra.mxu0 %v584
      %3087 = vmatprep.subr.bf16.mxu0 0
      %3088 = vmatpush1.bf16.msra.mxu0 %v585
      %3089 = vmatprep.subr.bf16.mxu0 0
      %3090 = vmatpush1.bf16.msra.mxu0 %v586
      %3091 = vmatprep.subr.bf16.mxu0 0
      %3092 = vmatpush1.bf16.msra.mxu0 %v587
      %3093 = vmatprep.subr.bf16.mxu0 0
      %3094 = vmatpush1.bf16.msra.mxu0 %v588
      %3095 = vmatprep.subr.bf16.mxu0 0
      %3096 = vmatpush1.bf16.msra.mxu0 %v589
      %3097 = vmatprep.subr.bf16.mxu0 0
      %3098 = vmatpush1.bf16.msra.mxu0 %v590
      %3099 = vmatprep.subr.bf16.mxu0 0
      %3100 = vmatpush1.bf16.msra.mxu0 %v591
      %3101 = vmatprep.subr.bf16.mxu0 0
      %3102 = vmatpush1.bf16.msra.mxu0 %v592
      %3103 = vmatprep.subr.bf16.mxu0 0
      %3104 = vmatpush1.bf16.msra.mxu0 0
      %3105 = vmatprep.subr.bf16.mxu0 0
      %3106 = vmatpush1.bf16.msra.mxu0 0
      %3107 = vmatprep.subr.bf16.mxu0 0
      %3108 = vmatpush1.bf16.msra.mxu0 0
      %3109 = vmatprep.subr.bf16.mxu0 0
      %3110 = vmatpush1.bf16.msra.mxu0 0
      %3111 = vmatprep.subr.bf16.mxu0 0
      %3112 = vmatpush1.bf16.msra.mxu0 0
      %3113 = vmatprep.subr.bf16.mxu0 0
      %3114 = vmatpush1.bf16.msra.mxu0 0
      %3115 = vmatprep.subr.bf16.mxu0 0
      %3116 = vmatpush1.bf16.msra.mxu0 0
      %3117 = vmatprep.mubr.bf16.mxu0 %v1791
      %3118 = vmatmul.mubr.bf16.gmra.mrb[0].mxu0 %v1427
      %v3119 = vpop.f32.mrb[0].mxu0
      %v3120 = vadd.f32 %v2879, %v3119
      %v3121 = vpop.f32.mrb[0].mxu0
      %v3122 = vpop.f32.mrb[0].mxu0
      %v3123 = vadd.f32 %v2882, %v3122
      %v3124 = vpop.f32.mrb[0].mxu0
      %3125 = vmatprep.mubr.bf16.mxu0 %v1794
      %3126 = vmatmul.mubr.bf16.gmra.mrb[0].mxu0 %v1431
      %v3127 = vpop.f32.mrb[0].mxu0
      %v3128 = vadd.f32 %v2887, %v3127
      %v3129 = vpop.f32.mrb[0].mxu0
      %v3130 = vpop.f32.mrb[0].mxu0
      %v3131 = vadd.f32 %v2890, %v3130
      %v3132 = vpop.f32.mrb[0].mxu0
      %3133 = vmatprep.mubr.bf16.mxu0 %v1797
      %3134 = vmatmul.mubr.bf16.gmra.mrb[0].mxu0 %v1435
      %v3135 = vpop.f32.mrb[0].mxu0
      %v3136 = vadd.f32 %v2895, %v3135
      %v3137 = vpop.f32.mrb[0].mxu0
      %v3138 = vpop.f32.mrb[0].mxu0
      %v3139 = vadd.f32 %v2898, %v3138
      %v3140 = vpop.f32.mrb[0].mxu0
      %3141 = vmatprep.mubr.bf16.mxu0 %v1800
      %3142 = vmatmul.mubr.bf16.gmra.mrb[0].mxu0 %v1439
      %v3143 = vpop.f32.mrb[0].mxu0
      %v3144 = vadd.f32 %v2903, %v3143
      %v3145 = vpop.f32.mrb[0].mxu0
      %v3146 = vpop.f32.mrb[0].mxu0
      %v3147 = vadd.f32 %v2906, %v3146
      %v3148 = vpop.f32.mrb[0].mxu0
      %3149 = vmatprep.mubr.bf16.mxu0 %v1803
      %3150 = vmatmul.mubr.bf16.gmra.mrb[0].mxu0 %v1443
      %v3151 = vpop.f32.mrb[0].mxu0
      %v3152 = vadd.f32 %v2911, %v3151
      %v3153 = vpop.f32.mrb[0].mxu0
      %v3154 = vpop.f32.mrb[0].mxu0
      %v3155 = vadd.f32 %v2914, %v3154
      %v3156 = vpop.f32.mrb[0].mxu0
      %3157 = vmatprep.mubr.bf16.mxu0 %v1806
      %3158 = vmatmul.mubr.bf16.gmra.mrb[0].mxu0 %v1447
      %v3159 = vpop.f32.mrb[0].mxu0
      %v3160 = vadd.f32 %v2919, %v3159
      %v3161 = vpop.f32.mrb[0].mxu0
      %v3162 = vpop.f32.mrb[0].mxu0
      %v3163 = vadd.f32 %v2922, %v3162
      %v3164 = vpop.f32.mrb[0].mxu0
      %3165 = vmatprep.mubr.bf16.mxu0 %v1809
      %3166 = vmatmul.mubr.bf16.gmra.mrb[0].mxu0 %v1451
      %v3167 = vpop.f32.mrb[0].mxu0
      %v3168 = vadd.f32 %v2927, %v3167
      %v3169 = vpop.f32.mrb[0].mxu0
      %v3170 = vpop.f32.mrb[0].mxu0
      %v3171 = vadd.f32 %v2930, %v3170
      %v3172 = vpop.f32.mrb[0].mxu0
      %3173 = vmatprep.mubr.bf16.mxu0 %v1812
      %3174 = vmatmul.mubr.bf16.gmra.mrb[0].mxu0 %v1455
      %v3175 = vpop.f32.mrb[0].mxu0
      %v3176 = vadd.f32 %v2935, %v3175
      %v3177 = vpop.f32.mrb[0].mxu0
      %v3178 = vpop.f32.mrb[0].mxu0
      %v3179 = vadd.f32 %v2938, %v3178
      %v3180 = vpop.f32.mrb[0].mxu0
      %3181 = vmatprep.mubr.bf16.mxu0 %v1815
      %3182 = vmatmul.mubr.bf16.gmra.mrb[0].mxu0 %v1459
      %v3183 = vpop.f32.mrb[0].mxu0
      %v3184 = vadd.f32 %v2943, %v3183
      %v3185 = vpop.f32.mrb[0].mxu0
      %v3186 = vpop.f32.mrb[0].mxu0
      %v3187 = vadd.f32 %v2946, %v3186
      %v3188 = vpop.f32.mrb[0].mxu0
      %3189 = vmatprep.mubr.bf16.mxu0 %v1818
      %3190 = vmatmul.mubr.bf16.gmra.mrb[0].mxu0 %v1463
      %v3191 = vpop.f32.mrb[0].mxu0
      %v3192 = vadd.f32 %v2951, %v3191
      %v3193 = vpop.f32.mrb[0].mxu0
      %v3194 = vpop.f32.mrb[0].mxu0
      %v3195 = vadd.f32 %v2954, %v3194
      %v3196 = vpop.f32.mrb[0].mxu0
      %3197 = vmatprep.mubr.bf16.mxu0 %v1821
      %3198 = vmatmul.mubr.bf16.gmra.mrb[0].mxu0 %v1467
      %v3199 = vpop.f32.mrb[0].mxu0
      %v3200 = vadd.f32 %v2959, %v3199
      %v3201 = vpop.f32.mrb[0].mxu0
      %v3202 = vpop.f32.mrb[0].mxu0
      %v3203 = vadd.f32 %v2962, %v3202
      %v3204 = vpop.f32.mrb[0].mxu0
      %3205 = vmatprep.mubr.bf16.mxu0 %v1824
      %3206 = vmatmul.mubr.bf16.gmra.mrb[0].mxu0 %v1471
      %v3207 = vpop.f32.mrb[0].mxu0
      %v3208 = vadd.f32 %v2967, %v3207
      %v3209 = vpop.f32.mrb[0].mxu0
      %v3210 = vpop.f32.mrb[0].mxu0
      %v3211 = vadd.f32 %v2970, %v3210
      %v3212 = vpop.f32.mrb[0].mxu0
      %3213 = vmatprep.mubr.bf16.mxu0 %v1827
      %3214 = vmatmul.mubr.bf16.gmra.mrb[0].mxu0 %v1475
      %v3215 = vpop.f32.mrb[0].mxu0
      %v3216 = vadd.f32 %v2975, %v3215
      %v3217 = vpop.f32.mrb[0].mxu0
      %v3218 = vpop.f32.mrb[0].mxu0
      %v3219 = vadd.f32 %v2978, %v3218
      %v3220 = vpop.f32.mrb[0].mxu0
      %3221 = vmatprep.mubr.bf16.mxu0 %v1830
      %3222 = vmatmul.mubr.bf16.gmra.mrb[0].mxu0 %v1479
      %v3223 = vpop.f32.mrb[0].mxu0
      %v3224 = vadd.f32 %v2983, %v3223
      %v3225 = vpop.f32.mrb[0].mxu0
      %v3226 = vpop.f32.mrb[0].mxu0
      %v3227 = vadd.f32 %v2986, %v3226
      %v3228 = vpop.f32.mrb[0].mxu0
      %3229 = vmatprep.mubr.bf16.mxu0 %v1833
      %3230 = vmatmul.mubr.bf16.gmra.mrb[0].mxu0 %v1483
      %v3231 = vpop.f32.mrb[0].mxu0
      %v3232 = vadd.f32 %v2991, %v3231
      %v3233 = vpop.f32.mrb[0].mxu0
      %v3234 = vpop.f32.mrb[0].mxu0
      %v3235 = vadd.f32 %v2994, %v3234
      %v3236 = vpop.f32.mrb[0].mxu0
      %3237 = vmatprep.mubr.bf16.mxu0 %v1836
      %3238 = vmatmul.mubr.bf16.gmra.mrb[0].mxu0 %v1487
      %v3239 = vpop.f32.mrb[0].mxu0
      %v3240 = vadd.f32 %v2999, %v3239
      %v3241 = vpop.f32.mrb[0].mxu0
      %v3242 = vpop.f32.mrb[0].mxu0
      %v3243 = vadd.f32 %v3002, %v3242
      %v3244 = vpop.f32.mrb[0].mxu0
      %3245 = vmatprep.mubr.bf16.mxu0 %v1839
      %3246 = vmatmul.mubr.bf16.gmra.mrb[0].mxu0 %v1491
      %v3247 = vpop.f32.mrb[0].mxu0
      %v3248 = vadd.f32 %v3007, %v3247
      %v3249 = vpop.f32.mrb[0].mxu0
      %v3250 = vpop.f32.mrb[0].mxu0
      %v3251 = vadd.f32 %v3010, %v3250
      %v3252 = vpop.f32.mrb[0].mxu0
      %3253 = vmatprep.mubr.bf16.mxu0 %v1842
      %3254 = vmatmul.mubr.bf16.gmra.mrb[0].mxu0 %v1495
      %v3255 = vpop.f32.mrb[0].mxu0
      %v3256 = vadd.f32 %v3015, %v3255
      %v3257 = vpop.f32.mrb[0].mxu0
      %v3258 = vpop.f32.mrb[0].mxu0
      %v3259 = vadd.f32 %v3018, %v3258
      %v3260 = vpop.f32.mrb[0].mxu0
      %3261 = vmatprep.mubr.bf16.mxu0 %v1845
      %3262 = vmatmul.mubr.bf16.gmra.mrb[0].mxu0 %v1499
      %v3263 = vpop.f32.mrb[0].mxu0
      %v3264 = vadd.f32 %v3023, %v3263
      %v3265 = vpop.f32.mrb[0].mxu0
      %v3266 = vpop.f32.mrb[0].mxu0
      %v3267 = vadd.f32 %v3026, %v3266
      %v3268 = vpop.f32.mrb[0].mxu0
      %3269 = vmatprep.mubr.bf16.mxu0 %v1848
      %3270 = vmatmul.mubr.bf16.gmra.mrb[0].mxu0 %v1503
      %v3271 = vpop.f32.mrb[0].mxu0
      %v3272 = vadd.f32 %v3031, %v3271
      %v3273 = vpop.f32.mrb[0].mxu0
      %v3274 = vpop.f32.mrb[0].mxu0
      %v3275 = vadd.f32 %v3034, %v3274
      %v3276 = vpop.f32.mrb[0].mxu0
      %3277 = vmatprep.mubr.bf16.mxu0 %v1851
      %3278 = vmatmul.mubr.bf16.gmra.mrb[0].mxu0 %v1507
      %v3279 = vpop.f32.mrb[0].mxu0
      %v3280 = vadd.f32 %v3039, %v3279
      %v3281 = vpop.f32.mrb[0].mxu0
      %v3282 = vpop.f32.mrb[0].mxu0
      %v3283 = vadd.f32 %v3042, %v3282
      %v3284 = vpop.f32.mrb[0].mxu0
      %3285 = vmatprep.mubr.bf16.mxu0 %v1854
      %3286 = vmatmul.mubr.bf16.gmra.mrb[0].mxu0 %v1511
      %v3287 = vpop.f32.mrb[0].mxu0
      %v3288 = vadd.f32 %v3047, %v3287
      %v3289 = vpop.f32.mrb[0].mxu0
      %v3290 = vpop.f32.mrb[0].mxu0
      %v3291 = vadd.f32 %v3050, %v3290
      %v3292 = vpop.f32.mrb[0].mxu0
      %3293 = vmatprep.mubr.bf16.mxu0 %v1857
      %3294 = vmatmul.mubr.bf16.gmra.mrb[0].mxu0 %v1515
      %v3295 = vpop.f32.mrb[0].mxu0
      %v3296 = vadd.f32 %v3055, %v3295
      %v3297 = vpop.f32.mrb[0].mxu0
      %v3298 = vpop.f32.mrb[0].mxu0
      %v3299 = vadd.f32 %v3058, %v3298
      %v3300 = vpop.f32.mrb[0].mxu0
      %3301 = vmatprep.mubr.bf16.mxu0 %v1860
      %3302 = vmatmul.mubr.bf16.gmra.mrb[0].mxu0 %v1519
      %v3303 = vpop.f32.mrb[0].mxu0
      %v3304 = vadd.f32 %v3063, %v3303
      %v3305 = vpop.f32.mrb[0].mxu0
      %v3306 = vpop.f32.mrb[0].mxu0
      %v3307 = vadd.f32 %v3066, %v3306
      %v3308 = vpop.f32.mrb[0].mxu0
      %3309 = vmatprep.mubr.bf16.mxu0 %v1863
      %3310 = vmatmul.mubr.bf16.gmra.mrb[0].mxu0 %v1523
      %v3311 = vpop.f32.mrb[0].mxu0
      %v3312 = vadd.f32 %v3071, %v3311
      %v3313 = vpop.f32.mrb[0].mxu0
      %v3314 = vpop.f32.mrb[0].mxu0
      %v3315 = vadd.f32 %v3074, %v3314
      %v3316 = vpop.f32.mrb[0].mxu0
      %3317 = vmatprep.mubr.bf16.mxu0 %v1866
      %3318 = vmatmul.mubr.bf16.gmra.mrb[0].mxu0 %v1527
      %v3319 = vpop.f32.mrb[0].mxu0
      %v3320 = vadd.f32 %v3079, %v3319
      %v3321 = vpop.f32.mrb[0].mxu0
      %v3322 = vpop.f32.mrb[0].mxu0
      %v3323 = vadd.f32 %v3082, %v3322
      %v3324 = vpop.f32.mrb[0].mxu0
      %3325 = vdwg.mxu0
      %v3326 = vadd.f32 %v2430, %v2638
      %v3327 = vadd.f32 %v2433, %v2641
      %v3328 = vadd.f32 %v2438, %v2646
      %v3329 = vadd.f32 %v2441, %v2649
      %v3330 = vadd.f32 %v2446, %v2654
      %v3331 = vadd.f32 %v2449, %v2657
      %v3332 = vadd.f32 %v2454, %v2662
      %v3333 = vadd.f32 %v2457, %v2665
      %v3334 = vadd.f32 %v2462, %v2670
      %v3335 = vadd.f32 %v2465, %v2673
      %v3336 = vadd.f32 %v2470, %v2678
      %v3337 = vadd.f32 %v2473, %v2681
      %v3338 = vadd.f32 %v2478, %v2686
      %v3339 = vadd.f32 %v2481, %v2689
      %v3340 = vadd.f32 %v2486, %v2694
      %v3341 = vadd.f32 %v2489, %v2697
      %v3342 = vadd.f32 %v2494, %v2702
      %v3343 = vadd.f32 %v2497, %v2705
      %v3344 = vadd.f32 %v2502, %v2710
      %v3345 = vadd.f32 %v2505, %v2713
      %v3346 = vadd.f32 %v2510, %v2718
      %v3347 = vadd.f32 %v2513, %v2721
      %v3348 = vadd.f32 %v2518, %v2726
      %v3349 = vadd.f32 %v2521, %v2729
      %v3350 = vadd.f32 %v2526, %v2734
      %v3351 = vadd.f32 %v2529, %v2737
      %v3352 = vadd.f32 %v2534, %v2742
      %v3353 = vadd.f32 %v2537, %v2745
      %v3354 = vadd.f32 %v2542, %v2750
      %v3355 = vadd.f32 %v2545, %v2753
      %v3356 = vadd.f32 %v2550, %v2758
      %v3357 = vadd.f32 %v2553, %v2761
      %v3358 = vadd.f32 %v2558, %v2766
      %v3359 = vadd.f32 %v2561, %v2769
      %v3360 = vadd.f32 %v2566, %v2774
      %v3361 = vadd.f32 %v2569, %v2777
      %v3362 = vadd.f32 %v2574, %v2782
      %v3363 = vadd.f32 %v2577, %v2785
      %v3364 = vadd.f32 %v2582, %v2790
      %v3365 = vadd.f32 %v2585, %v2793
      %v3366 = vadd.f32 %v2590, %v2798
      %v3367 = vadd.f32 %v2593, %v2801
      %v3368 = vadd.f32 %v2598, %v2806
      %v3369 = vadd.f32 %v2601, %v2809
      %v3370 = vadd.f32 %v2606, %v2814
      %v3371 = vadd.f32 %v2609, %v2817
      %v3372 = vadd.f32 %v2614, %v2822
      %v3373 = vadd.f32 %v2617, %v2825
      %v3374 = vadd.f32 %v2622, %v2830
      %v3375 = vadd.f32 %v2625, %v2833
      %v3376 = vadd.f32 %v2630, %v2838
      %v3377 = vadd.f32 %v2633, %v2841
      %v3378 = vadd.f32 %v3326, %v3120
      %v3379 = vadd.f32 %v3327, %v3123
      %v3380 = vadd.f32 %v3328, %v3128
      %v3381 = vadd.f32 %v3329, %v3131
      %v3382 = vadd.f32 %v3330, %v3136
      %v3383 = vadd.f32 %v3331, %v3139
      %v3384 = vadd.f32 %v3332, %v3144
      %v3385 = vadd.f32 %v3333, %v3147
      %v3386 = vadd.f32 %v3334, %v3152
      %v3387 = vadd.f32 %v3335, %v3155
      %v3388 = vadd.f32 %v3336, %v3160
      %v3389 = vadd.f32 %v3337, %v3163
      %v3390 = vadd.f32 %v3338, %v3168
      %v3391 = vadd.f32 %v3339, %v3171
      %v3392 = vadd.f32 %v3340, %v3176
      %v3393 = vadd.f32 %v3341, %v3179
      %v3394 = vadd.f32 %v3342, %v3184
      %v3395 = vadd.f32 %v3343, %v3187
      %v3396 = vadd.f32 %v3344, %v3192
      %v3397 = vadd.f32 %v3345, %v3195
      %v3398 = vadd.f32 %v3346, %v3200
      %v3399 = vadd.f32 %v3347, %v3203
      %v3400 = vadd.f32 %v3348, %v3208
      %v3401 = vadd.f32 %v3349, %v3211
      %v3402 = vadd.f32 %v3350, %v3216
      %v3403 = vadd.f32 %v3351, %v3219
      %v3404 = vadd.f32 %v3352, %v3224
      %v3405 = vadd.f32 %v3353, %v3227
      %v3406 = vadd.f32 %v3354, %v3232
      %v3407 = vadd.f32 %v3355, %v3235
      %v3408 = vadd.f32 %v3356, %v3240
      %v3409 = vadd.f32 %v3357, %v3243
      %v3410 = vadd.f32 %v3358, %v3248
      %v3411 = vadd.f32 %v3359, %v3251
      %v3412 = vadd.f32 %v3360, %v3256
      %v3413 = vadd.f32 %v3361, %v3259
      %v3414 = vadd.f32 %v3362, %v3264
      %v3415 = vadd.f32 %v3363, %v3267
      %v3416 = vadd.f32 %v3364, %v3272
      %v3417 = vadd.f32 %v3365, %v3275
      %v3418 = vadd.f32 %v3366, %v3280
      %v3419 = vadd.f32 %v3367, %v3283
      %v3420 = vadd.f32 %v3368, %v3288
      %v3421 = vadd.f32 %v3369, %v3291
      %v3422 = vadd.f32 %v3370, %v3296
      %v3423 = vadd.f32 %v3371, %v3299
      %v3424 = vadd.f32 %v3372, %v3304
      %v3425 = vadd.f32 %v3373, %v3307
      %v3426 = vadd.f32 %v3374, %v3312
      %v3427 = vadd.f32 %v3375, %v3315
      %v3428 = vadd.f32 %v3376, %v3320
      %v3429 = vadd.f32 %v3377, %v3323
      %v3430 = vmul.f32 %v3378, %v3378
      %v3431 = vmul.f32 %v3379, %v3379
      %v3432 = vmul.f32 %v3380, %v3380
      %v3433 = vmul.f32 %v3381, %v3381
      %v3434 = vmul.f32 %v3382, %v3382
      %v3435 = vmul.f32 %v3383, %v3383
      %v3436 = vmul.f32 %v3384, %v3384
      %v3437 = vmul.f32 %v3385, %v3385
      %v3438 = vmul.f32 %v3386, %v3386
      %v3439 = vmul.f32 %v3387, %v3387
      %v3440 = vmul.f32 %v3388, %v3388
      %v3441 = vmul.f32 %v3389, %v3389
      %v3442 = vmul.f32 %v3390, %v3390
      %v3443 = vmul.f32 %v3391, %v3391
      %v3444 = vmul.f32 %v3392, %v3392
      %v3445 = vmul.f32 %v3393, %v3393
      %v3446 = vmul.f32 %v3394, %v3394
      %v3447 = vmul.f32 %v3395, %v3395
      %v3448 = vmul.f32 %v3396, %v3396
      %v3449 = vmul.f32 %v3397, %v3397
      %v3450 = vmul.f32 %v3398, %v3398
      %v3451 = vmul.f32 %v3399, %v3399
      %v3452 = vmul.f32 %v3400, %v3400
      %v3453 = vmul.f32 %v3401, %v3401
      %v3454 = vmul.f32 %v3402, %v3402
      %v3455 = vmul.f32 %v3403, %v3403
      %v3456 = vmul.f32 %v3404, %v3404
      %v3457 = vmul.f32 %v3405, %v3405
      %v3458 = vmul.f32 %v3406, %v3406
      %v3459 = vmul.f32 %v3407, %v3407
      %v3460 = vmul.f32 %v3408, %v3408
      %v3461 = vmul.f32 %v3409, %v3409
      %v3462 = vmul.f32 %v3410, %v3410
      %v3463 = vmul.f32 %v3411, %v3411
      %v3464 = vmul.f32 %v3412, %v3412
      %v3465 = vmul.f32 %v3413, %v3413
      %v3466 = vmul.f32 %v3414, %v3414
      %v3467 = vmul.f32 %v3415, %v3415
      %v3468 = vmul.f32 %v3416, %v3416
      %v3469 = vmul.f32 %v3417, %v3417
      %v3470 = vmul.f32 %v3418, %v3418
      %v3471 = vmul.f32 %v3419, %v3419
      %v3472 = vmul.f32 %v3420, %v3420
      %v3473 = vmul.f32 %v3421, %v3421
      %v3474 = vmul.f32 %v3422, %v3422
      %v3475 = vmul.f32 %v3423, %v3423
      %v3476 = vmul.f32 %v3424, %v3424
      %v3477 = vmul.f32 %v3425, %v3425
      %v3478 = vmul.f32 %v3426, %v3426
      %v3479 = vmul.f32 %v3427, %v3427
      %v3480 = vmul.f32 %v3428, %v3428
      %v3481 = vmul.f32 %v3429, %v3429
      %v3482 = vadd.f32 %v3430, %v3456
      %v3483 = vadd.f32 %v3431, %v3457
      %v3484 = vadd.f32 %v3432, %v3458
      %v3485 = vadd.f32 %v3433, %v3459
      %v3486 = vadd.f32 %v3434, %v3460
      %v3487 = vadd.f32 %v3435, %v3461
      %v3488 = vadd.f32 %v3436, %v3462
      %v3489 = vadd.f32 %v3437, %v3463
      %v3490 = vadd.f32 %v3438, %v3464
      %v3491 = vadd.f32 %v3439, %v3465
      %v3492 = vadd.f32 %v3440, %v3466
      %v3493 = vadd.f32 %v3441, %v3467
      %v3494 = vadd.f32 %v3442, %v3468
      %v3495 = vadd.f32 %v3443, %v3469
      %v3496 = vadd.f32 %v3444, %v3470
      %v3497 = vadd.f32 %v3445, %v3471
      %v3498 = vadd.f32 %v3446, %v3472
      %v3499 = vadd.f32 %v3447, %v3473
      %v3500 = vadd.f32 %v3448, %v3474
      %v3501 = vadd.f32 %v3449, %v3475
      %v3502 = vadd.f32 %v3450, %v3476
      %v3503 = vadd.f32 %v3451, %v3477
      %v3504 = vadd.f32 %v3452, %v3478
      %v3505 = vadd.f32 %v3453, %v3479
      %v3506 = vadd.f32 %v3454, %v3480
      %v3507 = vadd.f32 %v3455, %v3481
      %v3508 = vld [vmem:[%s3] sm:$0xff]
      %v3509 = vld [vmem:[%s3 + $0x8] sm:$0xff]
      %v3510 = vld [vmem:[%s3 + $0x10] sm:$0xff]
      %v3511 = vld [vmem:[%s3 + $0x18] sm:$0xff]
      %v3512 = vld [vmem:[%s3 + $0x20] sm:$0xff]
      %v3513 = vld [vmem:[%s3 + $0x28] sm:$0xff]
      %v3514 = vld [vmem:[%s3 + $0x30] sm:$0xff]
      %v3515 = vld [vmem:[%s3 + $0x38] sm:$0xff]
      %v3516 = vld [vmem:[%s3 + $0x40] sm:$0xff]
      %v3517 = vld [vmem:[%s3 + $0x48] sm:$0xff]
      %v3518 = vpack.c.bf16 %v3483, %v3482
      %v3519 = vpack.c.bf16 %v3485, %v3484
      %v3520 = vpack.c.bf16 %v3487, %v3486
      %v3521 = vpack.c.bf16 %v3489, %v3488
      %v3522 = vpack.c.bf16 %v3491, %v3490
      %v3523 = vpack.c.bf16 %v3493, %v3492
      %v3524 = vpack.c.bf16 %v3495, %v3494
      %v3525 = vpack.c.bf16 %v3497, %v3496
      %v3526 = vpack.c.bf16 %v3499, %v3498
      %v3527 = vpack.c.bf16 %v3501, %v3500
      %v3528 = vpack.c.bf16 %v3503, %v3502
      %v3529 = vpack.c.bf16 %v3505, %v3504
      %v3530 = vpack.c.bf16 %v3507, %v3506
      %v3541 = vunpack.c.l.b16 %v3508
      %v3542 = vunpack.c.h.b16 %v3508
      %v3543 = vunpack.c.l.b16 %v3509
      %v3544 = vunpack.c.h.b16 %v3509
      %v3545 = vunpack.c.l.b16 %v3510
      %v3546 = vunpack.c.h.b16 %v3510
      %v3547 = vunpack.c.l.b16 %v3511
      %v3548 = vunpack.c.h.b16 %v3511
      %v3549 = vunpack.c.l.b16 %v3512
      %v3550 = vunpack.c.h.b16 %v3512
      %v3551 = vunpack.c.l.b16 %v3513
      %v3552 = vunpack.c.h.b16 %v3513
      %v3553 = vunpack.c.l.b16 %v3514
      %v3554 = vunpack.c.h.b16 %v3514
      %v3555 = vunpack.c.l.b16 %v3515
      %v3556 = vunpack.c.h.b16 %v3515
      %v3557 = vunpack.c.l.b16 %v3516
      %v3558 = vunpack.c.h.b16 %v3516
      %v3559 = vunpack.c.l.b16 %v3517
      %v3560 = vunpack.c.h.b16 %v3517
      %v3561 = vpack.c.b16 %v3543, %v3541
      %v3562 = vpack.c.b16 %v3544, %v3542
      %v3563 = vpack.c.b16 %v3547, %v3545
      %v3564 = vpack.c.b16 %v3548, %v3546
      %v3565 = vpack.c.b16 %v3551, %v3549
      %v3566 = vpack.c.b16 %v3552, %v3550
      %v3567 = vpack.c.b16 %v3555, %v3553
      %v3568 = vpack.c.b16 %v3556, %v3554
      %v3569 = vpack.c.b16 %v3559, %v3557
      %v3570 = vpack.c.b16 %v3560, %v3558
      %vm3576 = vcmask 654336
      %v3578 = vsel %vm3576, %v3562, 0
      %v3581 = vsel %vm3576, %v3564, 0
      %v3584 = vsel %vm3576, %v3566, 0
      %v3587 = vsel %vm3576, %v3568, 0
      %v3590 = vsel %vm3576, %v3570, 0
      %3592 = vmatprep.subr.bf16.mxu0 0
      %3593 = vmatpush1.bf16.msra.mxu0 %v3518
      %3594 = vmatprep.subr.bf16.mxu0 0
      %3595 = vmatpush1.bf16.msra.mxu0 %v3519
      %3596 = vmatprep.subr.bf16.mxu0 0
      %3597 = vmatpush1.bf16.msra.mxu0 %v3520
      %3598 = vmatprep.subr.bf16.mxu0 0
      %3599 = vmatpush1.bf16.msra.mxu0 %v3521
      %3600 = vmatprep.subr.bf16.mxu0 0
      %3601 = vmatpush1.bf16.msra.mxu0 %v3522
      %3602 = vmatprep.subr.bf16.mxu0 0
      %3603 = vmatpush1.bf16.msra.mxu0 %v3523
      %3604 = vmatprep.subr.bf16.mxu0 0
      %3605 = vmatpush1.bf16.msra.mxu0 %v3524
      %3606 = vmatprep.subr.bf16.mxu0 0
      %3607 = vmatpush1.bf16.msra.mxu0 %v3525
      %3608 = vmatprep.subr.bf16.mxu0 0
      %3609 = vmatpush1.bf16.msra.mxu0 %v3526
      %3610 = vmatprep.subr.bf16.mxu0 0
      %3611 = vmatpush1.bf16.msra.mxu0 %v3527
      %3612 = vmatprep.subr.bf16.mxu0 0
      %3613 = vmatpush1.bf16.msra.mxu0 %v3528
      %3614 = vmatprep.subr.bf16.mxu0 0
      %3615 = vmatpush1.bf16.msra.mxu0 %v3529
      %3616 = vmatprep.subr.bf16.mxu0 0
      %3617 = vmatpush1.bf16.msra.mxu0 %v3530
      %3618 = vmatprep.subr.bf16.mxu0 0
      %3619 = vmatpush1.bf16.msra.mxu0 0
      %3620 = vmatprep.subr.bf16.mxu0 0
      %3621 = vmatpush1.bf16.msra.mxu0 0
      %3622 = vmatprep.subr.bf16.mxu0 0
      %3623 = vmatpush1.bf16.msra.mxu0 0
      %3624 = vmatprep.mubr.bf16.mxu0 %v3578
      %3625 = vmatmul.mubr.bf16.gmra.mrb[0].mxu0 %v3561
      %v3626 = vpop.f32.mrb[0].mxu0
      %v3627 = vadd.f32 0.0, %v3626
      %v3628 = vpop.f32.mrb[0].mxu0
      %v3629 = vpop.f32.mrb[0].mxu0
      %v3630 = vadd.f32 0.0, %v3629
      %v3631 = vpop.f32.mrb[0].mxu0
      %3632 = vmatprep.mubr.bf16.mxu0 %v3581
      %3633 = vmatmul.mubr.bf16.gmra.mrb[0].mxu0 %v3563
      %v3634 = vpop.f32.mrb[0].mxu0
      %v3635 = vadd.f32 0.0, %v3634
      %v3636 = vpop.f32.mrb[0].mxu0
      %v3637 = vpop.f32.mrb[0].mxu0
      %v3638 = vadd.f32 0.0, %v3637
      %v3639 = vpop.f32.mrb[0].mxu0
      %3640 = vmatprep.mubr.bf16.mxu0 %v3584
      %3641 = vmatmul.mubr.bf16.gmra.mrb[0].mxu0 %v3565
      %v3642 = vpop.f32.mrb[0].mxu0
      %v3643 = vadd.f32 0.0, %v3642
      %v3644 = vpop.f32.mrb[0].mxu0
      %v3645 = vpop.f32.mrb[0].mxu0
      %v3646 = vadd.f32 0.0, %v3645
      %v3647 = vpop.f32.mrb[0].mxu0
      %3648 = vmatprep.mubr.bf16.mxu0 %v3587
      %3649 = vmatmul.mubr.bf16.gmra.mrb[0].mxu0 %v3567
      %v3650 = vpop.f32.mrb[0].mxu0
      %v3651 = vadd.f32 0.0, %v3650
      %v3652 = vpop.f32.mrb[0].mxu0
      %v3653 = vpop.f32.mrb[0].mxu0
      %v3654 = vadd.f32 0.0, %v3653
      %v3655 = vpop.f32.mrb[0].mxu0
      %3656 = vmatprep.mubr.bf16.mxu0 %v3590
      %3657 = vmatmul.mubr.bf16.gmra.mrb[0].mxu0 %v3569
      %v3658 = vpop.f32.mrb[0].mxu0
      %v3659 = vadd.f32 0.0, %v3658
      %v3660 = vpop.f32.mrb[0].mxu0
      %v3661 = vpop.f32.mrb[0].mxu0
      %v3662 = vadd.f32 0.0, %v3661
      %v3663 = vpop.f32.mrb[0].mxu0
      %3664 = vdwg.mxu0
      %v3665 = vmax.f32 %v3627, 1e-10
      %v3666 = vmax.f32 %v3630, 1e-10
      %v3667 = vmax.f32 %v3635, 1e-10
      %v3668 = vmax.f32 %v3638, 1e-10
      %v3669 = vmax.f32 %v3643, 1e-10
      %v3670 = vmax.f32 %v3646, 1e-10
      %v3671 = vmax.f32 %v3651, 1e-10
      %v3672 = vmax.f32 %v3654, 1e-10
      %v3673 = vmax.f32 %v3659, 1e-10
      %v3674 = vmax.f32 %v3662, 1e-10
      %v3675 = vlog2.pop %v3665
      %v3676 = vmul.f32 %v3675, 0.6931472
      %v3677 = vlog2.pop %v3666
      %v3678 = vmul.f32 %v3677, 0.6931472
      %v3679 = vlog2.pop %v3667
      %v3680 = vmul.f32 %v3679, 0.6931472
      %v3681 = vlog2.pop %v3668
      %v3682 = vmul.f32 %v3681, 0.6931472
      %v3683 = vlog2.pop %v3669
      %v3684 = vmul.f32 %v3683, 0.6931472
      %v3685 = vlog2.pop %v3670
      %v3686 = vmul.f32 %v3685, 0.6931472
      %v3687 = vlog2.pop %v3671
      %v3688 = vmul.f32 %v3687, 0.6931472
      %v3689 = vlog2.pop %v3672
      %v3690 = vmul.f32 %v3689, 0.6931472
      %v3691 = vlog2.pop %v3673
      %v3692 = vmul.f32 %v3691, 0.6931472
      %v3693 = vlog2.pop %v3674
      %v3694 = vmul.f32 %v3693, 0.6931472
      %v3695 = vmul.f32 %v3676, 0.4342945
      %v3696 = vmul.f32 %v3678, 0.4342945
      %v3697 = vmul.f32 %v3680, 0.4342945
      %v3698 = vmul.f32 %v3682, 0.4342945
      %v3699 = vmul.f32 %v3684, 0.4342945
      %v3700 = vmul.f32 %v3686, 0.4342945
      %v3701 = vmul.f32 %v3688, 0.4342945
      %v3702 = vmul.f32 %v3690, 0.4342945
      %v3703 = vmul.f32 %v3692, 0.4342945
      %v3704 = vmul.f32 %v3694, 0.4342945
      %vm3705 = vcmask 64512
      %3706 = vst.msk [vmem:[%s304] sm:$0xff] %vm3705, %v3695
      %3707 = vst.msk [vmem:[%s304 + $0x8] sm:$0xff] %vm3705, %v3696
      %3708 = vst.msk [vmem:[%s304 + $0x10] sm:$0xff] %vm3705, %v3697
      %3709 = vst.msk [vmem:[%s304 + $0x18] sm:$0xff] %vm3705, %v3698
      %3710 = vst.msk [vmem:[%s304 + $0x20] sm:$0xff] %vm3705, %v3699
      %3711 = vst.msk [vmem:[%s304 + $0x28] sm:$0xff] %vm3705, %v3700
      %3712 = vst.msk [vmem:[%s304 + $0x30] sm:$0xff] %vm3705, %v3701
      %3713 = vst.msk [vmem:[%s304 + $0x38] sm:$0xff] %vm3705, %v3702
      %3714 = vst.msk [vmem:[%s304 + $0x40] sm:$0xff] %vm3705, %v3703
      %3715 = vst.msk [vmem:[%s304 + $0x48] sm:$0xff] %vm3705, %v3704
      %v3716 = vlaneseq
      %v3717 = vand.u32 %v3716, 127
      %s3718 = smul.u32 %s22, 8
      %v3719 = vstv %s3718
      %v3720 = vadd.s32 %v3717, %v3719
      %vm3721 = vcmp.lt.s32.totalorder %v3720, 8
      %v3722 = vsel %vm3721, %v3695, -10.0
      %v3723 = vsel %vm3721, %v3696, -10.0
      %v3724 = vsel %vm3721, %v3697, -10.0
      %v3725 = vsel %vm3721, %v3698, -10.0
      %v3726 = vsel %vm3721, %v3699, -10.0
      %v3727 = vsel %vm3721, %v3700, -10.0
      %v3728 = vsel %vm3721, %v3701, -10.0
      %v3729 = vsel %vm3721, %v3702, -10.0
      %v3730 = vsel %vm3721, %v3703, -10.0
      %v3731 = vsel %vm3721, %v3704, -10.0
      %v3732 = vsel %vm3705, %v3722, -inf
      %v3733 = vsel %vm3705, %v3723, -inf
      %v3734 = vsel %vm3705, %v3724, -inf
      %v3735 = vsel %vm3705, %v3725, -inf
      %v3736 = vsel %vm3705, %v3726, -inf
      %v3737 = vmax.f32 %v3732, %v3736
      %v3738 = vsel %vm3705, %v3727, -inf
      %v3739 = vmax.f32 %v3733, %v3738
      %v3740 = vsel %vm3705, %v3728, -inf
      %v3741 = vmax.f32 %v3734, %v3740
      %v3742 = vsel %vm3705, %v3729, -inf
      %v3743 = vmax.f32 %v3735, %v3742
      %v3744 = vsel %vm3705, %v3730, -inf
      %v3745 = vmax.f32 %v3737, %v3744
      %v3746 = vsel %vm3705, %v3731, -inf
      %v3747 = vmax.f32 %v3739, %v3746
      %v3748 = vmax.f32 %v3745, %v3747
      %v3749 = vmax.f32 %v3741, %v3743
      %v3750 = vmax.f32 %v3748, %v3749
      %3751 = vmax.xlane.f32.xlu0 %v3750
      %v3752 = vpop.xlane.xlu0 %3751
      %v3753 = vrot.slane %v3752, 4
      %v3754 = vmax.f32 %v3752, %v3753
      %v3755 = vrot.slane %v3754, 2
      %v3756 = vmax.f32 %v3754, %v3755
      %v3757 = vrot.slane %v3756, 1
      %v3758 = vmax.f32 %v3756, %v3757
      %s3759 = vtos %v3758
      %v3760 = vstv %s3759
      %3761 = vst [vmem:[%s311] sm:$0xff] %v3760
      %p3762 = scmp.lt.s32.totalorder %s21, 1
      %s3763 = scalar_select %p3762, %s21, 1
      %p3764 = scmp.lt.s32.totalorder %s22, 0
      %s3765 = scalar_select %p3764, %s22, 0
      %s3766 = smul.addr %s3763, 10
      %s3767 = sadd.s32 %s3765, %s3766
      %s3768 = smul.addr %s3767, 8
      %s3769 = scalar_lea.vmem %s4, %s3768
      %p3770 = scmp.lt.s32.totalorder %s21, 1
      %s3771 = scalar_select %p3770, %s21, 1
      %p3772 = scmp.lt.s32.totalorder %s22, 0
      %s3773 = scalar_select %p3772, %s22, 0
      %s3774 = sadd.s32 %s3773, %s3771
      %s3775 = smul.addr %s3774, 8
      %s3776 = scalar_lea.vmem %s5, %s3775
      // Predicated region
      $region37: #{whisper_mel.1} parent=35 // pred_check
        %p3777 = pneg %p147
      $region38: #{whisper_mel.1} parent=35 // pred_check_branch
        %3779 = sbr.rel (%p3777) target = $region40
      $region39: #{whisper_mel.1} parent=35 // pred_region
        _
      $region40: #{whisper_mel.1} parent=35 // pred_fallthru
        _
      // Predicated region
      $region41: #{whisper_mel.1} parent=35 // pred_check
        %p3780 = pneg %p175
      $region42: #{whisper_mel.1} parent=35 // pred_check_branch
        %3782 = sbr.rel (%p3780) target = $region44
      $region43: #{whisper_mel.1} parent=35 // pred_region
        _
      $region44: #{whisper_mel.1} parent=35 // pred_fallthru
        _
    $region36: #{whisper_mel.1} parent=5 // pred_fallthru
      _
    %p3783 = scmp.le.s32.totalorder 2, %s12
    // Predicated region
    $region45: #{whisper_mel.1} parent=5 // pred_check
      %p3784 = pneg %p3783
    $region46: #{whisper_mel.1} parent=5 // pred_check_branch
      %3786 = sbr.rel (%p3784) target = $region48
    $region47: #{whisper_mel.1} parent=5 // pred_region
      %s3787 = ssub.s32 %s12, 2
      // Predicated region
      $region49: #{whisper_mel.1} parent=47 // pred_check
        %p3788 = pneg %p153
      $region50: #{whisper_mel.1} parent=47 // pred_check_branch
        %3790 = sbr.rel (%p3788) target = $region52
      $region51: #{whisper_mel.1} parent=47 // pred_region
        %p3791 = scmp.lt.s32.totalorder %s23, 1
        %s3792 = scalar_select %p3791, %s23, 1
        %p3793 = scmp.lt.s32.totalorder %s24, 0
        %s3794 = scalar_select %p3793, %s24, 0
        %s3795 = smul.addr %s3792, 10
        %s3796 = sadd.s32 %s3794, %s3795
        %s3797 = smul.addr %s3796, 8
        %s3798 = scalar_lea.vmem %s4, %s3797
      $region52: #{whisper_mel.1} parent=47 // pred_fallthru
        _
      // Predicated region
      $region53: #{whisper_mel.1} parent=47 // pred_check
        %p3799 = pneg %p181
      $region54: #{whisper_mel.1} parent=47 // pred_check_branch
        %3801 = sbr.rel (%p3799) target = $region56
      $region55: #{whisper_mel.1} parent=47 // pred_region
        %p3802 = scmp.lt.s32.totalorder %s23, 1
        %s3803 = scalar_select %p3802, %s23, 1
        %p3804 = scmp.lt.s32.totalorder %s24, 0
        %s3805 = scalar_select %p3804, %s24, 0
        %s3806 = sadd.s32 %s3805, %s3803
        %s3807 = smul.addr %s3806, 8
        %s3808 = scalar_lea.vmem %s5, %s3807
      $region56: #{whisper_mel.1} parent=47 // pred_fallthru
        _
    $region48: #{whisper_mel.1} parent=5 // pred_fallthru
      _
  $region6: #{whisper_mel.1} parent=0 // loop_footer
    %s16 = sadd.s32 1, %s12
  $region7: #{whisper_mel.1} parent=0 // loop_footer_branch
    %11 = sbr.rel target = $region3
  $region8: #{whisper_mel.1} parent=0 // loop_exit
    _

</llo_original>
